<compile_context>
chip_gen: v5e
topology: v5e:2x2
jax: 0.10.0
libtpu: 0.0.40
codegen_flags: <defaults>
</compile_context>

<pallas_src>
from math import ceil

import jax
import jax.numpy as jnp
from jax import lax
from jax.experimental import pallas as pl
from jax.experimental.pallas import tpu as pltpu

F32 = jnp.float32
BN_EPS = 1e-5
NEG_BIG = -1e30

# ---------------------------- static model dims -----------------------------
B = 2                       # graphs per event (batch.num_graphs)
N_REAL = 30                 # max_nodes
N0 = 32                     # padded node count (sublane friendly)
F_IN = 3
F_PAD = 8                   # padded feature count
H = 64
K_NN = 5
N1 = ceil(0.66 * N_REAL)    # 20
N2 = ceil(0.2 * N_REAL)     # 6
NS0 = B * N0                # 64  (stacked, padded nodes)
NS1 = B * N1                # 40
NS2 = B * N2                # 12
N_VALID0 = float(B * N_REAL)   # 60 real rows for level-0 BatchNorm stats

# ---------------------------- slab row offsets -------------------------------
R_W01 = 0                       # (8, 128)    level-0 layer 1  [embed | pool]
R_W02 = R_W01 + F_PAD           # (128, 128)  level-0 layer 2  blockdiag
R_W03 = R_W02 + 2 * H           # (128, 128)  level-0 layer 3  blockdiag (64+20)
R_W11 = R_W03 + 2 * H           # (128, 128)  level-1 layer 1  (bottom rows 0)
R_W12 = R_W11 + 2 * H           # (128, 128)  level-1 layer 2
R_W13 = R_W12 + 2 * H           # (128, 128)  level-1 layer 3  (64+6)
R_W21 = R_W13 + 2 * H           # (128, 64)   gnn3 layer 1     (bottom rows 0)
R_W22 = R_W21 + 2 * H           # (64, 64)    gnn3 layer 2
R_W23 = R_W22 + H               # (64, 64)    gnn3 layer 3
R_LIN1 = R_W23 + H              # (64, 64)
R_LIN2 = R_LIN1 + H             # (1, 64) in an 8-row band
R_KEEP0 = R_LIN2 + 8            # (64, 40)    block-diag keep mask, level 0
R_RMASK = R_KEEP0 + NS0         # (64, 1)     real-node row mask
R_KEEP1 = R_RMASK + NS0         # (40, 12)    block-diag keep mask, level 1
R_G0 = R_KEEP1 + NS1            # (128, 40)   tiling selector (pool cols 64:84)
R_G1 = R_G0 + 2 * H             # (128, 12)   tiling selector (pool cols 64:70)
R_SM0 = R_G1 + 2 * H            # (1, 128)    additive softmax mask, level 0
R_SM1 = R_SM0 + 8               # (1, 128)    additive softmax mask, level 1
SLAB_ROWS = R_SM1 + 8           # 1416


# ---------------------------- in-kernel helpers ------------------------------

def _dot(a, b):
    return jnp.dot(a, b, preferred_element_type=F32)


def _dot_ta(a, b):
    # a: (K, M), b: (K, N)  ->  a.T @ b : (M, N)
    return lax.dot_general(a, b, (((0,), (0,)), ((), ())),
                           preferred_element_type=F32)


def _prep_adj(a):
    """DenseGCNConv prep: diag := 1, deg clamp(min=1).  Returns
    (D^-1/2 * (A+I), D^-1/2) so each layer does  y = adj_half @ (dis * (xW))."""
    n = a.shape[0]
    rr = lax.broadcasted_iota(jnp.int32, (n, n), 0)
    cc = lax.broadcasted_iota(jnp.int32, (n, n), 1)
    a_loop = jnp.where(rr == cc, 1.0, a)
    deg = jnp.maximum(jnp.sum(a_loop, axis=-1, keepdims=True), 1.0)
    dis = lax.rsqrt(deg)                          # (n, 1)
    return dis * a_loop, dis


def _gcn_bn_relu(x, adj_half, dis, w, row_mask, n_valid):
    """DenseGCNConv(bias=False) -> ReLU -> BatchNorm1d (train stats, g=1, b=0)."""
    y = _dot(adj_half, dis * _dot(x, w))
    y = jnp.maximum(y, 0.0)
    if row_mask is None:
        mean = jnp.mean(y, axis=0, keepdims=True)
        d = y - mean
        var = jnp.mean(d * d, axis=0, keepdims=True)      # biased variance
        return d * lax.rsqrt(var + BN_EPS)
    # masked BN: statistics over the real rows only; padded rows re-zeroed
    mean = jnp.sum(y * row_mask, axis=0, keepdims=True) / n_valid
    d = (y - mean) * row_mask
    var = jnp.sum(d * d, axis=0, keepdims=True) / n_valid
    return ((y - mean) * lax.rsqrt(var + BN_EPS)) * row_mask


def _chain(x, adj_half, dis, ws, row_mask, n_valid):
    for w in ws:
        x = _gcn_bn_relu(x, adj_half, dis, w, row_mask, n_valid)
    return x


# ------------------------------ fused kernel ---------------------------------

def fused_forward_kernel(x_ref, adj_ref, slab_ref, out_ref):
    x0 = x_ref[...]                 # (NS0, F_PAD)   zero-padded node features
    adj0 = adj_ref[...]             # (NS0, NS0)     raw block-diagonal kNN adjacency

    # static slices of the packed constant slab (all offsets are multiples of 8)
    w01 = slab_ref[R_W01:R_W01 + F_PAD, :]
    w02 = slab_ref[R_W02:R_W02 + 2 * H, :]
    w03 = slab_ref[R_W03:R_W03 + 2 * H, :]
    w11 = slab_ref[R_W11:R_W11 + 2 * H, :]
    w12 = slab_ref[R_W12:R_W12 + 2 * H, :]
    w13 = slab_ref[R_W13:R_W13 + 2 * H, :]
    w21 = slab_ref[R_W21:R_W21 + 2 * H, 0:H]
    w22 = slab_ref[R_W22:R_W22 + H, 0:H]
    w23 = slab_ref[R_W23:R_W23 + H, 0:H]
    wl1 = slab_ref[R_LIN1:R_LIN1 + H, 0:H]
    wl2 = slab_ref[R_LIN2:R_LIN2 + 1, 0:H]               # (1, 64)
    keep0 = slab_ref[R_KEEP0:R_KEEP0 + NS0, 0:NS1]       # (64, 40)
    rmask = slab_ref[R_RMASK:R_RMASK + NS0, 0:1]         # (64, 1)
    keep1 = slab_ref[R_KEEP1:R_KEEP1 + NS1, 0:NS2]       # (40, 12)
    g0 = slab_ref[R_G0:R_G0 + 2 * H, 0:NS1]              # (128, 40)
    g1 = slab_ref[R_G1:R_G1 + 2 * H, 0:NS2]              # (128, 12)
    sm0 = slab_ref[R_SM0:R_SM0 + 1, :]                   # (1, 128)
    sm1 = slab_ref[R_SM1:R_SM1 + 1, :]                   # (1, 128)

    # ---- level 0: fused [embed | pool] 3-layer GCN chain, 128 lanes wide ----
    adjh0, dis0 = _prep_adj(adj0)
    h0 = _chain(x0, adjh0, dis0, (w01, w02, w03), rmask, N_VALID0)   # (64, 128)

    # dense_diff_pool #1 on the block-diagonal stacked representation
    s1 = jax.nn.softmax(h0 + sm0, axis=-1) * rmask        # pool logits live at cols [H:H+N1]
    s_bd0 = _dot(s1, g0) * keep0                          # (64, 40) block-diag assignment
    x1 = _dot_ta(s_bd0, h0)                               # (40, 128): cols [0:H] = pooled embed
    adj1 = _dot_ta(s_bd0, _dot(adj0, s_bd0))              # (40, 40)  block-diagonal

    # ---- level 1 ----
    adjh1, dis1 = _prep_adj(adj1)
    h1 = _chain(x1, adjh1, dis1, (w11, w12, w13), None, None)        # (40, 128)
    s2 = jax.nn.softmax(h1 + sm1, axis=-1)
    s_bd1 = _dot(s2, g1) * keep1                          # (40, 12)
    x2 = _dot_ta(s_bd1, h1)                               # (12, 128)
    adj2 = _dot_ta(s_bd1, _dot(adj1, s_bd1))              # (12, 12)

    # ---- x = x[0]: graph-0 pooled features broadcast across the batch ----
    x3 = jnp.broadcast_to(x2[:N2][None], (B, N2, 2 * H)).reshape(NS2, 2 * H)

    # ---- gnn3_embed (junk columns of x3 are killed by zero rows of w21) ----
    adjh2, dis2 = _prep_adj(adj2)
    x4 = _chain(x3, adjh2, dis2, (w21, w22, w23), None, None)        # (12, 64)

    # ---- readout: per-graph mean -> lin1 -> relu -> lin2 (lane reduce) ----
    means = jnp.mean(x4.reshape(B, N2, H), axis=1)        # (2, 64)
    hid = jnp.maximum(_dot(means, wl1), 0.0)              # (2, 64)
    out = jnp.sum(hid * wl2, axis=-1, keepdims=True)      # (2, 1)
    out_ref[...] = out.astype(out_ref.dtype)


# ------------------------------ host-side packing ----------------------------

def pack_slab(params):
    wp1a, wp1b, wp1c = params['gnn1_pool']
    we1a, we1b, we1c = params['gnn1_embed']
    wp2a, wp2b, wp2c = params['gnn2_pool']
    we2a, we2b, we2c = params['gnn2_embed']
    we3a, we3b, we3c = params['gnn3_embed']

    slab = jnp.zeros((SLAB_ROWS, 128), F32)

    def put(s, r, m):
        m = m.astype(F32)
        return s.at[r:r + m.shape[0], :m.shape[1]].set(m)

    def blkdiag(a, b):
        ra, ca = a.shape
        rb, cb = b.shape
        z = jnp.zeros((ra + rb, ca + cb), F32)
        return z.at[:ra, :ca].set(a).at[ra:, ca:].set(b)

    # level 0 fused weights: output column order is [embed(64) | pool(N1)]
    w01 = jnp.zeros((F_PAD, 2 * H), F32).at[:F_IN, :H].set(we1a).at[:F_IN, H:].set(wp1a)
    slab = put(slab, R_W01, w01)
    slab = put(slab, R_W02, blkdiag(we1b, wp1b))
    slab = put(slab, R_W03, blkdiag(we1c, wp1c))          # (128, 84)
    # level 1 fused weights: input is the 128-wide pooled slab -> zero bottom rows
    w11 = jnp.zeros((2 * H, 2 * H), F32).at[:H, :H].set(we2a).at[:H, H:].set(wp2a)
    slab = put(slab, R_W11, w11)
    slab = put(slab, R_W12, blkdiag(we2b, wp2b))
    slab = put(slab, R_W13, blkdiag(we2c, wp2c))          # (128, 70)
    # gnn3_embed: first layer consumes the 128-wide pooled tensor
    w21 = jnp.zeros((2 * H, H), F32).at[:H, :].set(we3a)
    slab = put(slab, R_W21, w21)
    slab = put(slab, R_W22, we3b)
    slab = put(slab, R_W23, we3c)
    slab = put(slab, R_LIN1, params['lin1'])
    slab = put(slab, R_LIN2, params['lin2'].T)            # (1, 64)

    # block-diagonal keep masks for the stacked-graph diff-pool
    keep0 = jnp.zeros((NS0, NS1), F32)
    keep1 = jnp.zeros((NS1, NS2), F32)
    for b in range(B):
        keep0 = keep0.at[b * N0:(b + 1) * N0, b * N1:(b + 1) * N1].set(1.0)
        keep1 = keep1.at[b * N1:(b + 1) * N1, b * N2:(b + 1) * N2].set(1.0)
    slab = put(slab, R_KEEP0, keep0)
    slab = put(slab, R_KEEP1, keep1)

    # row mask: real nodes of the padded level-0 stacking
    rmask = jnp.tile(jnp.arange(N0) < N_REAL, B).astype(F32).reshape(NS0, 1)
    slab = put(slab, R_RMASK, rmask)

    # tiling selectors: g0[H+m, c] = 1 iff c % N1 == m (picks pool cols 64:64+N1)
    g0 = jnp.zeros((2 * H, NS1), F32)
    g1 = jnp.zeros((2 * H, NS2), F32)
    for b in range(B):
        g0 = g0.at[H + jnp.arange(N1), b * N1 + jnp.arange(N1)].set(1.0)
        g1 = g1.at[H + jnp.arange(N2), b * N2 + jnp.arange(N2)].set(1.0)
    slab = put(slab, R_G0, g0)
    slab = put(slab, R_G1, g1)

    # additive softmax masks: 0 on the pool-logit columns, -1e30 elsewhere
    cols = jnp.arange(128)
    sm0 = jnp.where((cols >= H) & (cols < H + N1), 0.0, NEG_BIG).astype(F32).reshape(1, 128)
    sm1 = jnp.where((cols >= H) & (cols < H + N2), 0.0, NEG_BIG).astype(F32).reshape(1, 128)
    slab = put(slab, R_SM0, sm0)
    slab = put(slab, R_SM1, sm1)
    return slab


# ------------------------------ pallas_call wrapper --------------------------

def model_forward(x_flat, adj_bd, slab):
    n_events = x_flat.shape[0]
    return pl.pallas_call(
        fused_forward_kernel,
        out_shape=jax.ShapeDtypeStruct((n_events, B, 1), jnp.float32),
        grid=(n_events,),
        in_specs=[
            pl.BlockSpec((None, NS0, F_PAD), lambda e: (e, 0, 0)),
            pl.BlockSpec((None, NS0, NS0), lambda e: (e, 0, 0)),
            pl.BlockSpec((SLAB_ROWS, 128), lambda e: (0, 0)),   # grid-invariant, one DMA
        ],
        out_specs=pl.BlockSpec((None, B, 1), lambda e: (e, 0, 0)),
        compiler_params=pltpu.CompilerParams(
            dimension_semantics=("parallel",)),
    )(x_flat, adj_bd, slab)


# ------------------------------ JAX glue (graph construction) -----------------
# TODO(synk): kNN graph construction (top_k + scatter) stays in plain JAX; it is
# graph building, not kernel compute.

def build_knn_adj(x_graphs, k, n_real):
    """x_graphs: (G, NP, F). adj[g, j, i] = 1 iff j is among the k nearest of i
    (knn_graph flow='source_to_target', loop=False), restricted to real nodes."""
    g, npad, _ = x_graphs.shape
    d = jnp.sum((x_graphs[:, :, None, :] - x_graphs[:, None, :, :]) ** 2, axis=-1)
    big = jnp.asarray(1e10, x_graphs.dtype)
    valid = jnp.arange(npad) < n_real
    d = jnp.where(jnp.eye(npad, dtype=bool)[None], big, d)                  # no self loops
    d = jnp.where(valid[None, None, :] & valid[None, :, None], d, big)      # exclude padding
    _, nbr = jax.lax.top_k(-d, k)                                           # (G, NP, k)
    adj = jnp.zeros((g, npad, npad), x_graphs.dtype)
    g_idx = jnp.arange(g)[:, None, None]
    i_idx = jnp.arange(npad)[None, :, None]
    adj = adj.at[g_idx, nbr, i_idx].set(1.0)                                # adj[g, nbr, center] = 1
    vf = valid.astype(x_graphs.dtype)
    return adj * vf[None, :, None] * vf[None, None, :]


# ------------------------------ main ------------------------------------------

if __name__ == "__main__":
    E = 4   # events (graph pairs) pipelined over the grid axis

    key = jax.random.PRNGKey(0)
    keys = jax.random.split(key, 20)
    x = jax.random.normal(keys[0], (E, B, N_REAL, F_IN), jnp.float32)

    def glorot(k_, shape):
        fan_in, fan_out = shape
        lim = (6.0 / (fan_in + fan_out)) ** 0.5
        return jax.random.uniform(k_, shape, jnp.float32, -lim, lim)

    params = {
        'gnn1_pool':  [glorot(keys[1], (F_IN, H)), glorot(keys[2], (H, H)), glorot(keys[3], (H, N1))],
        'gnn1_embed': [glorot(keys[4], (F_IN, H)), glorot(keys[5], (H, H)), glorot(keys[6], (H, H))],
        'gnn2_pool':  [glorot(keys[7], (H, H)),    glorot(keys[8], (H, H)), glorot(keys[9], (H, N2))],
        'gnn2_embed': [glorot(keys[10], (H, H)),   glorot(keys[11], (H, H)), glorot(keys[12], (H, H))],
        'gnn3_embed': [glorot(keys[13], (H, H)),   glorot(keys[14], (H, H)), glorot(keys[15], (H, H))],
        'lin1': glorot(keys[16], (H, H)),
        'lin2': glorot(keys[17], (H, 1)),
    }
    slab = pack_slab(params)

    @jax.jit
    def full_forward(x_ev, slab_):
        # pad nodes 30->32 and features 3->8 with zeros
        xp = jnp.zeros((E, B, N0, F_PAD), jnp.float32).at[:, :, :N_REAL, :F_IN].set(x_ev)
        adj = build_knn_adj(xp.reshape(E * B, N0, F_PAD), K_NN, N_REAL)
        adj = adj.reshape(E, B, N0, N0)
        adj_bd = jnp.zeros((E, NS0, NS0), jnp.float32)
        for b in range(B):
            adj_bd = adj_bd.at[:, b * N0:(b + 1) * N0, b * N0:(b + 1) * N0].set(adj[:, b])
        x_flat = xp.reshape(E, NS0, F_PAD)
        return model_forward(x_flat, adj_bd, slab_)

    out = full_forward(x, slab)
    jax.block_until_ready(out)
    assert out.shape == (E, B, 1)
    print("KERNEL_OK")
</pallas_src>

<mosaic_0001>
module attributes {stable_mosaic.version = 11 : i64} {
  func.func @fused_forward_kernel(%arg0: i32, %arg1: memref<1x64x8xf32, #tpu.memory_space<vmem>>, %arg2: memref<1x64x64xf32, #tpu.memory_space<vmem>>, %arg3: memref<1416x128xf32, #tpu.memory_space<vmem>>, %arg4: memref<1x2x1xf32, #tpu.memory_space<vmem>>) attributes {dimension_semantics = [#tpu.dimension_semantics<parallel>], iteration_bounds = array<i64: 4>, scalar_prefetch = 0 : i64, scratch_operands = 0 : i64, tpu.core_type = #tpu.core_type<tc>, window_params = [{transform_indices = @transform_0, window_bounds = array<i64: 1, 64, 8>}, {transform_indices = @transform_1, window_bounds = array<i64: 1, 64, 64>}, {pipeline_mode = #tpu.pipeline_mode<synchronous>, transform_indices = @transform_2, window_bounds = array<i64: 1416, 128>}, {transform_indices = @transform_3, window_bounds = array<i64: 1, 2, 1>}]} {
    %c0 = arith.constant 0 : index
    %c0_0 = arith.constant 0 : index
    %c0_1 = arith.constant 0 : index
    %0 = vector.load %arg1[%c0, %c0_0, %c0_1] : memref<1x64x8xf32, #tpu.memory_space<vmem>>, vector<1x64x8xf32>
    %1 = vector.shape_cast %0 : vector<1x64x8xf32> to vector<64x8xf32>
    %c0_2 = arith.constant 0 : index
    %c0_3 = arith.constant 0 : index
    %c0_4 = arith.constant 0 : index
    %2 = vector.load %arg2[%c0_2, %c0_3, %c0_4] : memref<1x64x64xf32, #tpu.memory_space<vmem>>, vector<1x64x64xf32>
    %3 = vector.shape_cast %2 : vector<1x64x64xf32> to vector<64x64xf32>
    %c0_5 = arith.constant 0 : index
    %c0_6 = arith.constant 0 : index
    %4 = vector.load %arg3[%c0_5, %c0_6] : memref<1416x128xf32, #tpu.memory_space<vmem>>, vector<8x128xf32>
    %c8 = arith.constant 8 : index
    %c0_7 = arith.constant 0 : index
    %5 = vector.load %arg3[%c8, %c0_7] : memref<1416x128xf32, #tpu.memory_space<vmem>>, vector<128x128xf32>
    %c136 = arith.constant 136 : index
    %c0_8 = arith.constant 0 : index
    %6 = vector.load %arg3[%c136, %c0_8] : memref<1416x128xf32, #tpu.memory_space<vmem>>, vector<128x128xf32>
    %c264 = arith.constant 264 : index
    %c0_9 = arith.constant 0 : index
    %7 = vector.load %arg3[%c264, %c0_9] : memref<1416x128xf32, #tpu.memory_space<vmem>>, vector<128x128xf32>
    %c392 = arith.constant 392 : index
    %c0_10 = arith.constant 0 : index
    %8 = vector.load %arg3[%c392, %c0_10] : memref<1416x128xf32, #tpu.memory_space<vmem>>, vector<128x128xf32>
    %c520 = arith.constant 520 : index
    %c0_11 = arith.constant 0 : index
    %9 = vector.load %arg3[%c520, %c0_11] : memref<1416x128xf32, #tpu.memory_space<vmem>>, vector<128x128xf32>
    %c648 = arith.constant 648 : index
    %c0_12 = arith.constant 0 : index
    %10 = vector.load %arg3[%c648, %c0_12] : memref<1416x128xf32, #tpu.memory_space<vmem>>, vector<128x64xf32>
    %c776 = arith.constant 776 : index
    %c0_13 = arith.constant 0 : index
    %11 = vector.load %arg3[%c776, %c0_13] : memref<1416x128xf32, #tpu.memory_space<vmem>>, vector<64x64xf32>
    %c840 = arith.constant 840 : index
    %c0_14 = arith.constant 0 : index
    %12 = vector.load %arg3[%c840, %c0_14] : memref<1416x128xf32, #tpu.memory_space<vmem>>, vector<64x64xf32>
    %c904 = arith.constant 904 : index
    %c0_15 = arith.constant 0 : index
    %13 = vector.load %arg3[%c904, %c0_15] : memref<1416x128xf32, #tpu.memory_space<vmem>>, vector<64x64xf32>
    %c968 = arith.constant 968 : index
    %c0_16 = arith.constant 0 : index
    %14 = vector.load %arg3[%c968, %c0_16] : memref<1416x128xf32, #tpu.memory_space<vmem>>, vector<1x64xf32>
    %c976 = arith.constant 976 : index
    %c0_17 = arith.constant 0 : index
    %15 = vector.load %arg3[%c976, %c0_17] : memref<1416x128xf32, #tpu.memory_space<vmem>>, vector<64x40xf32>
    %c1040 = arith.constant 1040 : index
    %c0_18 = arith.constant 0 : index
    %16 = vector.load %arg3[%c1040, %c0_18] : memref<1416x128xf32, #tpu.memory_space<vmem>>, vector<64x1xf32>
    %c1104 = arith.constant 1104 : index
    %c0_19 = arith.constant 0 : index
    %17 = vector.load %arg3[%c1104, %c0_19] : memref<1416x128xf32, #tpu.memory_space<vmem>>, vector<40x12xf32>
    %c1144 = arith.constant 1144 : index
    %c0_20 = arith.constant 0 : index
    %18 = vector.load %arg3[%c1144, %c0_20] : memref<1416x128xf32, #tpu.memory_space<vmem>>, vector<128x40xf32>
    %c1272 = arith.constant 1272 : index
    %c0_21 = arith.constant 0 : index
    %19 = vector.load %arg3[%c1272, %c0_21] : memref<1416x128xf32, #tpu.memory_space<vmem>>, vector<128x12xf32>
    %c1400 = arith.constant 1400 : index
    %c0_22 = arith.constant 0 : index
    %20 = vector.load %arg3[%c1400, %c0_22] : memref<1416x128xf32, #tpu.memory_space<vmem>>, vector<1x128xf32>
    %c1408 = arith.constant 1408 : index
    %c0_23 = arith.constant 0 : index
    %21 = vector.load %arg3[%c1408, %c0_23] : memref<1416x128xf32, #tpu.memory_space<vmem>>, vector<1x128xf32>
    %22 = tpu.iota {dimensions = array<i32: 0>} : vector<64x64xi32>
    %23 = tpu.iota {dimensions = array<i32: 1>} : vector<64x64xi32>
    %24 = arith.cmpi eq, %22, %23 : vector<64x64xi32>
    %cst = arith.constant 1.000000e+00 : f32
    %25 = vector.broadcast %cst : f32 to vector<64x64xf32>
    %26 = arith.select %24, %25, %3 : vector<64x64xi1>, vector<64x64xf32>
    %cst_24 = arith.constant dense<0.000000e+00> : vector<64xf32>
    %27 = vector.multi_reduction <add>, %26, %cst_24 [1] : vector<64x64xf32> to vector<64xf32>
    %28 = vector.shape_cast %27 : vector<64xf32> to vector<64x1xf32>
    %cst_25 = arith.constant 1.000000e+00 : f32
    %29 = vector.broadcast %cst_25 : f32 to vector<64x1xf32>
    %30 = arith.maximumf %28, %29 : vector<64x1xf32>
    %31 = math.rsqrt %30 : vector<64x1xf32>
    %32 = vector.broadcast %31 : vector<64x1xf32> to vector<64x64xf32>
    %33 = arith.mulf %32, %26 : vector<64x64xf32>
    %cst_26 = arith.constant dense<0.000000e+00> : vector<64x128xf32>
    %34 = tpu.matmul %1, %4, %cst_26 {dimension_numbers = #tpu.dot_dimension_numbers<[1], [0], [0], [1], [0, 0, 1, 1], [], []>} : vector<64x8xf32>, vector<8x128xf32>, vector<64x128xf32> -> vector<64x128xf32>
    %35 = vector.broadcast %31 : vector<64x1xf32> to vector<64x128xf32>
    %36 = arith.mulf %35, %34 : vector<64x128xf32>
    %cst_27 = arith.constant dense<0.000000e+00> : vector<64x128xf32>
    %37 = tpu.matmul %33, %36, %cst_27 {dimension_numbers = #tpu.dot_dimension_numbers<[1], [0], [0], [1], [0, 0, 1, 1], [], []>} : vector<64x64xf32>, vector<64x128xf32>, vector<64x128xf32> -> vector<64x128xf32>
    %cst_28 = arith.constant 0.000000e+00 : f32
    %38 = vector.broadcast %cst_28 : f32 to vector<64x128xf32>
    %39 = arith.maximumf %37, %38 : vector<64x128xf32>
    %40 = vector.broadcast %16 : vector<64x1xf32> to vector<64x128xf32>
    %41 = arith.mulf %39, %40 : vector<64x128xf32>
    %cst_29 = arith.constant dense<0.000000e+00> : vector<128xf32>
    %42 = vector.multi_reduction <add>, %41, %cst_29 [0] : vector<64x128xf32> to vector<128xf32>
    %43 = vector.shape_cast %42 : vector<128xf32> to vector<1x128xf32>
    %cst_30 = arith.constant 6.000000e+01 : f32
    %44 = vector.broadcast %cst_30 : f32 to vector<1x128xf32>
    %45 = arith.divf %43, %44 : vector<1x128xf32>
    %46 = vector.broadcast %45 : vector<1x128xf32> to vector<64x128xf32>
    %47 = arith.subf %39, %46 : vector<64x128xf32>
    %48 = vector.broadcast %16 : vector<64x1xf32> to vector<64x128xf32>
    %49 = arith.mulf %47, %48 : vector<64x128xf32>
    %50 = arith.mulf %49, %49 : vector<64x128xf32>
    %cst_31 = arith.constant dense<0.000000e+00> : vector<128xf32>
    %51 = vector.multi_reduction <add>, %50, %cst_31 [0] : vector<64x128xf32> to vector<128xf32>
    %52 = vector.shape_cast %51 : vector<128xf32> to vector<1x128xf32>
    %cst_32 = arith.constant 6.000000e+01 : f32
    %53 = vector.broadcast %cst_32 : f32 to vector<1x128xf32>
    %54 = arith.divf %52, %53 : vector<1x128xf32>
    %55 = vector.broadcast %45 : vector<1x128xf32> to vector<64x128xf32>
    %56 = arith.subf %39, %55 : vector<64x128xf32>
    %cst_33 = arith.constant 9.99999974E-6 : f32
    %57 = vector.broadcast %cst_33 : f32 to vector<1x128xf32>
    %58 = arith.addf %54, %57 : vector<1x128xf32>
    %59 = math.rsqrt %58 : vector<1x128xf32>
    %60 = vector.broadcast %59 : vector<1x128xf32> to vector<64x128xf32>
    %61 = arith.mulf %56, %60 : vector<64x128xf32>
    %62 = vector.broadcast %16 : vector<64x1xf32> to vector<64x128xf32>
    %63 = arith.mulf %61, %62 : vector<64x128xf32>
    %cst_34 = arith.constant dense<0.000000e+00> : vector<64x128xf32>
    %64 = tpu.matmul %63, %5, %cst_34 {dimension_numbers = #tpu.dot_dimension_numbers<[1], [0], [0], [1], [0, 0, 1, 1], [], []>} : vector<64x128xf32>, vector<128x128xf32>, vector<64x128xf32> -> vector<64x128xf32>
    %65 = vector.broadcast %31 : vector<64x1xf32> to vector<64x128xf32>
    %66 = arith.mulf %65, %64 : vector<64x128xf32>
    %cst_35 = arith.constant dense<0.000000e+00> : vector<64x128xf32>
    %67 = tpu.matmul %33, %66, %cst_35 {dimension_numbers = #tpu.dot_dimension_numbers<[1], [0], [0], [1], [0, 0, 1, 1], [], []>} : vector<64x64xf32>, vector<64x128xf32>, vector<64x128xf32> -> vector<64x128xf32>
    %cst_36 = arith.constant 0.000000e+00 : f32
    %68 = vector.broadcast %cst_36 : f32 to vector<64x128xf32>
    %69 = arith.maximumf %67, %68 : vector<64x128xf32>
    %70 = vector.broadcast %16 : vector<64x1xf32> to vector<64x128xf32>
    %71 = arith.mulf %69, %70 : vector<64x128xf32>
    %cst_37 = arith.constant dense<0.000000e+00> : vector<128xf32>
    %72 = vector.multi_reduction <add>, %71, %cst_37 [0] : vector<64x128xf32> to vector<128xf32>
    %73 = vector.shape_cast %72 : vector<128xf32> to vector<1x128xf32>
    %cst_38 = arith.constant 6.000000e+01 : f32
    %74 = vector.broadcast %cst_38 : f32 to vector<1x128xf32>
    %75 = arith.divf %73, %74 : vector<1x128xf32>
    %76 = vector.broadcast %75 : vector<1x128xf32> to vector<64x128xf32>
    %77 = arith.subf %69, %76 : vector<64x128xf32>
    %78 = vector.broadcast %16 : vector<64x1xf32> to vector<64x128xf32>
    %79 = arith.mulf %77, %78 : vector<64x128xf32>
    %80 = arith.mulf %79, %79 : vector<64x128xf32>
    %cst_39 = arith.constant dense<0.000000e+00> : vector<128xf32>
    %81 = vector.multi_reduction <add>, %80, %cst_39 [0] : vector<64x128xf32> to vector<128xf32>
    %82 = vector.shape_cast %81 : vector<128xf32> to vector<1x128xf32>
    %cst_40 = arith.constant 6.000000e+01 : f32
    %83 = vector.broadcast %cst_40 : f32 to vector<1x128xf32>
    %84 = arith.divf %82, %83 : vector<1x128xf32>
    %85 = vector.broadcast %75 : vector<1x128xf32> to vector<64x128xf32>
    %86 = arith.subf %69, %85 : vector<64x128xf32>
    %cst_41 = arith.constant 9.99999974E-6 : f32
    %87 = vector.broadcast %cst_41 : f32 to vector<1x128xf32>
    %88 = arith.addf %84, %87 : vector<1x128xf32>
    %89 = math.rsqrt %88 : vector<1x128xf32>
    %90 = vector.broadcast %89 : vector<1x128xf32> to vector<64x128xf32>
    %91 = arith.mulf %86, %90 : vector<64x128xf32>
    %92 = vector.broadcast %16 : vector<64x1xf32> to vector<64x128xf32>
    %93 = arith.mulf %91, %92 : vector<64x128xf32>
    %cst_42 = arith.constant dense<0.000000e+00> : vector<64x128xf32>
    %94 = tpu.matmul %93, %6, %cst_42 {dimension_numbers = #tpu.dot_dimension_numbers<[1], [0], [0], [1], [0, 0, 1, 1], [], []>} : vector<64x128xf32>, vector<128x128xf32>, vector<64x128xf32> -> vector<64x128xf32>
    %95 = vector.broadcast %31 : vector<64x1xf32> to vector<64x128xf32>
    %96 = arith.mulf %95, %94 : vector<64x128xf32>
    %cst_43 = arith.constant dense<0.000000e+00> : vector<64x128xf32>
    %97 = tpu.matmul %33, %96, %cst_43 {dimension_numbers = #tpu.dot_dimension_numbers<[1], [0], [0], [1], [0, 0, 1, 1], [], []>} : vector<64x64xf32>, vector<64x128xf32>, vector<64x128xf32> -> vector<64x128xf32>
    %cst_44 = arith.constant 0.000000e+00 : f32
    %98 = vector.broadcast %cst_44 : f32 to vector<64x128xf32>
    %99 = arith.maximumf %97, %98 : vector<64x128xf32>
    %100 = vector.broadcast %16 : vector<64x1xf32> to vector<64x128xf32>
    %101 = arith.mulf %99, %100 : vector<64x128xf32>
    %cst_45 = arith.constant dense<0.000000e+00> : vector<128xf32>
    %102 = vector.multi_reduction <add>, %101, %cst_45 [0] : vector<64x128xf32> to vector<128xf32>
    %103 = vector.shape_cast %102 : vector<128xf32> to vector<1x128xf32>
    %cst_46 = arith.constant 6.000000e+01 : f32
    %104 = vector.broadcast %cst_46 : f32 to vector<1x128xf32>
    %105 = arith.divf %103, %104 : vector<1x128xf32>
    %106 = vector.broadcast %105 : vector<1x128xf32> to vector<64x128xf32>
    %107 = arith.subf %99, %106 : vector<64x128xf32>
    %108 = vector.broadcast %16 : vector<64x1xf32> to vector<64x128xf32>
    %109 = arith.mulf %107, %108 : vector<64x128xf32>
    %110 = arith.mulf %109, %109 : vector<64x128xf32>
    %cst_47 = arith.constant dense<0.000000e+00> : vector<128xf32>
    %111 = vector.multi_reduction <add>, %110, %cst_47 [0] : vector<64x128xf32> to vector<128xf32>
    %112 = vector.shape_cast %111 : vector<128xf32> to vector<1x128xf32>
    %cst_48 = arith.constant 6.000000e+01 : f32
    %113 = vector.broadcast %cst_48 : f32 to vector<1x128xf32>
    %114 = arith.divf %112, %113 : vector<1x128xf32>
    %115 = vector.broadcast %105 : vector<1x128xf32> to vector<64x128xf32>
    %116 = arith.subf %99, %115 : vector<64x128xf32>
    %cst_49 = arith.constant 9.99999974E-6 : f32
    %117 = vector.broadcast %cst_49 : f32 to vector<1x128xf32>
    %118 = arith.addf %114, %117 : vector<1x128xf32>
    %119 = math.rsqrt %118 : vector<1x128xf32>
    %120 = vector.broadcast %119 : vector<1x128xf32> to vector<64x128xf32>
    %121 = arith.mulf %116, %120 : vector<64x128xf32>
    %122 = vector.broadcast %16 : vector<64x1xf32> to vector<64x128xf32>
    %123 = arith.mulf %121, %122 : vector<64x128xf32>
    %124 = vector.broadcast %20 : vector<1x128xf32> to vector<64x128xf32>
    %125 = arith.addf %123, %124 : vector<64x128xf32>
    %cst_50 = arith.constant dense<0xFF800000> : vector<64xf32>
    %126 = vector.multi_reduction <maximumf>, %125, %cst_50 [1] : vector<64x128xf32> to vector<64xf32>
    %cst_51 = arith.constant 0xFF800000 : f32
    %127 = vector.broadcast %cst_51 : f32 to vector<64xf32>
    %128 = arith.maximumf %127, %126 : vector<64xf32>
    %129 = vector.shape_cast %128 : vector<64xf32> to vector<64x1xf32>
    %130 = vector.broadcast %129 : vector<64x1xf32> to vector<64x128xf32>
    %131 = arith.subf %125, %130 : vector<64x128xf32>
    %132 = math.exp %131 : vector<64x128xf32>
    %cst_52 = arith.constant dense<0.000000e+00> : vector<64xf32>
    %133 = vector.multi_reduction <add>, %132, %cst_52 [1] : vector<64x128xf32> to vector<64xf32>
    %134 = vector.shape_cast %133 : vector<64xf32> to vector<64x1xf32>
    %135 = vector.broadcast %134 : vector<64x1xf32> to vector<64x128xf32>
    %136 = arith.divf %132, %135 : vector<64x128xf32>
    %137 = vector.broadcast %16 : vector<64x1xf32> to vector<64x128xf32>
    %138 = arith.mulf %136, %137 : vector<64x128xf32>
    %cst_53 = arith.constant dense<0.000000e+00> : vector<64x40xf32>
    %139 = tpu.matmul %138, %18, %cst_53 {dimension_numbers = #tpu.dot_dimension_numbers<[1], [0], [0], [1], [0, 0, 1, 1], [], []>} : vector<64x128xf32>, vector<128x40xf32>, vector<64x40xf32> -> vector<64x40xf32>
    %140 = arith.mulf %139, %15 : vector<64x40xf32>
    %cst_54 = arith.constant dense<0.000000e+00> : vector<40x128xf32>
    %141 = tpu.matmul %140, %123, %cst_54 {dimension_numbers = #tpu.dot_dimension_numbers<[0], [0], [1], [1], [0, 1, 1, 1], [], []>} : vector<64x40xf32>, vector<64x128xf32>, vector<40x128xf32> -> vector<40x128xf32>
    %cst_55 = arith.constant dense<0.000000e+00> : vector<64x40xf32>
    %142 = tpu.matmul %3, %140, %cst_55 {dimension_numbers = #tpu.dot_dimension_numbers<[1], [0], [0], [1], [0, 0, 1, 1], [], []>} : vector<64x64xf32>, vector<64x40xf32>, vector<64x40xf32> -> vector<64x40xf32>
    %cst_56 = arith.constant dense<0.000000e+00> : vector<40x40xf32>
    %143 = tpu.matmul %140, %142, %cst_56 {dimension_numbers = #tpu.dot_dimension_numbers<[0], [0], [1], [1], [0, 1, 1, 1], [], []>} : vector<64x40xf32>, vector<64x40xf32>, vector<40x40xf32> -> vector<40x40xf32>
    %144 = tpu.iota {dimensions = array<i32: 0>} : vector<40x40xi32>
    %145 = tpu.iota {dimensions = array<i32: 1>} : vector<40x40xi32>
    %146 = arith.cmpi eq, %144, %145 : vector<40x40xi32>
    %cst_57 = arith.constant 1.000000e+00 : f32
    %147 = vector.broadcast %cst_57 : f32 to vector<40x40xf32>
    %148 = arith.select %146, %147, %143 : vector<40x40xi1>, vector<40x40xf32>
    %cst_58 = arith.constant dense<0.000000e+00> : vector<40xf32>
    %149 = vector.multi_reduction <add>, %148, %cst_58 [1] : vector<40x40xf32> to vector<40xf32>
    %150 = vector.shape_cast %149 : vector<40xf32> to vector<40x1xf32>
    %cst_59 = arith.constant 1.000000e+00 : f32
    %151 = vector.broadcast %cst_59 : f32 to vector<40x1xf32>
    %152 = arith.maximumf %150, %151 : vector<40x1xf32>
    %153 = math.rsqrt %152 : vector<40x1xf32>
    %154 = vector.broadcast %153 : vector<40x1xf32> to vector<40x40xf32>
    %155 = arith.mulf %154, %148 : vector<40x40xf32>
    %cst_60 = arith.constant dense<0.000000e+00> : vector<40x128xf32>
    %156 = tpu.matmul %141, %7, %cst_60 {dimension_numbers = #tpu.dot_dimension_numbers<[1], [0], [0], [1], [0, 0, 1, 1], [], []>} : vector<40x128xf32>, vector<128x128xf32>, vector<40x128xf32> -> vector<40x128xf32>
    %157 = vector.broadcast %153 : vector<40x1xf32> to vector<40x128xf32>
    %158 = arith.mulf %157, %156 : vector<40x128xf32>
    %cst_61 = arith.constant dense<0.000000e+00> : vector<40x128xf32>
    %159 = tpu.matmul %155, %158, %cst_61 {dimension_numbers = #tpu.dot_dimension_numbers<[1], [0], [0], [1], [0, 0, 1, 1], [], []>} : vector<40x40xf32>, vector<40x128xf32>, vector<40x128xf32> -> vector<40x128xf32>
    %cst_62 = arith.constant 0.000000e+00 : f32
    %160 = vector.broadcast %cst_62 : f32 to vector<40x128xf32>
    %161 = arith.maximumf %159, %160 : vector<40x128xf32>
    %cst_63 = arith.constant dense<0.000000e+00> : vector<128xf32>
    %162 = vector.multi_reduction <add>, %161, %cst_63 [0] : vector<40x128xf32> to vector<128xf32>
    %163 = vector.shape_cast %162 : vector<128xf32> to vector<1x128xf32>
    %cst_64 = arith.constant 4.000000e+01 : f32
    %164 = vector.broadcast %cst_64 : f32 to vector<1x128xf32>
    %165 = arith.divf %163, %164 : vector<1x128xf32>
    %166 = vector.broadcast %165 : vector<1x128xf32> to vector<40x128xf32>
    %167 = arith.subf %161, %166 : vector<40x128xf32>
    %168 = arith.mulf %167, %167 : vector<40x128xf32>
    %cst_65 = arith.constant dense<0.000000e+00> : vector<128xf32>
    %169 = vector.multi_reduction <add>, %168, %cst_65 [0] : vector<40x128xf32> to vector<128xf32>
    %170 = vector.shape_cast %169 : vector<128xf32> to vector<1x128xf32>
    %cst_66 = arith.constant 4.000000e+01 : f32
    %171 = vector.broadcast %cst_66 : f32 to vector<1x128xf32>
    %172 = arith.divf %170, %171 : vector<1x128xf32>
    %cst_67 = arith.constant 9.99999974E-6 : f32
    %173 = vector.broadcast %cst_67 : f32 to vector<1x128xf32>
    %174 = arith.addf %172, %173 : vector<1x128xf32>
    %175 = math.rsqrt %174 : vector<1x128xf32>
    %176 = vector.broadcast %175 : vector<1x128xf32> to vector<40x128xf32>
    %177 = arith.mulf %167, %176 : vector<40x128xf32>
    %cst_68 = arith.constant dense<0.000000e+00> : vector<40x128xf32>
    %178 = tpu.matmul %177, %8, %cst_68 {dimension_numbers = #tpu.dot_dimension_numbers<[1], [0], [0], [1], [0, 0, 1, 1], [], []>} : vector<40x128xf32>, vector<128x128xf32>, vector<40x128xf32> -> vector<40x128xf32>
    %179 = vector.broadcast %153 : vector<40x1xf32> to vector<40x128xf32>
    %180 = arith.mulf %179, %178 : vector<40x128xf32>
    %cst_69 = arith.constant dense<0.000000e+00> : vector<40x128xf32>
    %181 = tpu.matmul %155, %180, %cst_69 {dimension_numbers = #tpu.dot_dimension_numbers<[1], [0], [0], [1], [0, 0, 1, 1], [], []>} : vector<40x40xf32>, vector<40x128xf32>, vector<40x128xf32> -> vector<40x128xf32>
    %cst_70 = arith.constant 0.000000e+00 : f32
    %182 = vector.broadcast %cst_70 : f32 to vector<40x128xf32>
    %183 = arith.maximumf %181, %182 : vector<40x128xf32>
    %cst_71 = arith.constant dense<0.000000e+00> : vector<128xf32>
    %184 = vector.multi_reduction <add>, %183, %cst_71 [0] : vector<40x128xf32> to vector<128xf32>
    %185 = vector.shape_cast %184 : vector<128xf32> to vector<1x128xf32>
    %cst_72 = arith.constant 4.000000e+01 : f32
    %186 = vector.broadcast %cst_72 : f32 to vector<1x128xf32>
    %187 = arith.divf %185, %186 : vector<1x128xf32>
    %188 = vector.broadcast %187 : vector<1x128xf32> to vector<40x128xf32>
    %189 = arith.subf %183, %188 : vector<40x128xf32>
    %190 = arith.mulf %189, %189 : vector<40x128xf32>
    %cst_73 = arith.constant dense<0.000000e+00> : vector<128xf32>
    %191 = vector.multi_reduction <add>, %190, %cst_73 [0] : vector<40x128xf32> to vector<128xf32>
    %192 = vector.shape_cast %191 : vector<128xf32> to vector<1x128xf32>
    %cst_74 = arith.constant 4.000000e+01 : f32
    %193 = vector.broadcast %cst_74 : f32 to vector<1x128xf32>
    %194 = arith.divf %192, %193 : vector<1x128xf32>
    %cst_75 = arith.constant 9.99999974E-6 : f32
    %195 = vector.broadcast %cst_75 : f32 to vector<1x128xf32>
    %196 = arith.addf %194, %195 : vector<1x128xf32>
    %197 = math.rsqrt %196 : vector<1x128xf32>
    %198 = vector.broadcast %197 : vector<1x128xf32> to vector<40x128xf32>
    %199 = arith.mulf %189, %198 : vector<40x128xf32>
    %cst_76 = arith.constant dense<0.000000e+00> : vector<40x128xf32>
    %200 = tpu.matmul %199, %9, %cst_76 {dimension_numbers = #tpu.dot_dimension_numbers<[1], [0], [0], [1], [0, 0, 1, 1], [], []>} : vector<40x128xf32>, vector<128x128xf32>, vector<40x128xf32> -> vector<40x128xf32>
    %201 = vector.broadcast %153 : vector<40x1xf32> to vector<40x128xf32>
    %202 = arith.mulf %201, %200 : vector<40x128xf32>
    %cst_77 = arith.constant dense<0.000000e+00> : vector<40x128xf32>
    %203 = tpu.matmul %155, %202, %cst_77 {dimension_numbers = #tpu.dot_dimension_numbers<[1], [0], [0], [1], [0, 0, 1, 1], [], []>} : vector<40x40xf32>, vector<40x128xf32>, vector<40x128xf32> -> vector<40x128xf32>
    %cst_78 = arith.constant 0.000000e+00 : f32
    %204 = vector.broadcast %cst_78 : f32 to vector<40x128xf32>
    %205 = arith.maximumf %203, %204 : vector<40x128xf32>
    %cst_79 = arith.constant dense<0.000000e+00> : vector<128xf32>
    %206 = vector.multi_reduction <add>, %205, %cst_79 [0] : vector<40x128xf32> to vector<128xf32>
    %207 = vector.shape_cast %206 : vector<128xf32> to vector<1x128xf32>
    %cst_80 = arith.constant 4.000000e+01 : f32
    %208 = vector.broadcast %cst_80 : f32 to vector<1x128xf32>
    %209 = arith.divf %207, %208 : vector<1x128xf32>
    %210 = vector.broadcast %209 : vector<1x128xf32> to vector<40x128xf32>
    %211 = arith.subf %205, %210 : vector<40x128xf32>
    %212 = arith.mulf %211, %211 : vector<40x128xf32>
    %cst_81 = arith.constant dense<0.000000e+00> : vector<128xf32>
    %213 = vector.multi_reduction <add>, %212, %cst_81 [0] : vector<40x128xf32> to vector<128xf32>
    %214 = vector.shape_cast %213 : vector<128xf32> to vector<1x128xf32>
    %cst_82 = arith.constant 4.000000e+01 : f32
    %215 = vector.broadcast %cst_82 : f32 to vector<1x128xf32>
    %216 = arith.divf %214, %215 : vector<1x128xf32>
    %cst_83 = arith.constant 9.99999974E-6 : f32
    %217 = vector.broadcast %cst_83 : f32 to vector<1x128xf32>
    %218 = arith.addf %216, %217 : vector<1x128xf32>
    %219 = math.rsqrt %218 : vector<1x128xf32>
    %220 = vector.broadcast %219 : vector<1x128xf32> to vector<40x128xf32>
    %221 = arith.mulf %211, %220 : vector<40x128xf32>
    %222 = vector.broadcast %21 : vector<1x128xf32> to vector<40x128xf32>
    %223 = arith.addf %221, %222 : vector<40x128xf32>
    %cst_84 = arith.constant dense<0xFF800000> : vector<40xf32>
    %224 = vector.multi_reduction <maximumf>, %223, %cst_84 [1] : vector<40x128xf32> to vector<40xf32>
    %cst_85 = arith.constant 0xFF800000 : f32
    %225 = vector.broadcast %cst_85 : f32 to vector<40xf32>
    %226 = arith.maximumf %225, %224 : vector<40xf32>
    %227 = vector.shape_cast %226 : vector<40xf32> to vector<40x1xf32>
    %228 = vector.broadcast %227 : vector<40x1xf32> to vector<40x128xf32>
    %229 = arith.subf %223, %228 : vector<40x128xf32>
    %230 = math.exp %229 : vector<40x128xf32>
    %cst_86 = arith.constant dense<0.000000e+00> : vector<40xf32>
    %231 = vector.multi_reduction <add>, %230, %cst_86 [1] : vector<40x128xf32> to vector<40xf32>
    %232 = vector.shape_cast %231 : vector<40xf32> to vector<40x1xf32>
    %233 = vector.broadcast %232 : vector<40x1xf32> to vector<40x128xf32>
    %234 = arith.divf %230, %233 : vector<40x128xf32>
    %cst_87 = arith.constant dense<0.000000e+00> : vector<40x12xf32>
    %235 = tpu.matmul %234, %19, %cst_87 {dimension_numbers = #tpu.dot_dimension_numbers<[1], [0], [0], [1], [0, 0, 1, 1], [], []>} : vector<40x128xf32>, vector<128x12xf32>, vector<40x12xf32> -> vector<40x12xf32>
    %236 = arith.mulf %235, %17 : vector<40x12xf32>
    %cst_88 = arith.constant dense<0.000000e+00> : vector<12x128xf32>
    %237 = tpu.matmul %236, %221, %cst_88 {dimension_numbers = #tpu.dot_dimension_numbers<[0], [0], [1], [1], [0, 1, 1, 1], [], []>} : vector<40x12xf32>, vector<40x128xf32>, vector<12x128xf32> -> vector<12x128xf32>
    %cst_89 = arith.constant dense<0.000000e+00> : vector<40x12xf32>
    %238 = tpu.matmul %143, %236, %cst_89 {dimension_numbers = #tpu.dot_dimension_numbers<[1], [0], [0], [1], [0, 0, 1, 1], [], []>} : vector<40x40xf32>, vector<40x12xf32>, vector<40x12xf32> -> vector<40x12xf32>
    %cst_90 = arith.constant dense<0.000000e+00> : vector<12x12xf32>
    %239 = tpu.matmul %236, %238, %cst_90 {dimension_numbers = #tpu.dot_dimension_numbers<[0], [0], [1], [1], [0, 1, 1, 1], [], []>} : vector<40x12xf32>, vector<40x12xf32>, vector<12x12xf32> -> vector<12x12xf32>
    %240 = vector.extract_strided_slice %237 {offsets = [0, 0], sizes = [6, 128], strides = [1, 1]} : vector<12x128xf32> to vector<6x128xf32>
    %241 = vector.shape_cast %240 : vector<6x128xf32> to vector<1x6x128xf32>
    %242 = vector.shape_cast %241 : vector<1x6x128xf32> to vector<1x6x128xf32>
    %243 = vector.broadcast %242 : vector<1x6x128xf32> to vector<2x6x128xf32>
    %244 = vector.shape_cast %243 : vector<2x6x128xf32> to vector<12x128xf32>
    %245 = tpu.iota {dimensions = array<i32: 0>} : vector<12x12xi32>
    %246 = tpu.iota {dimensions = array<i32: 1>} : vector<12x12xi32>
    %247 = arith.cmpi eq, %245, %246 : vector<12x12xi32>
    %cst_91 = arith.constant 1.000000e+00 : f32
    %248 = vector.broadcast %cst_91 : f32 to vector<12x12xf32>
    %249 = arith.select %247, %248, %239 : vector<12x12xi1>, vector<12x12xf32>
    %cst_92 = arith.constant dense<0.000000e+00> : vector<12xf32>
    %250 = vector.multi_reduction <add>, %249, %cst_92 [1] : vector<12x12xf32> to vector<12xf32>
    %251 = vector.shape_cast %250 : vector<12xf32> to vector<12x1xf32>
    %cst_93 = arith.constant 1.000000e+00 : f32
    %252 = vector.broadcast %cst_93 : f32 to vector<12x1xf32>
    %253 = arith.maximumf %251, %252 : vector<12x1xf32>
    %254 = math.rsqrt %253 : vector<12x1xf32>
    %255 = vector.broadcast %254 : vector<12x1xf32> to vector<12x12xf32>
    %256 = arith.mulf %255, %249 : vector<12x12xf32>
    %cst_94 = arith.constant dense<0.000000e+00> : vector<12x64xf32>
    %257 = tpu.matmul %244, %10, %cst_94 {dimension_numbers = #tpu.dot_dimension_numbers<[1], [0], [0], [1], [0, 0, 1, 1], [], []>} : vector<12x128xf32>, vector<128x64xf32>, vector<12x64xf32> -> vector<12x64xf32>
    %258 = vector.broadcast %254 : vector<12x1xf32> to vector<12x64xf32>
    %259 = arith.mulf %258, %257 : vector<12x64xf32>
    %cst_95 = arith.constant dense<0.000000e+00> : vector<12x64xf32>
    %260 = tpu.matmul %256, %259, %cst_95 {dimension_numbers = #tpu.dot_dimension_numbers<[1], [0], [0], [1], [0, 0, 1, 1], [], []>} : vector<12x12xf32>, vector<12x64xf32>, vector<12x64xf32> -> vector<12x64xf32>
    %cst_96 = arith.constant 0.000000e+00 : f32
    %261 = vector.broadcast %cst_96 : f32 to vector<12x64xf32>
    %262 = arith.maximumf %260, %261 : vector<12x64xf32>
    %cst_97 = arith.constant dense<0.000000e+00> : vector<64xf32>
    %263 = vector.multi_reduction <add>, %262, %cst_97 [0] : vector<12x64xf32> to vector<64xf32>
    %264 = vector.shape_cast %263 : vector<64xf32> to vector<1x64xf32>
    %cst_98 = arith.constant 1.200000e+01 : f32
    %265 = vector.broadcast %cst_98 : f32 to vector<1x64xf32>
    %266 = arith.divf %264, %265 : vector<1x64xf32>
    %267 = vector.broadcast %266 : vector<1x64xf32> to vector<12x64xf32>
    %268 = arith.subf %262, %267 : vector<12x64xf32>
    %269 = arith.mulf %268, %268 : vector<12x64xf32>
    %cst_99 = arith.constant dense<0.000000e+00> : vector<64xf32>
    %270 = vector.multi_reduction <add>, %269, %cst_99 [0] : vector<12x64xf32> to vector<64xf32>
    %271 = vector.shape_cast %270 : vector<64xf32> to vector<1x64xf32>
    %cst_100 = arith.constant 1.200000e+01 : f32
    %272 = vector.broadcast %cst_100 : f32 to vector<1x64xf32>
    %273 = arith.divf %271, %272 : vector<1x64xf32>
    %cst_101 = arith.constant 9.99999974E-6 : f32
    %274 = vector.broadcast %cst_101 : f32 to vector<1x64xf32>
    %275 = arith.addf %273, %274 : vector<1x64xf32>
    %276 = math.rsqrt %275 : vector<1x64xf32>
    %277 = vector.broadcast %276 : vector<1x64xf32> to vector<12x64xf32>
    %278 = arith.mulf %268, %277 : vector<12x64xf32>
    %cst_102 = arith.constant dense<0.000000e+00> : vector<12x64xf32>
    %279 = tpu.matmul %278, %11, %cst_102 {dimension_numbers = #tpu.dot_dimension_numbers<[1], [0], [0], [1], [0, 0, 1, 1], [], []>} : vector<12x64xf32>, vector<64x64xf32>, vector<12x64xf32> -> vector<12x64xf32>
    %280 = vector.broadcast %254 : vector<12x1xf32> to vector<12x64xf32>
    %281 = arith.mulf %280, %279 : vector<12x64xf32>
    %cst_103 = arith.constant dense<0.000000e+00> : vector<12x64xf32>
    %282 = tpu.matmul %256, %281, %cst_103 {dimension_numbers = #tpu.dot_dimension_numbers<[1], [0], [0], [1], [0, 0, 1, 1], [], []>} : vector<12x12xf32>, vector<12x64xf32>, vector<12x64xf32> -> vector<12x64xf32>
    %cst_104 = arith.constant 0.000000e+00 : f32
    %283 = vector.broadcast %cst_104 : f32 to vector<12x64xf32>
    %284 = arith.maximumf %282, %283 : vector<12x64xf32>
    %cst_105 = arith.constant dense<0.000000e+00> : vector<64xf32>
    %285 = vector.multi_reduction <add>, %284, %cst_105 [0] : vector<12x64xf32> to vector<64xf32>
    %286 = vector.shape_cast %285 : vector<64xf32> to vector<1x64xf32>
    %cst_106 = arith.constant 1.200000e+01 : f32
    %287 = vector.broadcast %cst_106 : f32 to vector<1x64xf32>
    %288 = arith.divf %286, %287 : vector<1x64xf32>
    %289 = vector.broadcast %288 : vector<1x64xf32> to vector<12x64xf32>
    %290 = arith.subf %284, %289 : vector<12x64xf32>
    %291 = arith.mulf %290, %290 : vector<12x64xf32>
    %cst_107 = arith.constant dense<0.000000e+00> : vector<64xf32>
    %292 = vector.multi_reduction <add>, %291, %cst_107 [0] : vector<12x64xf32> to vector<64xf32>
    %293 = vector.shape_cast %292 : vector<64xf32> to vector<1x64xf32>
    %cst_108 = arith.constant 1.200000e+01 : f32
    %294 = vector.broadcast %cst_108 : f32 to vector<1x64xf32>
    %295 = arith.divf %293, %294 : vector<1x64xf32>
    %cst_109 = arith.constant 9.99999974E-6 : f32
    %296 = vector.broadcast %cst_109 : f32 to vector<1x64xf32>
    %297 = arith.addf %295, %296 : vector<1x64xf32>
    %298 = math.rsqrt %297 : vector<1x64xf32>
    %299 = vector.broadcast %298 : vector<1x64xf32> to vector<12x64xf32>
    %300 = arith.mulf %290, %299 : vector<12x64xf32>
    %cst_110 = arith.constant dense<0.000000e+00> : vector<12x64xf32>
    %301 = tpu.matmul %300, %12, %cst_110 {dimension_numbers = #tpu.dot_dimension_numbers<[1], [0], [0], [1], [0, 0, 1, 1], [], []>} : vector<12x64xf32>, vector<64x64xf32>, vector<12x64xf32> -> vector<12x64xf32>
    %302 = vector.broadcast %254 : vector<12x1xf32> to vector<12x64xf32>
    %303 = arith.mulf %302, %301 : vector<12x64xf32>
    %cst_111 = arith.constant dense<0.000000e+00> : vector<12x64xf32>
    %304 = tpu.matmul %256, %303, %cst_111 {dimension_numbers = #tpu.dot_dimension_numbers<[1], [0], [0], [1], [0, 0, 1, 1], [], []>} : vector<12x12xf32>, vector<12x64xf32>, vector<12x64xf32> -> vector<12x64xf32>
    %cst_112 = arith.constant 0.000000e+00 : f32
    %305 = vector.broadcast %cst_112 : f32 to vector<12x64xf32>
    %306 = arith.maximumf %304, %305 : vector<12x64xf32>
    %cst_113 = arith.constant dense<0.000000e+00> : vector<64xf32>
    %307 = vector.multi_reduction <add>, %306, %cst_113 [0] : vector<12x64xf32> to vector<64xf32>
    %308 = vector.shape_cast %307 : vector<64xf32> to vector<1x64xf32>
    %cst_114 = arith.constant 1.200000e+01 : f32
    %309 = vector.broadcast %cst_114 : f32 to vector<1x64xf32>
    %310 = arith.divf %308, %309 : vector<1x64xf32>
    %311 = vector.broadcast %310 : vector<1x64xf32> to vector<12x64xf32>
    %312 = arith.subf %306, %311 : vector<12x64xf32>
    %313 = arith.mulf %312, %312 : vector<12x64xf32>
    %cst_115 = arith.constant dense<0.000000e+00> : vector<64xf32>
    %314 = vector.multi_reduction <add>, %313, %cst_115 [0] : vector<12x64xf32> to vector<64xf32>
    %315 = vector.shape_cast %314 : vector<64xf32> to vector<1x64xf32>
    %cst_116 = arith.constant 1.200000e+01 : f32
    %316 = vector.broadcast %cst_116 : f32 to vector<1x64xf32>
    %317 = arith.divf %315, %316 : vector<1x64xf32>
    %cst_117 = arith.constant 9.99999974E-6 : f32
    %318 = vector.broadcast %cst_117 : f32 to vector<1x64xf32>
    %319 = arith.addf %317, %318 : vector<1x64xf32>
    %320 = math.rsqrt %319 : vector<1x64xf32>
    %321 = vector.broadcast %320 : vector<1x64xf32> to vector<12x64xf32>
    %322 = arith.mulf %312, %321 : vector<12x64xf32>
    %323 = vector.shape_cast %322 : vector<12x64xf32> to vector<2x6x64xf32>
    %cst_118 = arith.constant dense<0.000000e+00> : vector<2x64xf32>
    %324 = vector.multi_reduction <add>, %323, %cst_118 [1] : vector<2x6x64xf32> to vector<2x64xf32>
    %cst_119 = arith.constant 6.000000e+00 : f32
    %325 = vector.broadcast %cst_119 : f32 to vector<2x64xf32>
    %326 = arith.divf %324, %325 : vector<2x64xf32>
    %cst_120 = arith.constant dense<0.000000e+00> : vector<2x64xf32>
    %327 = tpu.matmul %326, %13, %cst_120 {dimension_numbers = #tpu.dot_dimension_numbers<[1], [0], [0], [1], [0, 0, 1, 1], [], []>} : vector<2x64xf32>, vector<64x64xf32>, vector<2x64xf32> -> vector<2x64xf32>
    %cst_121 = arith.constant 0.000000e+00 : f32
    %328 = vector.broadcast %cst_121 : f32 to vector<2x64xf32>
    %329 = arith.maximumf %327, %328 : vector<2x64xf32>
    %330 = vector.broadcast %14 : vector<1x64xf32> to vector<2x64xf32>
    %331 = arith.mulf %329, %330 : vector<2x64xf32>
    %cst_122 = arith.constant dense<0.000000e+00> : vector<2xf32>
    %332 = vector.multi_reduction <add>, %331, %cst_122 [1] : vector<2x64xf32> to vector<2xf32>
    %333 = vector.shape_cast %332 : vector<2xf32> to vector<2x1xf32>
    %c0_123 = arith.constant 0 : index
    %c0_124 = arith.constant 0 : index
    %c0_125 = arith.constant 0 : index
    %334 = vector.load %arg4[%c0_123, %c0_124, %c0_125] : memref<1x2x1xf32, #tpu.memory_space<vmem>>, vector<1x2x1xf32>
    %335 = vector.shape_cast %334 : vector<1x2x1xf32> to vector<2x1xf32>
    %336 = vector.shape_cast %333 : vector<2x1xf32> to vector<1x2x1xf32>
    tpu.vector_store %arg4[%c0_123, %c0_124, %c0_125], %336 {strides = array<i32>} : memref<1x2x1xf32, #tpu.memory_space<vmem>>, vector<1x2x1xf32>,
    return
  }
  func.func @transform_0(%arg0: i32) -> (i32, i32, i32) {
    %c0_i32 = arith.constant 0 : i32
    %c0_i32_0 = arith.constant 0 : i32
    %c0_i32_1 = arith.constant 0 : i32
    return %arg0, %c0_i32, %c0_i32_0 : i32, i32, i32
  }
  func.func @transform_1(%arg0: i32) -> (i32, i32, i32) {
    %c0_i32 = arith.constant 0 : i32
    %c0_i32_0 = arith.constant 0 : i32
    %c0_i32_1 = arith.constant 0 : i32
    return %arg0, %c0_i32, %c0_i32_0 : i32, i32, i32
  }
  func.func @transform_2(%arg0: i32) -> (i32, i32) {
    %c0_i32 = arith.constant 0 : i32
    %c0_i32_0 = arith.constant 0 : i32
    %c0_i32_1 = arith.constant 0 : i32
    return %c0_i32, %c0_i32_0 : i32, i32
  }
  func.func @transform_3(%arg0: i32) -> (i32, i32, i32) {
    %c0_i32 = arith.constant 0 : i32
    %c0_i32_0 = arith.constant 0 : i32
    %c0_i32_1 = arith.constant 0 : i32
    return %arg0, %c0_i32, %c0_i32_0 : i32, i32, i32
  }
}

</mosaic_0001>

<llo_original>
// kernel: full_forward.1
$region0: #{full_forward.1}
  #allocation0 [shape = 'u32[]', space=smem, size = 0x4, offset = 0x4, fixed_abs, tag = 'smem constant byte address 0x4 - core index']
  #allocation1 [shape = 'u32[72,128]{1,0:T(1,128)}', space=vmem, size = 0x9000, scoped, tag = 'internal scratch']
  %s0 = inlined_call_operand.vmem [shape: f32[4,64,8], index: 0, kind: input, shape index: {}]
  %s1 = inlined_call_operand.vmem [shape: f32[4,64,64], index: 1, kind: input, shape index: {}]
  %s2 = inlined_call_operand.vmem [shape: f32[1416,128], index: 2, kind: input, shape index: {}]
  %s3 = inlined_call_operand.vmem [shape: f32[4,2,1], index: 3, kind: output, shape index: {}]
  %s4 = sld [smem:[#allocation0]]
  $region45: #{full_forward.1} parent=0
    _
  %s6 = ssub.s32 1, %s4
  %s7 = scalar_select 0, %s6, %s4
  loop: start=0, step=1, limit=6
  $region2: #{full_forward.1} parent=0 // loop_pre_header
    _
  $region3: #{full_forward.1} parent=0 // loop_header
    %s9 = sphi 0, %s13
    %p10 = scmp.ge.s32.totalorder %s9, 6
    %s19 = sphi 0, %s21
    %s22 = sphi 0, %s19
    %s23 = sphi 0, %s22
    %s39 = sphi 0, %s23
    %s45 = sphi 0, %s47
    %s48 = sphi 0, %s45
    %s49 = sphi 0, %s48
    %s65 = sphi 0, %s49
    %s69 = sphi 0, %s69
    %s71 = sphi 0, %s69
    %s72 = sphi 0, %s71
    %s86 = sphi 0, %s72
    %s92 = sphi 0, %s94
    %s95 = sphi 0, %s92
    %s96 = sphi 0, %s95
    %s112 = sphi 0, %s96
  $region4: #{full_forward.1} parent=0 // loop_header_branch
    %12 = sbr.rel (%p10) target = $region8
  $region5: #{full_forward.1} parent=0 // loop_body
    %s14 = ssub.s32 %s9, 1
    %s15 = ssub.s32 %s9, 2
    %s16 = sadd.s32 %s9, 1
    %s17 = ssub.s32 %s9, %s16
    %p18 = scmp.eq.s32.totalorder %s17, 0
    %s20 = sadd.s32 %s19, 1
    %s21 = scalar_select %p18, %s19, %s20
    %p24 = pneg %p18
    %p25 = scmp.eq.s32.totalorder %s9, 3
    %p26 = por %p24, %p25
    %p27 = scmp.ne.s32.totalorder %s19, %s22
    %p28 = scmp.eq.s32.totalorder %s9, 0
    %p29 = por %p27, %p28
    %p30 = scmp.ne.s32.totalorder %s19, %s22
    %p31 = scmp.eq.s32.totalorder %s14, 3
    %p32 = por %p30, %p31
    %p33 = scmp.ne.s32.totalorder %s22, %s23
    %p34 = scmp.eq.s32.totalorder %s14, 0
    %p35 = por %p33, %p34
    %p36 = scmp.ne.s32.totalorder %s22, %s23
    %p37 = scmp.eq.s32.totalorder %s15, 3
    %p38 = por %p36, %p37
    %p40 = scmp.ne.s32.totalorder %s23, %s39
    %p41 = scmp.eq.s32.totalorder %s15, 0
    %p42 = por %p40, %p41
    %s43 = ssub.s32 %s9, %s16
    %p44 = scmp.eq.s32.totalorder %s43, 0
    %s46 = sadd.s32 %s45, 1
    %s47 = scalar_select %p44, %s45, %s46
    %p50 = pneg %p44
    %p51 = scmp.eq.s32.totalorder %s9, 3
    %p52 = por %p50, %p51
    %p53 = scmp.ne.s32.totalorder %s45, %s48
    %p54 = scmp.eq.s32.totalorder %s9, 0
    %p55 = por %p53, %p54
    %p56 = scmp.ne.s32.totalorder %s45, %s48
    %p57 = scmp.eq.s32.totalorder %s14, 3
    %p58 = por %p56, %p57
    %p59 = scmp.ne.s32.totalorder %s48, %s49
    %p60 = scmp.eq.s32.totalorder %s14, 0
    %p61 = por %p59, %p60
    %p62 = scmp.ne.s32.totalorder %s48, %s49
    %p63 = scmp.eq.s32.totalorder %s15, 3
    %p64 = por %p62, %p63
    %p66 = scmp.ne.s32.totalorder %s49, %s65
    %p67 = scmp.eq.s32.totalorder %s15, 0
    %p68 = por %p66, %p67
    %s70 = sadd.s32 %s69, 1
    %p73 = scmp.eq.s32.totalorder %s9, 3
    %p74 = scmp.ne.s32.totalorder %s69, %s71
    %p75 = scmp.eq.s32.totalorder %s9, 0
    %p76 = por %p74, %p75
    %p77 = scmp.ne.s32.totalorder %s69, %s71
    %p78 = scmp.eq.s32.totalorder %s14, 3
    %p79 = por %p77, %p78
    %p80 = scmp.ne.s32.totalorder %s71, %s72
    %p81 = scmp.eq.s32.totalorder %s14, 0
    %p82 = por %p80, %p81
    %p83 = scmp.ne.s32.totalorder %s71, %s72
    %p84 = scmp.eq.s32.totalorder %s15, 3
    %p85 = por %p83, %p84
    %p87 = scmp.ne.s32.totalorder %s72, %s86
    %p88 = scmp.eq.s32.totalorder %s15, 0
    %p89 = por %p87, %p88
    %s90 = ssub.s32 %s9, %s16
    %p91 = scmp.eq.s32.totalorder %s90, 0
    %s93 = sadd.s32 %s92, 1
    %s94 = scalar_select %p91, %s92, %s93
    %p97 = pneg %p91
    %p98 = scmp.eq.s32.totalorder %s9, 3
    %p99 = por %p97, %p98
    %p100 = scmp.ne.s32.totalorder %s92, %s95
    %p101 = scmp.eq.s32.totalorder %s9, 0
    %p102 = por %p100, %p101
    %p103 = scmp.ne.s32.totalorder %s92, %s95
    %p104 = scmp.eq.s32.totalorder %s14, 3
    %p105 = por %p103, %p104
    %p106 = scmp.ne.s32.totalorder %s95, %s96
    %p107 = scmp.eq.s32.totalorder %s14, 0
    %p108 = por %p106, %p107
    %p109 = scmp.ne.s32.totalorder %s95, %s96
    %p110 = scmp.eq.s32.totalorder %s15, 3
    %p111 = por %p109, %p110
    %p113 = scmp.ne.s32.totalorder %s96, %s112
    %p114 = scmp.eq.s32.totalorder %s15, 0
    %p115 = por %p113, %p114
    %p116 = scmp.le.s32.totalorder 1, %s9
    %p117 = scmp.lt.s32.totalorder %s9, 5
    %p118 = pnand %p116, %p117
    %p119 = pneg %p118
    // Predicated region
    $region9: #{full_forward.1} parent=5 // pred_check
      _
    $region10: #{full_forward.1} parent=5 // pred_check_branch
      %121 = sbr.rel (%p118) target = $region12
    $region11: #{full_forward.1} parent=5 // pred_region
      %s122 = ssub.s32 %s9, 1
      // Predicated region
      $region13: #{full_forward.1} parent=11 // pred_check
        %p123 = pneg %p82
      $region14: #{full_forward.1} parent=11 // pred_check_branch
        %125 = sbr.rel (%p123) target = $region16
      $region15: #{full_forward.1} parent=11 // pred_region
        _
      $region16: #{full_forward.1} parent=11 // pred_fallthru
        _
    $region12: #{full_forward.1} parent=5 // pred_fallthru
      _
    %p126 = scmp.lt.s32.totalorder %s9, 4
    // Predicated region
    $region17: #{full_forward.1} parent=5 // pred_check
      %p127 = pneg %p126
    $region18: #{full_forward.1} parent=5 // pred_check_branch
      %129 = sbr.rel (%p127) target = $region20
    $region19: #{full_forward.1} parent=5 // pred_region
      // Predicated region
      $region21: #{full_forward.1} parent=19 // pred_check
        %p130 = pneg %p29
      $region22: #{full_forward.1} parent=19 // pred_check_branch
        %132 = sbr.rel (%p130) target = $region24
      $region23: #{full_forward.1} parent=19 // pred_region
        %p133 = scmp.lt.s32.totalorder %s9, 3
        %s134 = scalar_select %p133, %s9, 3
        %s135 = smul.addr %s134, 8
        %s136 = smul.addr %s135, 8
        %s137 = scalar_lea.vmem %s0, %s136
      $region24: #{full_forward.1} parent=19 // pred_fallthru
        _
      // Predicated region
      $region25: #{full_forward.1} parent=19 // pred_check
        %p138 = pneg %p55
      $region26: #{full_forward.1} parent=19 // pred_check_branch
        %140 = sbr.rel (%p138) target = $region28
      $region27: #{full_forward.1} parent=19 // pred_region
        %p141 = scmp.lt.s32.totalorder %s9, 3
        %s142 = scalar_select %p141, %s9, 3
        %s143 = smul.addr %s142, 8
        %s144 = smul.addr %s143, 8
        %s145 = scalar_lea.vmem %s1, %s144
      $region28: #{full_forward.1} parent=19 // pred_fallthru
        _
    $region20: #{full_forward.1} parent=5 // pred_fallthru
      _
    %p146 = scmp.le.s32.totalorder 1, %s9
    %p147 = scmp.lt.s32.totalorder %s9, 5
    %p148 = pnand %p146, %p147
    %p149 = pneg %p148
    // Predicated region
    $region29: #{full_forward.1} parent=5 // pred_check
      _
    $region30: #{full_forward.1} parent=5 // pred_check_branch
      %151 = sbr.rel (%p148) target = $region32
    $region31: #{full_forward.1} parent=5 // pred_region
      %s152 = ssub.s32 %s9, 1
      %p153 = scmp.lt.s32.totalorder %s14, 3
      %s154 = scalar_select %p153, %s14, 3
      %s155 = smul.addr %s154, 8
      %s156 = smul.addr %s155, 8
      %s157 = scalar_lea.vmem %s0, %s156
      %p158 = pneg %p35
      %p159 = pneg %p32
      %p160 = scmp.lt.s32.totalorder %s14, 3
      %s161 = scalar_select %p160, %s14, 3
      %s162 = smul.addr %s161, 8
      %s163 = smul.addr %s162, 8
      %s164 = scalar_lea.vmem %s1, %s163
      %p165 = pneg %p61
      %p166 = pneg %p58
      %p167 = pneg %p82
      %p168 = pneg %p79
      %p169 = pneg %p108
      %p170 = pneg %p105
      %p171 = scmp.lt.s32.totalorder %s14, 3
      %s172 = scalar_select %p171, %s14, 3
      %s173 = smul.addr %s172, 2
      %s174 = scalar_lea.vmem %s3, %s173
      %p175 = scmp.lt.s32.totalorder %s14, 3
      %s176 = scalar_select %p175, %s14, 3
      %s177 = smul.addr %s176, 8
      %s178 = smul.addr %s177, 8
      %s179 = scalar_lea.vmem %s0, %s178
      %p180 = scmp.lt.s32.totalorder %s14, 3
      %s181 = scalar_select %p180, %s14, 3
      %s182 = smul.addr %s181, 8
      %s183 = smul.addr %s182, 8
      %s184 = scalar_lea.vmem %s1, %s183
      %p185 = scmp.lt.s32.totalorder %s14, 3
      %s186 = scalar_select %p185, %s14, 3
      %s187 = smul.addr %s186, 2
      %s188 = scalar_lea.vmem %s3, %s187
      %v189 = vld [vmem:[%s179] sm:$0xff]
      %v190 = vld [vmem:[%s179 + $0x8] sm:$0xff]
      %v191 = vld [vmem:[%s179 + $0x10] sm:$0xff]
      %v192 = vld [vmem:[%s179 + $0x18] sm:$0xff]
      %v193 = vld [vmem:[%s179 + $0x20] sm:$0xff]
      %v194 = vld [vmem:[%s179 + $0x28] sm:$0xff]
      %v195 = vld [vmem:[%s179 + $0x30] sm:$0xff]
      %v196 = vld [vmem:[%s179 + $0x38] sm:$0xff]
      %v197 = vld [vmem:[%s184] sm:$0xff]
      %v198 = vld [vmem:[%s184 + $0x8] sm:$0xff]
      %v199 = vld [vmem:[%s184 + $0x10] sm:$0xff]
      %v200 = vld [vmem:[%s184 + $0x18] sm:$0xff]
      %v201 = vld [vmem:[%s184 + $0x20] sm:$0xff]
      %v202 = vld [vmem:[%s184 + $0x28] sm:$0xff]
      %v203 = vld [vmem:[%s184 + $0x30] sm:$0xff]
      %v204 = vld [vmem:[%s184 + $0x38] sm:$0xff]
      %v205 = vld [vmem:[%s2] sm:$0xff]
      %v206 = vld [vmem:[%s2 + $0x8] sm:$0xff]
      %v207 = vld [vmem:[%s2 + $0x10] sm:$0xff]
      %v208 = vld [vmem:[%s2 + $0x18] sm:$0xff]
      %v209 = vld [vmem:[%s2 + $0x20] sm:$0xff]
      %v210 = vld [vmem:[%s2 + $0x28] sm:$0xff]
      %v211 = vld [vmem:[%s2 + $0x30] sm:$0xff]
      %v212 = vld [vmem:[%s2 + $0x38] sm:$0xff]
      %v213 = vld [vmem:[%s2 + $0x40] sm:$0xff]
      %v214 = vld [vmem:[%s2 + $0x48] sm:$0xff]
      %v215 = vld [vmem:[%s2 + $0x50] sm:$0xff]
      %v216 = vld [vmem:[%s2 + $0x58] sm:$0xff]
      %v217 = vld [vmem:[%s2 + $0x60] sm:$0xff]
      %v218 = vld [vmem:[%s2 + $0x68] sm:$0xff]
      %v219 = vld [vmem:[%s2 + $0x70] sm:$0xff]
      %v220 = vld [vmem:[%s2 + $0x78] sm:$0xff]
      %v221 = vld [vmem:[%s2 + $0x80] sm:$0xff]
      %v222 = vld [vmem:[%s2 + $0x88] sm:$0xff]
      %v223 = vld [vmem:[%s2 + $0x90] sm:$0xff]
      %v224 = vld [vmem:[%s2 + $0x98] sm:$0xff]
      %v225 = vld [vmem:[%s2 + $0xa0] sm:$0xff]
      %v226 = vld [vmem:[%s2 + $0xa8] sm:$0xff]
      %v227 = vld [vmem:[%s2 + $0xb0] sm:$0xff]
      %v228 = vld [vmem:[%s2 + $0xb8] sm:$0xff]
      %v229 = vld [vmem:[%s2 + $0xc0] sm:$0xff]
      %v230 = vld [vmem:[%s2 + $0xc8] sm:$0xff]
      %v231 = vld [vmem:[%s2 + $0xd0] sm:$0xff]
      %v232 = vld [vmem:[%s2 + $0xd8] sm:$0xff]
      %v233 = vld [vmem:[%s2 + $0xe0] sm:$0xff]
      %v234 = vld [vmem:[%s2 + $0xe8] sm:$0xff]
      %v235 = vld [vmem:[%s2 + $0xf0] sm:$0xff]
      %v236 = vld [vmem:[%s2 + $0xf8] sm:$0xff]
      %v237 = vld [vmem:[%s2 + $0x100] sm:$0xff]
      %v238 = vld [vmem:[%s2 + $0x108] sm:$0xff]
      %v239 = vld [vmem:[%s2 + $0x110] sm:$0xff]
      %v240 = vld [vmem:[%s2 + $0x118] sm:$0xff]
      %v241 = vld [vmem:[%s2 + $0x120] sm:$0xff]
      %v242 = vld [vmem:[%s2 + $0x128] sm:$0xff]
      %v243 = vld [vmem:[%s2 + $0x130] sm:$0xff]
      %v244 = vld [vmem:[%s2 + $0x138] sm:$0xff]
      %v245 = vld [vmem:[%s2 + $0x140] sm:$0xff]
      %v246 = vld [vmem:[%s2 + $0x148] sm:$0xff]
      %v247 = vld [vmem:[%s2 + $0x150] sm:$0xff]
      %v248 = vld [vmem:[%s2 + $0x158] sm:$0xff]
      %v249 = vld [vmem:[%s2 + $0x160] sm:$0xff]
      %v250 = vld [vmem:[%s2 + $0x168] sm:$0xff]
      %v251 = vld [vmem:[%s2 + $0x170] sm:$0xff]
      %v252 = vld [vmem:[%s2 + $0x178] sm:$0xff]
      %v253 = vld [vmem:[%s2 + $0x180] sm:$0xff]
      %v254 = vld [vmem:[%s2 + $0x188] sm:$0xff]
      %v255 = vld [vmem:[%s2 + $0x190] sm:$0xff]
      %v256 = vld [vmem:[%s2 + $0x198] sm:$0xff]
      %v257 = vld [vmem:[%s2 + $0x1a0] sm:$0xff]
      %v258 = vld [vmem:[%s2 + $0x1a8] sm:$0xff]
      %v259 = vld [vmem:[%s2 + $0x1b0] sm:$0xff]
      %v260 = vld [vmem:[%s2 + $0x1b8] sm:$0xff]
      %v261 = vld [vmem:[%s2 + $0x1c0] sm:$0xff]
      %v262 = vld [vmem:[%s2 + $0x1c8] sm:$0xff]
      %v263 = vld [vmem:[%s2 + $0x1d0] sm:$0xff]
      %v264 = vld [vmem:[%s2 + $0x1d8] sm:$0xff]
      %v265 = vld [vmem:[%s2 + $0x1e0] sm:$0xff]
      %v266 = vld [vmem:[%s2 + $0x1e8] sm:$0xff]
      %v267 = vld [vmem:[%s2 + $0x1f0] sm:$0xff]
      %v268 = vld [vmem:[%s2 + $0x1f8] sm:$0xff]
      %v269 = vld [vmem:[%s2 + $0x200] sm:$0xff]
      %v270 = vld [vmem:[%s2 + $0x208] sm:$0xff]
      %v271 = vld [vmem:[%s2 + $0x210] sm:$0xff]
      %v272 = vld [vmem:[%s2 + $0x218] sm:$0xff]
      %v273 = vld [vmem:[%s2 + $0x220] sm:$0xff]
      %v274 = vld [vmem:[%s2 + $0x228] sm:$0xff]
      %v275 = vld [vmem:[%s2 + $0x230] sm:$0xff]
      %v276 = vld [vmem:[%s2 + $0x238] sm:$0xff]
      %v277 = vld [vmem:[%s2 + $0x240] sm:$0xff]
      %v278 = vld [vmem:[%s2 + $0x248] sm:$0xff]
      %v279 = vld [vmem:[%s2 + $0x250] sm:$0xff]
      %v280 = vld [vmem:[%s2 + $0x258] sm:$0xff]
      %v281 = vld [vmem:[%s2 + $0x260] sm:$0xff]
      %v282 = vld [vmem:[%s2 + $0x268] sm:$0xff]
      %v283 = vld [vmem:[%s2 + $0x270] sm:$0xff]
      %v284 = vld [vmem:[%s2 + $0x278] sm:$0xff]
      %v285 = vld [vmem:[%s2 + $0x280] sm:$0xff]
      %v286 = vld [vmem:[%s2 + $0x288] sm:$0xff]
      %v287 = vld [vmem:[%s2 + $0x290] sm:$0xff]
      %v288 = vld [vmem:[%s2 + $0x298] sm:$0xff]
      %v289 = vld [vmem:[%s2 + $0x2a0] sm:$0xff]
      %v290 = vld [vmem:[%s2 + $0x2a8] sm:$0xff]
      %v291 = vld [vmem:[%s2 + $0x2b0] sm:$0xff]
      %v292 = vld [vmem:[%s2 + $0x2b8] sm:$0xff]
      %v293 = vld [vmem:[%s2 + $0x2c0] sm:$0xff]
      %v294 = vld [vmem:[%s2 + $0x2c8] sm:$0xff]
      %v295 = vld [vmem:[%s2 + $0x2d0] sm:$0xff]
      %v296 = vld [vmem:[%s2 + $0x2d8] sm:$0xff]
      %v297 = vld [vmem:[%s2 + $0x2e0] sm:$0xff]
      %v298 = vld [vmem:[%s2 + $0x2e8] sm:$0xff]
      %v299 = vld [vmem:[%s2 + $0x2f0] sm:$0xff]
      %v300 = vld [vmem:[%s2 + $0x2f8] sm:$0xff]
      %v301 = vld [vmem:[%s2 + $0x300] sm:$0xff]
      %v302 = vld [vmem:[%s2 + $0x308] sm:$0xff]
      %v303 = vld [vmem:[%s2 + $0x310] sm:$0xff]
      %v304 = vld [vmem:[%s2 + $0x318] sm:$0xff]
      %v305 = vld [vmem:[%s2 + $0x320] sm:$0xff]
      %v306 = vld [vmem:[%s2 + $0x328] sm:$0xff]
      %v307 = vld [vmem:[%s2 + $0x330] sm:$0xff]
      %v308 = vld [vmem:[%s2 + $0x338] sm:$0xff]
      %v309 = vld [vmem:[%s2 + $0x340] sm:$0xff]
      %v310 = vld [vmem:[%s2 + $0x348] sm:$0xff]
      %v311 = vld [vmem:[%s2 + $0x350] sm:$0xff]
      %v312 = vld [vmem:[%s2 + $0x358] sm:$0xff]
      %v313 = vld [vmem:[%s2 + $0x360] sm:$0xff]
      %v314 = vld [vmem:[%s2 + $0x368] sm:$0xff]
      %v315 = vld [vmem:[%s2 + $0x370] sm:$0xff]
      %v316 = vld [vmem:[%s2 + $0x378] sm:$0xff]
      %v317 = vld [vmem:[%s2 + $0x380] sm:$0xff]
      %v318 = vld [vmem:[%s2 + $0x388] sm:$0xff]
      %v319 = vld [vmem:[%s2 + $0x390] sm:$0xff]
      %v320 = vld [vmem:[%s2 + $0x398] sm:$0xff]
      %v321 = vld [vmem:[%s2 + $0x3a0] sm:$0xff]
      %v322 = vld [vmem:[%s2 + $0x3a8] sm:$0xff]
      %v323 = vld [vmem:[%s2 + $0x3b0] sm:$0xff]
      %v324 = vld [vmem:[%s2 + $0x3b8] sm:$0xff]
      %v325 = vld [vmem:[%s2 + $0x3c0] sm:$0xff]
      %v326 = vld [vmem:[%s2 + $0x3c8] sm:$0x1]
      %v327 = vld [vmem:[%s2 + $0x3d0] sm:$0xff]
      %v328 = vld [vmem:[%s2 + $0x3d8] sm:$0xff]
      %v329 = vld [vmem:[%s2 + $0x3e0] sm:$0xff]
      %v330 = vld [vmem:[%s2 + $0x3e8] sm:$0xff]
      %v331 = vld [vmem:[%s2 + $0x3f0] sm:$0xff]
      %v332 = vld [vmem:[%s2 + $0x3f8] sm:$0xff]
      %v333 = vld [vmem:[%s2 + $0x400] sm:$0xff]
      %v334 = vld [vmem:[%s2 + $0x408] sm:$0xff]
      %v335 = vld [vmem:[%s2 + $0x410] sm:$0xff]
      %v336 = vld [vmem:[%s2 + $0x418] sm:$0xff]
      %v337 = vld [vmem:[%s2 + $0x420] sm:$0xff]
      %v338 = vld [vmem:[%s2 + $0x428] sm:$0xff]
      %v339 = vld [vmem:[%s2 + $0x430] sm:$0xff]
      %v340 = vld [vmem:[%s2 + $0x438] sm:$0xff]
      %v341 = vld [vmem:[%s2 + $0x440] sm:$0xff]
      %v342 = vld [vmem:[%s2 + $0x448] sm:$0xff]
      %v343 = vld [vmem:[%s2 + $0x450] sm:$0xff]
      %v344 = vld [vmem:[%s2 + $0x458] sm:$0xff]
      %v345 = vld [vmem:[%s2 + $0x460] sm:$0xff]
      %v346 = vld [vmem:[%s2 + $0x468] sm:$0xff]
      %v347 = vld [vmem:[%s2 + $0x470] sm:$0xff]
      %v348 = vld [vmem:[%s2 + $0x478] sm:$0xff]
      %v349 = vld [vmem:[%s2 + $0x480] sm:$0xff]
      %v350 = vld [vmem:[%s2 + $0x488] sm:$0xff]
      %v351 = vld [vmem:[%s2 + $0x490] sm:$0xff]
      %v352 = vld [vmem:[%s2 + $0x498] sm:$0xff]
      %v353 = vld [vmem:[%s2 + $0x4a0] sm:$0xff]
      %v354 = vld [vmem:[%s2 + $0x4a8] sm:$0xff]
      %v355 = vld [vmem:[%s2 + $0x4b0] sm:$0xff]
      %v356 = vld [vmem:[%s2 + $0x4b8] sm:$0xff]
      %v357 = vld [vmem:[%s2 + $0x4c0] sm:$0xff]
      %v358 = vld [vmem:[%s2 + $0x4c8] sm:$0xff]
      %v359 = vld [vmem:[%s2 + $0x4d0] sm:$0xff]
      %v360 = vld [vmem:[%s2 + $0x4d8] sm:$0xff]
      %v361 = vld [vmem:[%s2 + $0x4e0] sm:$0xff]
      %v362 = vld [vmem:[%s2 + $0x4e8] sm:$0xff]
      %v363 = vld [vmem:[%s2 + $0x4f0] sm:$0xff]
      %v364 = vld [vmem:[%s2 + $0x4f8] sm:$0xff]
      %v365 = vld [vmem:[%s2 + $0x500] sm:$0xff]
      %v366 = vld [vmem:[%s2 + $0x508] sm:$0xff]
      %v367 = vld [vmem:[%s2 + $0x510] sm:$0xff]
      %v368 = vld [vmem:[%s2 + $0x518] sm:$0xff]
      %v369 = vld [vmem:[%s2 + $0x520] sm:$0xff]
      %v370 = vld [vmem:[%s2 + $0x528] sm:$0xff]
      %v371 = vld [vmem:[%s2 + $0x530] sm:$0xff]
      %v372 = vld [vmem:[%s2 + $0x538] sm:$0xff]
      %v373 = vld [vmem:[%s2 + $0x540] sm:$0xff]
      %v374 = vld [vmem:[%s2 + $0x548] sm:$0xff]
      %v375 = vld [vmem:[%s2 + $0x550] sm:$0xff]
      %v376 = vld [vmem:[%s2 + $0x558] sm:$0xff]
      %v377 = vld [vmem:[%s2 + $0x560] sm:$0xff]
      %v378 = vld [vmem:[%s2 + $0x568] sm:$0xff]
      %v379 = vld [vmem:[%s2 + $0x570] sm:$0xff]
      %v380 = vld [vmem:[%s2 + $0x578] sm:$0x1]
      %v381 = vld [vmem:[%s2 + $0x580] sm:$0x1]
      %v382 = vlaneseq
      %v383 = vshrl.u32 %v382, 7
      %v384 = vadd.s32 %v383, 8
      %v385 = vadd.s32 %v383, 16
      %v386 = vadd.s32 %v383, 24
      %v387 = vadd.s32 %v383, 32
      %v388 = vadd.s32 %v383, 40
      %v389 = vadd.s32 %v383, 48
      %v390 = vadd.s32 %v383, 56
      %v391 = vlaneseq
      %v392 = vand.u32 %v391, 127
      %vm393 = vcmp.eq.s32.totalorder %v383, %v392
      %vm394 = vcmp.eq.s32.totalorder %v384, %v392
      %vm395 = vcmp.eq.s32.totalorder %v385, %v392
      %vm396 = vcmp.eq.s32.totalorder %v386, %v392
      %vm397 = vcmp.eq.s32.totalorder %v387, %v392
      %vm398 = vcmp.eq.s32.totalorder %v388, %v392
      %vm399 = vcmp.eq.s32.totalorder %v389, %v392
      %vm400 = vcmp.eq.s32.totalorder %v390, %v392
      %v401 = vsel %vm393, 1.0, %v197
      %v402 = vsel %vm394, 1.0, %v198
      %v403 = vsel %vm395, 1.0, %v199
      %v404 = vsel %vm396, 1.0, %v200
      %v405 = vsel %vm397, 1.0, %v201
      %v406 = vsel %vm398, 1.0, %v202
      %v407 = vsel %vm399, 1.0, %v203
      %v408 = vsel %vm400, 1.0, %v204
      %vm409 = vcmask 523264
      %v410 = vsel %vm409, %v401, 0.0
      %411 = vadd.xlane.f32.xlu0 %v410
      %v412 = vpop.xlane.xlu0 %411
      %v413 = vsel %vm409, %v402, 0.0
      %414 = vadd.xlane.f32.xlu0 %v413
      %v415 = vpop.xlane.xlu0 %414
      %v416 = vsel %vm409, %v403, 0.0
      %417 = vadd.xlane.f32.xlu0 %v416
      %v418 = vpop.xlane.xlu0 %417
      %v419 = vsel %vm409, %v404, 0.0
      %420 = vadd.xlane.f32.xlu0 %v419
      %v421 = vpop.xlane.xlu0 %420
      %v422 = vsel %vm409, %v405, 0.0
      %423 = vadd.xlane.f32.xlu0 %v422
      %v424 = vpop.xlane.xlu0 %423
      %v425 = vsel %vm409, %v406, 0.0
      %426 = vadd.xlane.f32.xlu0 %v425
      %v427 = vpop.xlane.xlu0 %426
      %v428 = vsel %vm409, %v407, 0.0
      %429 = vadd.xlane.f32.xlu0 %v428
      %v430 = vpop.xlane.xlu0 %429
      %v431 = vsel %vm409, %v408, 0.0
      %432 = vadd.xlane.f32.xlu0 %v431
      %v433 = vpop.xlane.xlu0 %432
      %v434 = vmax.f32 %v412, 1.0
      %v435 = vmax.f32 %v415, 1.0
      %v436 = vmax.f32 %v418, 1.0
      %v437 = vmax.f32 %v421, 1.0
      %v438 = vmax.f32 %v424, 1.0
      %v439 = vmax.f32 %v427, 1.0
      %v440 = vmax.f32 %v430, 1.0
      %v441 = vmax.f32 %v433, 1.0
      %v442 = vrsqrt.pop %v434
      %v443 = vmul.f32 %v442, %v434
      %v444 = vmul.f32 %v443, %v442
      %v445 = vmul.f32 0.5, %v444
      %v446 = vsub.f32 1.5, %v445
      %v447 = vmul.f32 %v442, %v446
      %vm448 = vweird.f32 %v434
      %vm449 = vweird.f32 %v442
      %vm450 = vmor %vm448, %vm449
      %v451 = vsel %vm450, %v442, %v447
      %v452 = vrsqrt.pop %v435
      %v453 = vmul.f32 %v452, %v435
      %v454 = vmul.f32 %v453, %v452
      %v455 = vmul.f32 0.5, %v454
      %v456 = vsub.f32 1.5, %v455
      %v457 = vmul.f32 %v452, %v456
      %vm458 = vweird.f32 %v435
      %vm459 = vweird.f32 %v452
      %vm460 = vmor %vm458, %vm459
      %v461 = vsel %vm460, %v452, %v457
      %v462 = vrsqrt.pop %v436
      %v463 = vmul.f32 %v462, %v436
      %v464 = vmul.f32 %v463, %v462
      %v465 = vmul.f32 0.5, %v464
      %v466 = vsub.f32 1.5, %v465
      %v467 = vmul.f32 %v462, %v466
      %vm468 = vweird.f32 %v436
      %vm469 = vweird.f32 %v462
      %vm470 = vmor %vm468, %vm469
      %v471 = vsel %vm470, %v462, %v467
      %v472 = vrsqrt.pop %v437
      %v473 = vmul.f32 %v472, %v437
      %v474 = vmul.f32 %v473, %v472
      %v475 = vmul.f32 0.5, %v474
      %v476 = vsub.f32 1.5, %v475
      %v477 = vmul.f32 %v472, %v476
      %vm478 = vweird.f32 %v437
      %vm479 = vweird.f32 %v472
      %vm480 = vmor %vm478, %vm479
      %v481 = vsel %vm480, %v472, %v477
      %v482 = vrsqrt.pop %v438
      %v483 = vmul.f32 %v482, %v438
      %v484 = vmul.f32 %v483, %v482
      %v485 = vmul.f32 0.5, %v484
      %v486 = vsub.f32 1.5, %v485
      %v487 = vmul.f32 %v482, %v486
      %vm488 = vweird.f32 %v438
      %vm489 = vweird.f32 %v482
      %vm490 = vmor %vm488, %vm489
      %v491 = vsel %vm490, %v482, %v487
      %v492 = vrsqrt.pop %v439
      %v493 = vmul.f32 %v492, %v439
      %v494 = vmul.f32 %v493, %v492
      %v495 = vmul.f32 0.5, %v494
      %v496 = vsub.f32 1.5, %v495
      %v497 = vmul.f32 %v492, %v496
      %vm498 = vweird.f32 %v439
      %vm499 = vweird.f32 %v492
      %vm500 = vmor %vm498, %vm499
      %v501 = vsel %vm500, %v492, %v497
      %v502 = vrsqrt.pop %v440
      %v503 = vmul.f32 %v502, %v440
      %v504 = vmul.f32 %v503, %v502
      %v505 = vmul.f32 0.5, %v504
      %v506 = vsub.f32 1.5, %v505
      %v507 = vmul.f32 %v502, %v506
      %vm508 = vweird.f32 %v440
      %vm509 = vweird.f32 %v502
      %vm510 = vmor %vm508, %vm509
      %v511 = vsel %vm510, %v502, %v507
      %v512 = vrsqrt.pop %v441
      %v513 = vmul.f32 %v512, %v441
      %v514 = vmul.f32 %v513, %v512
      %v515 = vmul.f32 0.5, %v514
      %v516 = vsub.f32 1.5, %v515
      %v517 = vmul.f32 %v512, %v516
      %vm518 = vweird.f32 %v441
      %vm519 = vweird.f32 %v512
      %vm520 = vmor %vm518, %vm519
      %v521 = vsel %vm520, %v512, %v517
      %v522 = vmul.f32 %v451, %v401
      %v523 = vmul.f32 %v461, %v402
      %v524 = vmul.f32 %v471, %v403
      %v525 = vmul.f32 %v481, %v404
      %v526 = vmul.f32 %v491, %v405
      %v527 = vmul.f32 %v501, %v406
      %v528 = vmul.f32 %v511, %v407
      %v529 = vmul.f32 %v521, %v408
      %vm530 = vcmask 64512
      %v532 = vsel %vm530, %v189, 0
      %v535 = vsel %vm530, %v190, 0
      %v538 = vsel %vm530, %v191, 0
      %v541 = vsel %vm530, %v192, 0
      %v544 = vsel %vm530, %v193, 0
      %v547 = vsel %vm530, %v194, 0
      %v550 = vsel %vm530, %v195, 0
      %v553 = vsel %vm530, %v196, 0
      %555 = vmatpush.msra.mxu0 0.0
      %556 = vmatpush.msra.mxu0 0.0
      %557 = vmatpush.msra.mxu0 0.0
      %558 = vmatpush.msra.mxu0 0.0
      %559 = vmatpush.msra.mxu0 0.0
      %560 = vmatpush.msra.mxu0 0.0
      %561 = vmatpush.msra.mxu0 0.0
      %562 = vmatpush.msra.mxu0 0.0
      %563 = vmatpush.msra.mxu0 0.0
      %564 = vmatpush.msra.mxu0 0.0
      %565 = vmatpush.msra.mxu0 0.0
      %566 = vmatpush.msra.mxu0 0.0
      %567 = vmatpush.msra.mxu0 0.0
      %568 = vmatpush.msra.mxu0 0.0
      %569 = vmatpush.msra.mxu0 0.0
      %570 = vmatpush.msra.mxu0 %v205
      %571 = vmatmul.f32.gmra.mxu0 %v532
      %v572 = vpop.f32.mrf.mxu0
      %v573 = vadd.f32 0.0, %v572
      %574 = vmatmul.f32.gmra.mxu0 %v535
      %v575 = vpop.f32.mrf.mxu0
      %v576 = vadd.f32 0.0, %v575
      %577 = vmatmul.f32.gmra.mxu0 %v538
      %v578 = vpop.f32.mrf.mxu0
      %v579 = vadd.f32 0.0, %v578
      %580 = vmatmul.f32.gmra.mxu0 %v541
      %v581 = vpop.f32.mrf.mxu0
      %v582 = vadd.f32 0.0, %v581
      %583 = vmatmul.f32.gmra.mxu0 %v544
      %v584 = vpop.f32.mrf.mxu0
      %v585 = vadd.f32 0.0, %v584
      %586 = vmatmul.f32.gmra.mxu0 %v547
      %v587 = vpop.f32.mrf.mxu0
      %v588 = vadd.f32 0.0, %v587
      %589 = vmatmul.f32.gmra.mxu0 %v550
      %v590 = vpop.f32.mrf.mxu0
      %v591 = vadd.f32 0.0, %v590
      %592 = vmatmul.f32.gmra.mxu0 %v553
      %v593 = vpop.f32.mrf.mxu0
      %v594 = vadd.f32 0.0, %v593
      %595 = vdwg.mxu0
      %v596 = vmul.f32 %v451, %v573
      %v597 = vmul.f32 %v461, %v576
      %v598 = vmul.f32 %v471, %v579
      %v599 = vmul.f32 %v481, %v582
      %v600 = vmul.f32 %v491, %v585
      %v601 = vmul.f32 %v501, %v588
      %v602 = vmul.f32 %v511, %v591
      %v603 = vmul.f32 %v521, %v594
      %v605 = vsel %vm409, %v522, 0
      %v608 = vsel %vm409, %v523, 0
      %v611 = vsel %vm409, %v524, 0
      %v614 = vsel %vm409, %v525, 0
      %v617 = vsel %vm409, %v526, 0
      %v620 = vsel %vm409, %v527, 0
      %v623 = vsel %vm409, %v528, 0
      %v626 = vsel %vm409, %v529, 0
      %628 = vmatpush.msra.mxu0 0.0
      %629 = vmatpush.msra.mxu0 0.0
      %630 = vmatpush.msra.mxu0 0.0
      %631 = vmatpush.msra.mxu0 0.0
      %632 = vmatpush.msra.mxu0 0.0
      %633 = vmatpush.msra.mxu0 0.0
      %634 = vmatpush.msra.mxu0 0.0
      %635 = vmatpush.msra.mxu0 0.0
      %636 = vmatpush.msra.mxu0 %v603
      %637 = vmatpush.msra.mxu0 %v602
      %638 = vmatpush.msra.mxu0 %v601
      %639 = vmatpush.msra.mxu0 %v600
      %640 = vmatpush.msra.mxu0 %v599
      %641 = vmatpush.msra.mxu0 %v598
      %642 = vmatpush.msra.mxu0 %v597
      %643 = vmatpush.msra.mxu0 %v596
      %644 = vmatmul.f32.gmra.mxu0 %v605
      %v645 = vpop.f32.mrf.mxu0
      %v646 = vadd.f32 0.0, %v645
      %647 = vmatmul.f32.gmra.mxu0 %v608
      %v648 = vpop.f32.mrf.mxu0
      %v649 = vadd.f32 0.0, %v648
      %650 = vmatmul.f32.gmra.mxu0 %v611
      %v651 = vpop.f32.mrf.mxu0
      %v652 = vadd.f32 0.0, %v651
      %653 = vmatmul.f32.gmra.mxu0 %v614
      %v654 = vpop.f32.mrf.mxu0
      %v655 = vadd.f32 0.0, %v654
      %656 = vmatmul.f32.gmra.mxu0 %v617
      %v657 = vpop.f32.mrf.mxu0
      %v658 = vadd.f32 0.0, %v657
      %659 = vmatmul.f32.gmra.mxu0 %v620
      %v660 = vpop.f32.mrf.mxu0
      %v661 = vadd.f32 0.0, %v660
      %662 = vmatmul.f32.gmra.mxu0 %v623
      %v663 = vpop.f32.mrf.mxu0
      %v664 = vadd.f32 0.0, %v663
      %665 = vmatmul.f32.gmra.mxu0 %v626
      %v666 = vpop.f32.mrf.mxu0
      %v667 = vadd.f32 0.0, %v666
      %668 = vdwg.mxu0
      %v669 = vmax.f32 %v646, 0.0
      %v670 = vmax.f32 %v649, 0.0
      %v671 = vmax.f32 %v652, 0.0
      %v672 = vmax.f32 %v655, 0.0
      %v673 = vmax.f32 %v658, 0.0
      %v674 = vmax.f32 %v661, 0.0
      %v675 = vmax.f32 %v664, 0.0
      %v676 = vmax.f32 %v667, 0.0
      %678 = vset.pattern.permute.xlu0 0
      %679 = vperm.xlu0 %678, %v335
      %v680 = vpop.permute.xlu0 %679
      %683 = vset.pattern.permute.xlu0 0
      %684 = vperm.xlu0 %683, %v336
      %v685 = vpop.permute.xlu0 %684
      %688 = vset.pattern.permute.xlu0 0
      %689 = vperm.xlu0 %688, %v337
      %v690 = vpop.permute.xlu0 %689
      %693 = vset.pattern.permute.xlu0 0
      %694 = vperm.xlu0 %693, %v338
      %v695 = vpop.permute.xlu0 %694
      %698 = vset.pattern.permute.xlu0 0
      %699 = vperm.xlu0 %698, %v339
      %v700 = vpop.permute.xlu0 %699
      %703 = vset.pattern.permute.xlu0 0
      %704 = vperm.xlu0 %703, %v340
      %v705 = vpop.permute.xlu0 %704
      %708 = vset.pattern.permute.xlu0 0
      %709 = vperm.xlu0 %708, %v341
      %v710 = vpop.permute.xlu0 %709
      %713 = vset.pattern.permute.xlu0 0
      %714 = vperm.xlu0 %713, %v342
      %v715 = vpop.permute.xlu0 %714
      %v717 = vmul.f32 %v669, %v680
      %v718 = vmul.f32 %v670, %v685
      %v719 = vmul.f32 %v671, %v690
      %v720 = vmul.f32 %v672, %v695
      %v721 = vmul.f32 %v673, %v700
      %v722 = vmul.f32 %v674, %v705
      %v723 = vmul.f32 %v675, %v710
      %v724 = vmul.f32 %v676, %v715
      %v725 = vadd.f32 %v717, %v718
      %v726 = vadd.f32 %v725, %v719
      %v727 = vadd.f32 %v726, %v720
      %v728 = vadd.f32 %v727, %v721
      %v729 = vadd.f32 %v728, %v722
      %v730 = vadd.f32 %v729, %v723
      %v731 = vadd.f32 %v730, %v724
      %v732 = vrot.slane %v731, 4
      %v733 = vadd.f32 %v731, %v732
      %v734 = vrot.slane %v733, 2
      %v735 = vadd.f32 %v733, %v734
      %v736 = vrot.slane %v735, 1
      %v737 = vadd.f32 %v735, %v736
      %v738 = vrcp.pop 60.0
      %v739 = vmul.f32 60.0, %v738
      %v740 = vsub.f32 1.0, %v739
      %v741 = vmul.f32 %v738, %v740
      %v742 = vadd.f32 %v738, %v741
      %vm743 = vweird.f32 %v738
      %v744 = vsel %vm743, %v738, %v742
      %v745 = vmul.f32 %v737, %v744
      %v746 = vsub.f32 %v669, %v745
      %v747 = vsub.f32 %v670, %v745
      %v748 = vsub.f32 %v671, %v745
      %v749 = vsub.f32 %v672, %v745
      %v750 = vsub.f32 %v673, %v745
      %v751 = vsub.f32 %v674, %v745
      %v752 = vsub.f32 %v675, %v745
      %v753 = vsub.f32 %v676, %v745
      %v754 = vmul.f32 %v746, %v680
      %v755 = vmul.f32 %v747, %v685
      %v756 = vmul.f32 %v748, %v690
      %v757 = vmul.f32 %v749, %v695
      %v758 = vmul.f32 %v750, %v700
      %v759 = vmul.f32 %v751, %v705
      %v760 = vmul.f32 %v752, %v710
      %v761 = vmul.f32 %v753, %v715
      %v762 = vmul.f32 %v754, %v754
      %v763 = vmul.f32 %v755, %v755
      %v764 = vmul.f32 %v756, %v756
      %v765 = vmul.f32 %v757, %v757
      %v766 = vmul.f32 %v758, %v758
      %v767 = vmul.f32 %v759, %v759
      %v768 = vmul.f32 %v760, %v760
      %v769 = vmul.f32 %v761, %v761
      %v770 = vadd.f32 %v762, %v763
      %v771 = vadd.f32 %v770, %v764
      %v772 = vadd.f32 %v771, %v765
      %v773 = vadd.f32 %v772, %v766
      %v774 = vadd.f32 %v773, %v767
      %v775 = vadd.f32 %v774, %v768
      %v776 = vadd.f32 %v775, %v769
      %v777 = vrot.slane %v776, 4
      %v778 = vadd.f32 %v776, %v777
      %v779 = vrot.slane %v778, 2
      %v780 = vadd.f32 %v778, %v779
      %v781 = vrot.slane %v780, 1
      %v782 = vadd.f32 %v780, %v781
      %v783 = vmul.f32 %v782, %v744
      %v784 = vadd.f32 %v783, 1e-05
      %v785 = vrsqrt.pop %v784
      %v786 = vmul.f32 %v785, %v784
      %v787 = vmul.f32 %v786, %v785
      %v788 = vmul.f32 0.5, %v787
      %v789 = vsub.f32 1.5, %v788
      %v790 = vmul.f32 %v785, %v789
      %vm791 = vweird.f32 %v784
      %vm792 = vweird.f32 %v785
      %vm793 = vmor %vm791, %vm792
      %v794 = vsel %vm793, %v785, %v790
      %v795 = vmul.f32 %v746, %v794
      %v796 = vmul.f32 %v747, %v794
      %v797 = vmul.f32 %v748, %v794
      %v798 = vmul.f32 %v749, %v794
      %v799 = vmul.f32 %v750, %v794
      %v800 = vmul.f32 %v751, %v794
      %v801 = vmul.f32 %v752, %v794
      %v802 = vmul.f32 %v753, %v794
      %v803 = vmul.f32 %v795, %v680
      %v804 = vmul.f32 %v796, %v685
      %v805 = vmul.f32 %v797, %v690
      %v806 = vmul.f32 %v798, %v695
      %v807 = vmul.f32 %v799, %v700
      %v808 = vmul.f32 %v800, %v705
      %v809 = vmul.f32 %v801, %v710
      %v810 = vmul.f32 %v802, %v715
      %811 = vmatpush.msra.mxu0 %v221
      %812 = vmatpush.msra.mxu0 %v220
      %813 = vmatpush.msra.mxu0 %v219
      %814 = vmatpush.msra.mxu0 %v218
      %815 = vmatpush.msra.mxu0 %v217
      %816 = vmatpush.msra.mxu0 %v216
      %817 = vmatpush.msra.mxu0 %v215
      %818 = vmatpush.msra.mxu0 %v214
      %819 = vmatpush.msra.mxu0 %v213
      %820 = vmatpush.msra.mxu0 %v212
      %821 = vmatpush.msra.mxu0 %v211
      %822 = vmatpush.msra.mxu0 %v210
      %823 = vmatpush.msra.mxu0 %v209
      %824 = vmatpush.msra.mxu0 %v208
      %825 = vmatpush.msra.mxu0 %v207
      %826 = vmatpush.msra.mxu0 %v206
      %827 = vmatmul.f32.gmra.mxu0 %v803
      %v828 = vpop.f32.mrf.mxu0
      %v829 = vadd.f32 0.0, %v828
      %830 = vmatmul.f32.gmra.mxu0 %v804
      %v831 = vpop.f32.mrf.mxu0
      %v832 = vadd.f32 0.0, %v831
      %833 = vmatmul.f32.gmra.mxu0 %v805
      %v834 = vpop.f32.mrf.mxu0
      %v835 = vadd.f32 0.0, %v834
      %836 = vmatmul.f32.gmra.mxu0 %v806
      %v837 = vpop.f32.mrf.mxu0
      %v838 = vadd.f32 0.0, %v837
      %839 = vmatmul.f32.gmra.mxu0 %v807
      %v840 = vpop.f32.mrf.mxu0
      %v841 = vadd.f32 0.0, %v840
      %842 = vmatmul.f32.gmra.mxu0 %v808
      %v843 = vpop.f32.mrf.mxu0
      %v844 = vadd.f32 0.0, %v843
      %845 = vmatmul.f32.gmra.mxu0 %v809
      %v846 = vpop.f32.mrf.mxu0
      %v847 = vadd.f32 0.0, %v846
      %848 = vmatmul.f32.gmra.mxu0 %v810
      %v849 = vpop.f32.mrf.mxu0
      %v850 = vadd.f32 0.0, %v849
      %851 = vdwg.mxu0
      %v852 = vmul.f32 %v451, %v829
      %v853 = vmul.f32 %v461, %v832
      %v854 = vmul.f32 %v471, %v835
      %v855 = vmul.f32 %v481, %v838
      %v856 = vmul.f32 %v491, %v841
      %v857 = vmul.f32 %v501, %v844
      %v858 = vmul.f32 %v511, %v847
      %v859 = vmul.f32 %v521, %v850
      %860 = vmatpush.msra.mxu0 0.0
      %861 = vmatpush.msra.mxu0 0.0
      %862 = vmatpush.msra.mxu0 0.0
      %863 = vmatpush.msra.mxu0 0.0
      %864 = vmatpush.msra.mxu0 0.0
      %865 = vmatpush.msra.mxu0 0.0
      %866 = vmatpush.msra.mxu0 0.0
      %867 = vmatpush.msra.mxu0 0.0
      %868 = vmatpush.msra.mxu0 %v859
      %869 = vmatpush.msra.mxu0 %v858
      %870 = vmatpush.msra.mxu0 %v857
      %871 = vmatpush.msra.mxu0 %v856
      %872 = vmatpush.msra.mxu0 %v855
      %873 = vmatpush.msra.mxu0 %v854
      %874 = vmatpush.msra.mxu0 %v853
      %875 = vmatpush.msra.mxu0 %v852
      %876 = vmatmul.f32.gmra.mxu0 %v605
      %v877 = vpop.f32.mrf.mxu0
      %v878 = vadd.f32 0.0, %v877
      %879 = vmatmul.f32.gmra.mxu0 %v608
      %v880 = vpop.f32.mrf.mxu0
      %v881 = vadd.f32 0.0, %v880
      %882 = vmatmul.f32.gmra.mxu0 %v611
      %v883 = vpop.f32.mrf.mxu0
      %v884 = vadd.f32 0.0, %v883
      %885 = vmatmul.f32.gmra.mxu0 %v614
      %v886 = vpop.f32.mrf.mxu0
      %v887 = vadd.f32 0.0, %v886
      %888 = vmatmul.f32.gmra.mxu0 %v617
      %v889 = vpop.f32.mrf.mxu0
      %v890 = vadd.f32 0.0, %v889
      %891 = vmatmul.f32.gmra.mxu0 %v620
      %v892 = vpop.f32.mrf.mxu0
      %v893 = vadd.f32 0.0, %v892
      %894 = vmatmul.f32.gmra.mxu0 %v623
      %v895 = vpop.f32.mrf.mxu0
      %v896 = vadd.f32 0.0, %v895
      %897 = vmatmul.f32.gmra.mxu0 %v626
      %v898 = vpop.f32.mrf.mxu0
      %v899 = vadd.f32 0.0, %v898
      %900 = vdwg.mxu0
      %v901 = vmax.f32 %v878, 0.0
      %v902 = vmax.f32 %v881, 0.0
      %v903 = vmax.f32 %v884, 0.0
      %v904 = vmax.f32 %v887, 0.0
      %v905 = vmax.f32 %v890, 0.0
      %v906 = vmax.f32 %v893, 0.0
      %v907 = vmax.f32 %v896, 0.0
      %v908 = vmax.f32 %v899, 0.0
      %v909 = vmul.f32 %v901, %v680
      %v910 = vmul.f32 %v902, %v685
      %v911 = vmul.f32 %v903, %v690
      %v912 = vmul.f32 %v904, %v695
      %v913 = vmul.f32 %v905, %v700
      %v914 = vmul.f32 %v906, %v705
      %v915 = vmul.f32 %v907, %v710
      %v916 = vmul.f32 %v908, %v715
      %v917 = vadd.f32 %v909, %v910
      %v918 = vadd.f32 %v917, %v911
      %v919 = vadd.f32 %v918, %v912
      %v920 = vadd.f32 %v919, %v913
      %v921 = vadd.f32 %v920, %v914
      %v922 = vadd.f32 %v921, %v915
      %v923 = vadd.f32 %v922, %v916
      %v924 = vrot.slane %v923, 4
      %v925 = vadd.f32 %v923, %v924
      %v926 = vrot.slane %v925, 2
      %v927 = vadd.f32 %v925, %v926
      %v928 = vrot.slane %v927, 1
      %v929 = vadd.f32 %v927, %v928
      %v930 = vmul.f32 %v929, %v744
      %v931 = vsub.f32 %v901, %v930
      %v932 = vsub.f32 %v902, %v930
      %v933 = vsub.f32 %v903, %v930
      %v934 = vsub.f32 %v904, %v930
      %v935 = vsub.f32 %v905, %v930
      %v936 = vsub.f32 %v906, %v930
      %v937 = vsub.f32 %v907, %v930
      %v938 = vsub.f32 %v908, %v930
      %v939 = vmul.f32 %v931, %v680
      %v940 = vmul.f32 %v932, %v685
      %v941 = vmul.f32 %v933, %v690
      %v942 = vmul.f32 %v934, %v695
      %v943 = vmul.f32 %v935, %v700
      %v944 = vmul.f32 %v936, %v705
      %v945 = vmul.f32 %v937, %v710
      %v946 = vmul.f32 %v938, %v715
      %v947 = vmul.f32 %v939, %v939
      %v948 = vmul.f32 %v940, %v940
      %v949 = vmul.f32 %v941, %v941
      %v950 = vmul.f32 %v942, %v942
      %v951 = vmul.f32 %v943, %v943
      %v952 = vmul.f32 %v944, %v944
      %v953 = vmul.f32 %v945, %v945
      %v954 = vmul.f32 %v946, %v946
      %v955 = vadd.f32 %v947, %v948
      %v956 = vadd.f32 %v955, %v949
      %v957 = vadd.f32 %v956, %v950
      %v958 = vadd.f32 %v957, %v951
      %v959 = vadd.f32 %v958, %v952
      %v960 = vadd.f32 %v959, %v953
      %v961 = vadd.f32 %v960, %v954
      %v962 = vrot.slane %v961, 4
      %v963 = vadd.f32 %v961, %v962
      %v964 = vrot.slane %v963, 2
      %v965 = vadd.f32 %v963, %v964
      %v966 = vrot.slane %v965, 1
      %v967 = vadd.f32 %v965, %v966
      %v968 = vmul.f32 %v967, %v744
      %v969 = vadd.f32 %v968, 1e-05
      %v970 = vrsqrt.pop %v969
      %v971 = vmul.f32 %v970, %v969
      %v972 = vmul.f32 %v971, %v970
      %v973 = vmul.f32 0.5, %v972
      %v974 = vsub.f32 1.5, %v973
      %v975 = vmul.f32 %v970, %v974
      %vm976 = vweird.f32 %v969
      %vm977 = vweird.f32 %v970
      %vm978 = vmor %vm976, %vm977
      %v979 = vsel %vm978, %v970, %v975
      %v980 = vmul.f32 %v931, %v979
      %v981 = vmul.f32 %v932, %v979
      %v982 = vmul.f32 %v933, %v979
      %v983 = vmul.f32 %v934, %v979
      %v984 = vmul.f32 %v935, %v979
      %v985 = vmul.f32 %v936, %v979
      %v986 = vmul.f32 %v937, %v979
      %v987 = vmul.f32 %v938, %v979
      %v988 = vmul.f32 %v980, %v680
      %v989 = vmul.f32 %v981, %v685
      %v990 = vmul.f32 %v982, %v690
      %v991 = vmul.f32 %v983, %v695
      %v992 = vmul.f32 %v984, %v700
      %v993 = vmul.f32 %v985, %v705
      %v994 = vmul.f32 %v986, %v710
      %v995 = vmul.f32 %v987, %v715
      %996 = vmatpush.msra.mxu0 %v237
      %997 = vmatpush.msra.mxu0 %v236
      %998 = vmatpush.msra.mxu0 %v235
      %999 = vmatpush.msra.mxu0 %v234
      %1000 = vmatpush.msra.mxu0 %v233
      %1001 = vmatpush.msra.mxu0 %v232
      %1002 = vmatpush.msra.mxu0 %v231
      %1003 = vmatpush.msra.mxu0 %v230
      %1004 = vmatpush.msra.mxu0 %v229
      %1005 = vmatpush.msra.mxu0 %v228
      %1006 = vmatpush.msra.mxu0 %v227
      %1007 = vmatpush.msra.mxu0 %v226
      %1008 = vmatpush.msra.mxu0 %v225
      %1009 = vmatpush.msra.mxu0 %v224
      %1010 = vmatpush.msra.mxu0 %v223
      %1011 = vmatpush.msra.mxu0 %v222
      %1012 = vmatmul.f32.gmra.mxu0 %v988
      %v1013 = vpop.f32.mrf.mxu0
      %v1014 = vadd.f32 0.0, %v1013
      %1015 = vmatmul.f32.gmra.mxu0 %v989
      %v1016 = vpop.f32.mrf.mxu0
      %v1017 = vadd.f32 0.0, %v1016
      %1018 = vmatmul.f32.gmra.mxu0 %v990
      %v1019 = vpop.f32.mrf.mxu0
      %v1020 = vadd.f32 0.0, %v1019
      %1021 = vmatmul.f32.gmra.mxu0 %v991
      %v1022 = vpop.f32.mrf.mxu0
      %v1023 = vadd.f32 0.0, %v1022
      %1024 = vmatmul.f32.gmra.mxu0 %v992
      %v1025 = vpop.f32.mrf.mxu0
      %v1026 = vadd.f32 0.0, %v1025
      %1027 = vmatmul.f32.gmra.mxu0 %v993
      %v1028 = vpop.f32.mrf.mxu0
      %v1029 = vadd.f32 0.0, %v1028
      %1030 = vmatmul.f32.gmra.mxu0 %v994
      %v1031 = vpop.f32.mrf.mxu0
      %v1032 = vadd.f32 0.0, %v1031
      %1033 = vmatmul.f32.gmra.mxu0 %v995
      %v1034 = vpop.f32.mrf.mxu0
      %v1035 = vadd.f32 0.0, %v1034
      %1036 = vdwg.mxu0
      %v1037 = vmul.f32 %v451, %v1014
      %v1038 = vmul.f32 %v461, %v1017
      %v1039 = vmul.f32 %v471, %v1020
      %v1040 = vmul.f32 %v481, %v1023
      %v1041 = vmul.f32 %v491, %v1026
      %v1042 = vmul.f32 %v501, %v1029
      %v1043 = vmul.f32 %v511, %v1032
      %v1044 = vmul.f32 %v521, %v1035
      %1045 = vmatpush.msra.mxu0 0.0
      %1046 = vmatpush.msra.mxu0 0.0
      %1047 = vmatpush.msra.mxu0 0.0
      %1048 = vmatpush.msra.mxu0 0.0
      %1049 = vmatpush.msra.mxu0 0.0
      %1050 = vmatpush.msra.mxu0 0.0
      %1051 = vmatpush.msra.mxu0 0.0
      %1052 = vmatpush.msra.mxu0 0.0
      %1053 = vmatpush.msra.mxu0 %v1044
      %1054 = vmatpush.msra.mxu0 %v1043
      %1055 = vmatpush.msra.mxu0 %v1042
      %1056 = vmatpush.msra.mxu0 %v1041
      %1057 = vmatpush.msra.mxu0 %v1040
      %1058 = vmatpush.msra.mxu0 %v1039
      %1059 = vmatpush.msra.mxu0 %v1038
      %1060 = vmatpush.msra.mxu0 %v1037
      %1061 = vmatmul.f32.gmra.mxu0 %v605
      %v1062 = vpop.f32.mrf.mxu0
      %v1063 = vadd.f32 0.0, %v1062
      %1064 = vmatmul.f32.gmra.mxu0 %v608
      %v1065 = vpop.f32.mrf.mxu0
      %v1066 = vadd.f32 0.0, %v1065
      %1067 = vmatmul.f32.gmra.mxu0 %v611
      %v1068 = vpop.f32.mrf.mxu0
      %v1069 = vadd.f32 0.0, %v1068
      %1070 = vmatmul.f32.gmra.mxu0 %v614
      %v1071 = vpop.f32.mrf.mxu0
      %v1072 = vadd.f32 0.0, %v1071
      %1073 = vmatmul.f32.gmra.mxu0 %v617
      %v1074 = vpop.f32.mrf.mxu0
      %v1075 = vadd.f32 0.0, %v1074
      %1076 = vmatmul.f32.gmra.mxu0 %v620
      %v1077 = vpop.f32.mrf.mxu0
      %v1078 = vadd.f32 0.0, %v1077
      %1079 = vmatmul.f32.gmra.mxu0 %v623
      %v1080 = vpop.f32.mrf.mxu0
      %v1081 = vadd.f32 0.0, %v1080
      %1082 = vmatmul.f32.gmra.mxu0 %v626
      %v1083 = vpop.f32.mrf.mxu0
      %v1084 = vadd.f32 0.0, %v1083
      %1085 = vdwg.mxu0
      %v1086 = vmax.f32 %v1063, 0.0
      %v1087 = vmax.f32 %v1066, 0.0
      %v1088 = vmax.f32 %v1069, 0.0
      %v1089 = vmax.f32 %v1072, 0.0
      %v1090 = vmax.f32 %v1075, 0.0
      %v1091 = vmax.f32 %v1078, 0.0
      %v1092 = vmax.f32 %v1081, 0.0
      %v1093 = vmax.f32 %v1084, 0.0
      %v1094 = vmul.f32 %v1086, %v680
      %v1095 = vmul.f32 %v1087, %v685
      %v1096 = vmul.f32 %v1088, %v690
      %v1097 = vmul.f32 %v1089, %v695
      %v1098 = vmul.f32 %v1090, %v700
      %v1099 = vmul.f32 %v1091, %v705
      %v1100 = vmul.f32 %v1092, %v710
      %v1101 = vmul.f32 %v1093, %v715
      %v1102 = vadd.f32 %v1094, %v1095
      %v1103 = vadd.f32 %v1102, %v1096
      %v1104 = vadd.f32 %v1103, %v1097
      %v1105 = vadd.f32 %v1104, %v1098
      %v1106 = vadd.f32 %v1105, %v1099
      %v1107 = vadd.f32 %v1106, %v1100
      %v1108 = vadd.f32 %v1107, %v1101
      %v1109 = vrot.slane %v1108, 4
      %v1110 = vadd.f32 %v1108, %v1109
      %v1111 = vrot.slane %v1110, 2
      %v1112 = vadd.f32 %v1110, %v1111
      %v1113 = vrot.slane %v1112, 1
      %v1114 = vadd.f32 %v1112, %v1113
      %v1115 = vmul.f32 %v1114, %v744
      %v1116 = vsub.f32 %v1086, %v1115
      %v1117 = vsub.f32 %v1087, %v1115
      %v1118 = vsub.f32 %v1088, %v1115
      %v1119 = vsub.f32 %v1089, %v1115
      %v1120 = vsub.f32 %v1090, %v1115
      %v1121 = vsub.f32 %v1091, %v1115
      %v1122 = vsub.f32 %v1092, %v1115
      %v1123 = vsub.f32 %v1093, %v1115
      %v1124 = vmul.f32 %v1116, %v680
      %v1125 = vmul.f32 %v1117, %v685
      %v1126 = vmul.f32 %v1118, %v690
      %v1127 = vmul.f32 %v1119, %v695
      %v1128 = vmul.f32 %v1120, %v700
      %v1129 = vmul.f32 %v1121, %v705
      %v1130 = vmul.f32 %v1122, %v710
      %v1131 = vmul.f32 %v1123, %v715
      %v1132 = vmul.f32 %v1124, %v1124
      %v1133 = vmul.f32 %v1125, %v1125
      %v1134 = vmul.f32 %v1126, %v1126
      %v1135 = vmul.f32 %v1127, %v1127
      %v1136 = vmul.f32 %v1128, %v1128
      %v1137 = vmul.f32 %v1129, %v1129
      %v1138 = vmul.f32 %v1130, %v1130
      %v1139 = vmul.f32 %v1131, %v1131
      %v1140 = vadd.f32 %v1132, %v1133
      %v1141 = vadd.f32 %v1140, %v1134
      %v1142 = vadd.f32 %v1141, %v1135
      %v1143 = vadd.f32 %v1142, %v1136
      %v1144 = vadd.f32 %v1143, %v1137
      %v1145 = vadd.f32 %v1144, %v1138
      %v1146 = vadd.f32 %v1145, %v1139
      %v1147 = vrot.slane %v1146, 4
      %v1148 = vadd.f32 %v1146, %v1147
      %v1149 = vrot.slane %v1148, 2
      %v1150 = vadd.f32 %v1148, %v1149
      %v1151 = vrot.slane %v1150, 1
      %v1152 = vadd.f32 %v1150, %v1151
      %v1153 = vmul.f32 %v1152, %v744
      %v1154 = vadd.f32 %v1153, 1e-05
      %v1155 = vrsqrt.pop %v1154
      %v1156 = vmul.f32 %v1155, %v1154
      %v1157 = vmul.f32 %v1156, %v1155
      %v1158 = vmul.f32 0.5, %v1157
      %v1159 = vsub.f32 1.5, %v1158
      %v1160 = vmul.f32 %v1155, %v1159
      %vm1161 = vweird.f32 %v1154
      %vm1162 = vweird.f32 %v1155
      %vm1163 = vmor %vm1161, %vm1162
      %v1164 = vsel %vm1163, %v1155, %v1160
      %v1165 = vmul.f32 %v1116, %v1164
      %v1166 = vmul.f32 %v1117, %v1164
      %v1167 = vmul.f32 %v1118, %v1164
      %v1168 = vmul.f32 %v1119, %v1164
      %v1169 = vmul.f32 %v1120, %v1164
      %v1170 = vmul.f32 %v1121, %v1164
      %v1171 = vmul.f32 %v1122, %v1164
      %v1172 = vmul.f32 %v1123, %v1164
      %v1173 = vmul.f32 %v1165, %v680
      %v1174 = vmul.f32 %v1166, %v685
      %v1175 = vmul.f32 %v1167, %v690
      %v1176 = vmul.f32 %v1168, %v695
      %v1177 = vmul.f32 %v1169, %v700
      %v1178 = vmul.f32 %v1170, %v705
      %v1179 = vmul.f32 %v1171, %v710
      %v1180 = vmul.f32 %v1172, %v715
      %v1181 = vperm.slane %v380, 0
      %v1182 = vadd.f32 %v1173, %v1181
      %v1183 = vadd.f32 %v1174, %v1181
      %v1184 = vadd.f32 %v1175, %v1181
      %v1185 = vadd.f32 %v1176, %v1181
      %v1186 = vadd.f32 %v1177, %v1181
      %v1187 = vadd.f32 %v1178, %v1181
      %v1188 = vadd.f32 %v1179, %v1181
      %v1189 = vadd.f32 %v1180, %v1181
      %1190 = vmax.xlane.f32.xlu0 %v1182
      %v1191 = vpop.xlane.xlu0 %1190
      %1192 = vmax.xlane.f32.xlu0 %v1183
      %v1193 = vpop.xlane.xlu0 %1192
      %1194 = vmax.xlane.f32.xlu0 %v1184
      %v1195 = vpop.xlane.xlu0 %1194
      %1196 = vmax.xlane.f32.xlu0 %v1185
      %v1197 = vpop.xlane.xlu0 %1196
      %1198 = vmax.xlane.f32.xlu0 %v1186
      %v1199 = vpop.xlane.xlu0 %1198
      %1200 = vmax.xlane.f32.xlu0 %v1187
      %v1201 = vpop.xlane.xlu0 %1200
      %1202 = vmax.xlane.f32.xlu0 %v1188
      %v1203 = vpop.xlane.xlu0 %1202
      %1204 = vmax.xlane.f32.xlu0 %v1189
      %v1205 = vpop.xlane.xlu0 %1204
      %v1206 = vsub.f32 %v1182, %v1191
      %v1207 = vsub.f32 %v1183, %v1193
      %v1208 = vsub.f32 %v1184, %v1195
      %v1209 = vsub.f32 %v1185, %v1197
      %v1210 = vsub.f32 %v1186, %v1199
      %v1211 = vsub.f32 %v1187, %v1201
      %v1212 = vsub.f32 %v1188, %v1203
      %v1213 = vsub.f32 %v1189, %v1205
      %v1214 = vmul.f32 %v1206, 1.442695
      %v1215 = vpow.pop %v1214
      %v1216 = vmul.f32 %v1207, 1.442695
      %v1217 = vpow.pop %v1216
      %v1218 = vmul.f32 %v1208, 1.442695
      %v1219 = vpow.pop %v1218
      %v1220 = vmul.f32 %v1209, 1.442695
      %v1221 = vpow.pop %v1220
      %v1222 = vmul.f32 %v1210, 1.442695
      %v1223 = vpow.pop %v1222
      %v1224 = vmul.f32 %v1211, 1.442695
      %v1225 = vpow.pop %v1224
      %v1226 = vmul.f32 %v1212, 1.442695
      %v1227 = vpow.pop %v1226
      %v1228 = vmul.f32 %v1213, 1.442695
      %v1229 = vpow.pop %v1228
      %1230 = vadd.xlane.f32.xlu0 %v1215
      %v1231 = vpop.xlane.xlu0 %1230
      %1232 = vadd.xlane.f32.xlu0 %v1217
      %v1233 = vpop.xlane.xlu0 %1232
      %1234 = vadd.xlane.f32.xlu0 %v1219
      %v1235 = vpop.xlane.xlu0 %1234
      %1236 = vadd.xlane.f32.xlu0 %v1221
      %v1237 = vpop.xlane.xlu0 %1236
      %1238 = vadd.xlane.f32.xlu0 %v1223
      %v1239 = vpop.xlane.xlu0 %1238
      %1240 = vadd.xlane.f32.xlu0 %v1225
      %v1241 = vpop.xlane.xlu0 %1240
      %1242 = vadd.xlane.f32.xlu0 %v1227
      %v1243 = vpop.xlane.xlu0 %1242
      %1244 = vadd.xlane.f32.xlu0 %v1229
      %v1245 = vpop.xlane.xlu0 %1244
      %v1246 = vrcp.pop %v1231
      %v1247 = vmul.f32 %v1231, %v1246
      %v1248 = vsub.f32 1.0, %v1247
      %v1249 = vmul.f32 %v1246, %v1248
      %v1250 = vadd.f32 %v1246, %v1249
      %vm1251 = vweird.f32 %v1231
      %vm1252 = vweird.f32 %v1246
      %vm1253 = vmor %vm1251, %vm1252
      %v1254 = vsel %vm1253, %v1246, %v1250
      %v1255 = vand.u32 2147483647, %v1231
      %vm1256 = vcmp.eq.f32.partialorder %v1255, 8.507059e+37
      %v1257 = vand.u32 %v1231, 2147483648
      %v1258 = vor.u32 1.1754944e-38, %v1257
      %v1259 = vsel %vm1256, %v1258, %v1254
      %v1260 = vmul.f32 %v1215, %v1259
      %v1261 = vrcp.pop %v1233
      %v1262 = vmul.f32 %v1233, %v1261
      %v1263 = vsub.f32 1.0, %v1262
      %v1264 = vmul.f32 %v1261, %v1263
      %v1265 = vadd.f32 %v1261, %v1264
      %vm1266 = vweird.f32 %v1233
      %vm1267 = vweird.f32 %v1261
      %vm1268 = vmor %vm1266, %vm1267
      %v1269 = vsel %vm1268, %v1261, %v1265
      %v1270 = vand.u32 2147483647, %v1233
      %vm1271 = vcmp.eq.f32.partialorder %v1270, 8.507059e+37
      %v1272 = vand.u32 %v1233, 2147483648
      %v1273 = vor.u32 1.1754944e-38, %v1272
      %v1274 = vsel %vm1271, %v1273, %v1269
      %v1275 = vmul.f32 %v1217, %v1274
      %v1276 = vrcp.pop %v1235
      %v1277 = vmul.f32 %v1235, %v1276
      %v1278 = vsub.f32 1.0, %v1277
      %v1279 = vmul.f32 %v1276, %v1278
      %v1280 = vadd.f32 %v1276, %v1279
      %vm1281 = vweird.f32 %v1235
      %vm1282 = vweird.f32 %v1276
      %vm1283 = vmor %vm1281, %vm1282
      %v1284 = vsel %vm1283, %v1276, %v1280
      %v1285 = vand.u32 2147483647, %v1235
      %vm1286 = vcmp.eq.f32.partialorder %v1285, 8.507059e+37
      %v1287 = vand.u32 %v1235, 2147483648
      %v1288 = vor.u32 1.1754944e-38, %v1287
      %v1289 = vsel %vm1286, %v1288, %v1284
      %v1290 = vmul.f32 %v1219, %v1289
      %v1291 = vrcp.pop %v1237
      %v1292 = vmul.f32 %v1237, %v1291
      %v1293 = vsub.f32 1.0, %v1292
      %v1294 = vmul.f32 %v1291, %v1293
      %v1295 = vadd.f32 %v1291, %v1294
      %vm1296 = vweird.f32 %v1237
      %vm1297 = vweird.f32 %v1291
      %vm1298 = vmor %vm1296, %vm1297
      %v1299 = vsel %vm1298, %v1291, %v1295
      %v1300 = vand.u32 2147483647, %v1237
      %vm1301 = vcmp.eq.f32.partialorder %v1300, 8.507059e+37
      %v1302 = vand.u32 %v1237, 2147483648
      %v1303 = vor.u32 1.1754944e-38, %v1302
      %v1304 = vsel %vm1301, %v1303, %v1299
      %v1305 = vmul.f32 %v1221, %v1304
      %v1306 = vrcp.pop %v1239
      %v1307 = vmul.f32 %v1239, %v1306
      %v1308 = vsub.f32 1.0, %v1307
      %v1309 = vmul.f32 %v1306, %v1308
      %v1310 = vadd.f32 %v1306, %v1309
      %vm1311 = vweird.f32 %v1239
      %vm1312 = vweird.f32 %v1306
      %vm1313 = vmor %vm1311, %vm1312
      %v1314 = vsel %vm1313, %v1306, %v1310
      %v1315 = vand.u32 2147483647, %v1239
      %vm1316 = vcmp.eq.f32.partialorder %v1315, 8.507059e+37
      %v1317 = vand.u32 %v1239, 2147483648
      %v1318 = vor.u32 1.1754944e-38, %v1317
      %v1319 = vsel %vm1316, %v1318, %v1314
      %v1320 = vmul.f32 %v1223, %v1319
      %v1321 = vrcp.pop %v1241
      %v1322 = vmul.f32 %v1241, %v1321
      %v1323 = vsub.f32 1.0, %v1322
      %v1324 = vmul.f32 %v1321, %v1323
      %v1325 = vadd.f32 %v1321, %v1324
      %vm1326 = vweird.f32 %v1241
      %vm1327 = vweird.f32 %v1321
      %vm1328 = vmor %vm1326, %vm1327
      %v1329 = vsel %vm1328, %v1321, %v1325
      %v1330 = vand.u32 2147483647, %v1241
      %vm1331 = vcmp.eq.f32.partialorder %v1330, 8.507059e+37
      %v1332 = vand.u32 %v1241, 2147483648
      %v1333 = vor.u32 1.1754944e-38, %v1332
      %v1334 = vsel %vm1331, %v1333, %v1329
      %v1335 = vmul.f32 %v1225, %v1334
      %v1336 = vrcp.pop %v1243
      %v1337 = vmul.f32 %v1243, %v1336
      %v1338 = vsub.f32 1.0, %v1337
      %v1339 = vmul.f32 %v1336, %v1338
      %v1340 = vadd.f32 %v1336, %v1339
      %vm1341 = vweird.f32 %v1243
      %vm1342 = vweird.f32 %v1336
      %vm1343 = vmor %vm1341, %vm1342
      %v1344 = vsel %vm1343, %v1336, %v1340
      %v1345 = vand.u32 2147483647, %v1243
      %vm1346 = vcmp.eq.f32.partialorder %v1345, 8.507059e+37
      %v1347 = vand.u32 %v1243, 2147483648
      %v1348 = vor.u32 1.1754944e-38, %v1347
      %v1349 = vsel %vm1346, %v1348, %v1344
      %v1350 = vmul.f32 %v1227, %v1349
      %v1351 = vrcp.pop %v1245
      %v1352 = vmul.f32 %v1245, %v1351
      %v1353 = vsub.f32 1.0, %v1352
      %v1354 = vmul.f32 %v1351, %v1353
      %v1355 = vadd.f32 %v1351, %v1354
      %vm1356 = vweird.f32 %v1245
      %vm1357 = vweird.f32 %v1351
      %vm1358 = vmor %vm1356, %vm1357
      %v1359 = vsel %vm1358, %v1351, %v1355
      %v1360 = vand.u32 2147483647, %v1245
      %vm1361 = vcmp.eq.f32.partialorder %v1360, 8.507059e+37
      %v1362 = vand.u32 %v1245, 2147483648
      %v1363 = vor.u32 1.1754944e-38, %v1362
      %v1364 = vsel %vm1361, %v1363, %v1359
      %v1365 = vmul.f32 %v1229, %v1364
      %v1366 = vmul.f32 %v1260, %v680
      %v1367 = vmul.f32 %v1275, %v685
      %v1368 = vmul.f32 %v1290, %v690
      %v1369 = vmul.f32 %v1305, %v695
      %v1370 = vmul.f32 %v1320, %v700
      %v1371 = vmul.f32 %v1335, %v705
      %v1372 = vmul.f32 %v1350, %v710
      %v1373 = vmul.f32 %v1365, %v715
      %1374 = vmatpush.msra.mxu0 %v363
      %1375 = vmatpush.msra.mxu0 %v362
      %1376 = vmatpush.msra.mxu0 %v361
      %1377 = vmatpush.msra.mxu0 %v360
      %1378 = vmatpush.msra.mxu0 %v359
      %1379 = vmatpush.msra.mxu0 %v358
      %1380 = vmatpush.msra.mxu0 %v357
      %1381 = vmatpush.msra.mxu0 %v356
      %1382 = vmatpush.msra.mxu0 %v355
      %1383 = vmatpush.msra.mxu0 %v354
      %1384 = vmatpush.msra.mxu0 %v353
      %1385 = vmatpush.msra.mxu0 %v352
      %1386 = vmatpush.msra.mxu0 %v351
      %1387 = vmatpush.msra.mxu0 %v350
      %1388 = vmatpush.msra.mxu0 %v349
      %1389 = vmatpush.msra.mxu0 %v348
      %1390 = vmatmul.f32.gmra.mxu0 %v1366
      %v1391 = vpop.f32.mrf.mxu0
      %v1392 = vadd.f32 0.0, %v1391
      %1393 = vmatmul.f32.gmra.mxu0 %v1367
      %v1394 = vpop.f32.mrf.mxu0
      %v1395 = vadd.f32 0.0, %v1394
      %1396 = vmatmul.f32.gmra.mxu0 %v1368
      %v1397 = vpop.f32.mrf.mxu0
      %v1398 = vadd.f32 0.0, %v1397
      %1399 = vmatmul.f32.gmra.mxu0 %v1369
      %v1400 = vpop.f32.mrf.mxu0
      %v1401 = vadd.f32 0.0, %v1400
      %1402 = vmatmul.f32.gmra.mxu0 %v1370
      %v1403 = vpop.f32.mrf.mxu0
      %v1404 = vadd.f32 0.0, %v1403
      %1405 = vmatmul.f32.gmra.mxu0 %v1371
      %v1406 = vpop.f32.mrf.mxu0
      %v1407 = vadd.f32 0.0, %v1406
      %1408 = vmatmul.f32.gmra.mxu0 %v1372
      %v1409 = vpop.f32.mrf.mxu0
      %v1410 = vadd.f32 0.0, %v1409
      %1411 = vmatmul.f32.gmra.mxu0 %v1373
      %v1412 = vpop.f32.mrf.mxu0
      %v1413 = vadd.f32 0.0, %v1412
      %1414 = vdwg.mxu0
      %v1415 = vmul.f32 %v1392, %v327
      %v1416 = vmul.f32 %v1395, %v328
      %v1417 = vmul.f32 %v1398, %v329
      %v1418 = vmul.f32 %v1401, %v330
      %v1419 = vmul.f32 %v1404, %v331
      %v1420 = vmul.f32 %v1407, %v332
      %v1421 = vmul.f32 %v1410, %v333
      %v1422 = vmul.f32 %v1413, %v334
      %1423 = vxpose.xlu0.b32.start [1/16] %v1415, 128
      %1424 = vxpose.xlu0.b32.cont [2/16] %v1416, 128
      %1425 = vxpose.xlu0.b32.cont [3/16] %v1417, 128
      %1426 = vxpose.xlu0.b32.cont [4/16] %v1418, 128
      %1427 = vxpose.xlu0.b32.cont [5/16] %v1419, 128
      %1428 = vxpose.xlu0.b32.cont [6/16] %v1420, 128
      %1429 = vxpose.xlu0.b32.cont [7/16] %v1421, 128
      %1430 = vxpose.xlu0.b32.cont [8/16] %v1422, 128
      %1431 = vxpose.xlu0.b32.cont [9/16] 0.0, 128
      %1432 = vxpose.xlu0.b32.cont [10/16] 0.0, 128
      %1433 = vxpose.xlu0.b32.cont [11/16] 0.0, 128
      %1434 = vxpose.xlu0.b32.cont [12/16] 0.0, 128
      %1435 = vxpose.xlu0.b32.cont [13/16] 0.0, 128
      %1436 = vxpose.xlu0.b32.cont [14/16] 0.0, 128
      %1437 = vxpose.xlu0.b32.cont [15/16] 0.0, 128
      %1438 = vxpose.xlu0.b32.end [16/16] 0.0, 128
      %v1439 = vpop.trf.xlu0
      %v1440 = vpop.trf.xlu0
      %v1441 = vpop.trf.xlu0
      %v1442 = vpop.trf.xlu0
      %v1443 = vpop.trf.xlu0
      %v1444 = vpop.trf.xlu0
      %v1445 = vpop.trf.xlu0
      %v1446 = vpop.trf.xlu0
      %v1447 = vpop.trf.xlu0
      %v1448 = vpop.trf.xlu0
      %v1449 = vpop.trf.xlu0
      %v1450 = vpop.trf.xlu0
      %v1451 = vpop.trf.xlu0
      %v1452 = vpop.trf.xlu0
      %v1453 = vpop.trf.xlu0
      %v1454 = vpop.trf.xlu0
      %v1456 = vsel %vm409, %v1439, 0
      %v1459 = vsel %vm409, %v1440, 0
      %v1462 = vsel %vm409, %v1441, 0
      %v1465 = vsel %vm409, %v1442, 0
      %v1468 = vsel %vm409, %v1443, 0
      %1470 = vmatpush.msra.mxu0 0.0
      %1471 = vmatpush.msra.mxu0 0.0
      %1472 = vmatpush.msra.mxu0 0.0
      %1473 = vmatpush.msra.mxu0 0.0
      %1474 = vmatpush.msra.mxu0 0.0
      %1475 = vmatpush.msra.mxu0 0.0
      %1476 = vmatpush.msra.mxu0 0.0
      %1477 = vmatpush.msra.mxu0 0.0
      %1478 = vmatpush.msra.mxu0 %v1180
      %1479 = vmatpush.msra.mxu0 %v1179
      %1480 = vmatpush.msra.mxu0 %v1178
      %1481 = vmatpush.msra.mxu0 %v1177
      %1482 = vmatpush.msra.mxu0 %v1176
      %1483 = vmatpush.msra.mxu0 %v1175
      %1484 = vmatpush.msra.mxu0 %v1174
      %1485 = vmatpush.msra.mxu0 %v1173
      %1486 = vmatmul.f32.gmra.mxu0 %v1456
      %v1487 = vpop.f32.mrf.mxu0
      %v1488 = vadd.f32 0.0, %v1487
      %1489 = vmatmul.f32.gmra.mxu0 %v1459
      %v1490 = vpop.f32.mrf.mxu0
      %v1491 = vadd.f32 0.0, %v1490
      %1492 = vmatmul.f32.gmra.mxu0 %v1462
      %v1493 = vpop.f32.mrf.mxu0
      %v1494 = vadd.f32 0.0, %v1493
      %1495 = vmatmul.f32.gmra.mxu0 %v1465
      %v1496 = vpop.f32.mrf.mxu0
      %v1497 = vadd.f32 0.0, %v1496
      %1498 = vmatmul.f32.gmra.mxu0 %v1468
      %v1499 = vpop.f32.mrf.mxu0
      %v1500 = vadd.f32 0.0, %v1499
      %1501 = vdwg.mxu0
      %v1503 = vsel %vm409, %v197, 0
      %v1506 = vsel %vm409, %v198, 0
      %v1509 = vsel %vm409, %v199, 0
      %v1512 = vsel %vm409, %v200, 0
      %v1515 = vsel %vm409, %v201, 0
      %v1518 = vsel %vm409, %v202, 0
      %v1521 = vsel %vm409, %v203, 0
      %v1524 = vsel %vm409, %v204, 0
      %1526 = vmatpush.msra.mxu0 0.0
      %1527 = vmatpush.msra.mxu0 0.0
      %1528 = vmatpush.msra.mxu0 0.0
      %1529 = vmatpush.msra.mxu0 0.0
      %1530 = vmatpush.msra.mxu0 0.0
      %1531 = vmatpush.msra.mxu0 0.0
      %1532 = vmatpush.msra.mxu0 0.0
      %1533 = vmatpush.msra.mxu0 0.0
      %1534 = vmatpush.msra.mxu0 %v1422
      %1535 = vmatpush.msra.mxu0 %v1421
      %1536 = vmatpush.msra.mxu0 %v1420
      %1537 = vmatpush.msra.mxu0 %v1419
      %1538 = vmatpush.msra.mxu0 %v1418
      %1539 = vmatpush.msra.mxu0 %v1417
      %1540 = vmatpush.msra.mxu0 %v1416
      %1541 = vmatpush.msra.mxu0 %v1415
      %1542 = vmatmul.f32.gmra.mxu0 %v1503
      %v1543 = vpop.f32.mrf.mxu0
      %v1544 = vadd.f32 0.0, %v1543
      %1545 = vmatmul.f32.gmra.mxu0 %v1506
      %v1546 = vpop.f32.mrf.mxu0
      %v1547 = vadd.f32 0.0, %v1546
      %1548 = vmatmul.f32.gmra.mxu0 %v1509
      %v1549 = vpop.f32.mrf.mxu0
      %v1550 = vadd.f32 0.0, %v1549
      %1551 = vmatmul.f32.gmra.mxu0 %v1512
      %v1552 = vpop.f32.mrf.mxu0
      %v1553 = vadd.f32 0.0, %v1552
      %1554 = vmatmul.f32.gmra.mxu0 %v1515
      %v1555 = vpop.f32.mrf.mxu0
      %v1556 = vadd.f32 0.0, %v1555
      %1557 = vmatmul.f32.gmra.mxu0 %v1518
      %v1558 = vpop.f32.mrf.mxu0
      %v1559 = vadd.f32 0.0, %v1558
      %1560 = vmatmul.f32.gmra.mxu0 %v1521
      %v1561 = vpop.f32.mrf.mxu0
      %v1562 = vadd.f32 0.0, %v1561
      %1563 = vmatmul.f32.gmra.mxu0 %v1524
      %v1564 = vpop.f32.mrf.mxu0
      %v1565 = vadd.f32 0.0, %v1564
      %1566 = vdwg.mxu0
      %1567 = vmatpush.msra.mxu0 0.0
      %1568 = vmatpush.msra.mxu0 0.0
      %1569 = vmatpush.msra.mxu0 0.0
      %1570 = vmatpush.msra.mxu0 0.0
      %1571 = vmatpush.msra.mxu0 0.0
      %1572 = vmatpush.msra.mxu0 0.0
      %1573 = vmatpush.msra.mxu0 0.0
      %1574 = vmatpush.msra.mxu0 0.0
      %1575 = vmatpush.msra.mxu0 %v1565
      %1576 = vmatpush.msra.mxu0 %v1562
      %1577 = vmatpush.msra.mxu0 %v1559
      %1578 = vmatpush.msra.mxu0 %v1556
      %1579 = vmatpush.msra.mxu0 %v1553
      %1580 = vmatpush.msra.mxu0 %v1550
      %1581 = vmatpush.msra.mxu0 %v1547
      %1582 = vmatpush.msra.mxu0 %v1544
      %1583 = vmatmul.f32.gmra.mxu0 %v1456
      %v1584 = vpop.f32.mrf.mxu0
      %v1585 = vadd.f32 0.0, %v1584
      %1586 = vmatmul.f32.gmra.mxu0 %v1459
      %v1587 = vpop.f32.mrf.mxu0
      %v1588 = vadd.f32 0.0, %v1587
      %1589 = vmatmul.f32.gmra.mxu0 %v1462
      %v1590 = vpop.f32.mrf.mxu0
      %v1591 = vadd.f32 0.0, %v1590
      %1592 = vmatmul.f32.gmra.mxu0 %v1465
      %v1593 = vpop.f32.mrf.mxu0
      %v1594 = vadd.f32 0.0, %v1593
      %1595 = vmatmul.f32.gmra.mxu0 %v1468
      %v1596 = vpop.f32.mrf.mxu0
      %v1597 = vadd.f32 0.0, %v1596
      %1598 = vdwg.mxu0
      %v1599 = vsel %vm393, 1.0, %v1585
      %v1600 = vsel %vm394, 1.0, %v1588
      %v1601 = vsel %vm395, 1.0, %v1591
      %v1602 = vsel %vm396, 1.0, %v1594
      %v1603 = vsel %vm397, 1.0, %v1597
      %vm1604 = vcmask 326656
      %v1605 = vsel %vm1604, %v1599, 0.0
      %1606 = vadd.xlane.f32.xlu0 %v1605
      %v1607 = vpop.xlane.xlu0 %1606
      %v1608 = vsel %vm1604, %v1600, 0.0
      %1609 = vadd.xlane.f32.xlu0 %v1608
      %v1610 = vpop.xlane.xlu0 %1609
      %v1611 = vsel %vm1604, %v1601, 0.0
      %1612 = vadd.xlane.f32.xlu0 %v1611
      %v1613 = vpop.xlane.xlu0 %1612
      %v1614 = vsel %vm1604, %v1602, 0.0
      %1615 = vadd.xlane.f32.xlu0 %v1614
      %v1616 = vpop.xlane.xlu0 %1615
      %v1617 = vsel %vm1604, %v1603, 0.0
      %1618 = vadd.xlane.f32.xlu0 %v1617
      %v1619 = vpop.xlane.xlu0 %1618
      %v1620 = vmax.f32 %v1607, 1.0
      %v1621 = vmax.f32 %v1610, 1.0
      %v1622 = vmax.f32 %v1613, 1.0
      %v1623 = vmax.f32 %v1616, 1.0
      %v1624 = vmax.f32 %v1619, 1.0
      %v1625 = vrsqrt.pop %v1620
      %v1626 = vmul.f32 %v1625, %v1620
      %v1627 = vmul.f32 %v1626, %v1625
      %v1628 = vmul.f32 0.5, %v1627
      %v1629 = vsub.f32 1.5, %v1628
      %v1630 = vmul.f32 %v1625, %v1629
      %vm1631 = vweird.f32 %v1620
      %vm1632 = vweird.f32 %v1625
      %vm1633 = vmor %vm1631, %vm1632
      %v1634 = vsel %vm1633, %v1625, %v1630
      %v1635 = vrsqrt.pop %v1621
      %v1636 = vmul.f32 %v1635, %v1621
      %v1637 = vmul.f32 %v1636, %v1635
      %v1638 = vmul.f32 0.5, %v1637
      %v1639 = vsub.f32 1.5, %v1638
      %v1640 = vmul.f32 %v1635, %v1639
      %vm1641 = vweird.f32 %v1621
      %vm1642 = vweird.f32 %v1635
      %vm1643 = vmor %vm1641, %vm1642
      %v1644 = vsel %vm1643, %v1635, %v1640
      %v1645 = vrsqrt.pop %v1622
      %v1646 = vmul.f32 %v1645, %v1622
      %v1647 = vmul.f32 %v1646, %v1645
      %v1648 = vmul.f32 0.5, %v1647
      %v1649 = vsub.f32 1.5, %v1648
      %v1650 = vmul.f32 %v1645, %v1649
      %vm1651 = vweird.f32 %v1622
      %vm1652 = vweird.f32 %v1645
      %vm1653 = vmor %vm1651, %vm1652
      %v1654 = vsel %vm1653, %v1645, %v1650
      %v1655 = vrsqrt.pop %v1623
      %v1656 = vmul.f32 %v1655, %v1623
      %v1657 = vmul.f32 %v1656, %v1655
      %v1658 = vmul.f32 0.5, %v1657
      %v1659 = vsub.f32 1.5, %v1658
      %v1660 = vmul.f32 %v1655, %v1659
      %vm1661 = vweird.f32 %v1623
      %vm1662 = vweird.f32 %v1655
      %vm1663 = vmor %vm1661, %vm1662
      %v1664 = vsel %vm1663, %v1655, %v1660
      %v1665 = vrsqrt.pop %v1624
      %v1666 = vmul.f32 %v1665, %v1624
      %v1667 = vmul.f32 %v1666, %v1665
      %v1668 = vmul.f32 0.5, %v1667
      %v1669 = vsub.f32 1.5, %v1668
      %v1670 = vmul.f32 %v1665, %v1669
      %vm1671 = vweird.f32 %v1624
      %vm1672 = vweird.f32 %v1665
      %vm1673 = vmor %vm1671, %vm1672
      %v1674 = vsel %vm1673, %v1665, %v1670
      %v1675 = vmul.f32 %v1634, %v1599
      %v1676 = vmul.f32 %v1644, %v1600
      %v1677 = vmul.f32 %v1654, %v1601
      %v1678 = vmul.f32 %v1664, %v1602
      %v1679 = vmul.f32 %v1674, %v1603
      %1680 = vmatpush.msra.mxu0 %v253
      %1681 = vmatpush.msra.mxu0 %v252
      %1682 = vmatpush.msra.mxu0 %v251
      %1683 = vmatpush.msra.mxu0 %v250
      %1684 = vmatpush.msra.mxu0 %v249
      %1685 = vmatpush.msra.mxu0 %v248
      %1686 = vmatpush.msra.mxu0 %v247
      %1687 = vmatpush.msra.mxu0 %v246
      %1688 = vmatpush.msra.mxu0 %v245
      %1689 = vmatpush.msra.mxu0 %v244
      %1690 = vmatpush.msra.mxu0 %v243
      %1691 = vmatpush.msra.mxu0 %v242
      %1692 = vmatpush.msra.mxu0 %v241
      %1693 = vmatpush.msra.mxu0 %v240
      %1694 = vmatpush.msra.mxu0 %v239
      %1695 = vmatpush.msra.mxu0 %v238
      %1696 = vmatmul.f32.gmra.mxu0 %v1488
      %v1697 = vpop.f32.mrf.mxu0
      %v1698 = vadd.f32 0.0, %v1697
      %1699 = vmatmul.f32.gmra.mxu0 %v1491
      %v1700 = vpop.f32.mrf.mxu0
      %v1701 = vadd.f32 0.0, %v1700
      %1702 = vmatmul.f32.gmra.mxu0 %v1494
      %v1703 = vpop.f32.mrf.mxu0
      %v1704 = vadd.f32 0.0, %v1703
      %1705 = vmatmul.f32.gmra.mxu0 %v1497
      %v1706 = vpop.f32.mrf.mxu0
      %v1707 = vadd.f32 0.0, %v1706
      %1708 = vmatmul.f32.gmra.mxu0 %v1500
      %v1709 = vpop.f32.mrf.mxu0
      %v1710 = vadd.f32 0.0, %v1709
      %1711 = vdwg.mxu0
      %v1712 = vmul.f32 %v1634, %v1698
      %v1713 = vmul.f32 %v1644, %v1701
      %v1714 = vmul.f32 %v1654, %v1704
      %v1715 = vmul.f32 %v1664, %v1707
      %v1716 = vmul.f32 %v1674, %v1710
      %v1718 = vsel %vm1604, %v1675, 0
      %v1721 = vsel %vm1604, %v1676, 0
      %v1724 = vsel %vm1604, %v1677, 0
      %v1727 = vsel %vm1604, %v1678, 0
      %v1730 = vsel %vm1604, %v1679, 0
      %1732 = vmatpush.msra.mxu0 0.0
      %1733 = vmatpush.msra.mxu0 0.0
      %1734 = vmatpush.msra.mxu0 0.0
      %1735 = vmatpush.msra.mxu0 0.0
      %1736 = vmatpush.msra.mxu0 0.0
      %1737 = vmatpush.msra.mxu0 0.0
      %1738 = vmatpush.msra.mxu0 0.0
      %1739 = vmatpush.msra.mxu0 0.0
      %1740 = vmatpush.msra.mxu0 0.0
      %1741 = vmatpush.msra.mxu0 0.0
      %1742 = vmatpush.msra.mxu0 0.0
      %1743 = vmatpush.msra.mxu0 %v1716
      %1744 = vmatpush.msra.mxu0 %v1715
      %1745 = vmatpush.msra.mxu0 %v1714
      %1746 = vmatpush.msra.mxu0 %v1713
      %1747 = vmatpush.msra.mxu0 %v1712
      %1748 = vmatmul.f32.gmra.mxu0 %v1718
      %v1749 = vpop.f32.mrf.mxu0
      %v1750 = vadd.f32 0.0, %v1749
      %1751 = vmatmul.f32.gmra.mxu0 %v1721
      %v1752 = vpop.f32.mrf.mxu0
      %v1753 = vadd.f32 0.0, %v1752
      %1754 = vmatmul.f32.gmra.mxu0 %v1724
      %v1755 = vpop.f32.mrf.mxu0
      %v1756 = vadd.f32 0.0, %v1755
      %1757 = vmatmul.f32.gmra.mxu0 %v1727
      %v1758 = vpop.f32.mrf.mxu0
      %v1759 = vadd.f32 0.0, %v1758
      %1760 = vmatmul.f32.gmra.mxu0 %v1730
      %v1761 = vpop.f32.mrf.mxu0
      %v1762 = vadd.f32 0.0, %v1761
      %1763 = vdwg.mxu0
      %v1764 = vmax.f32 %v1750, 0.0
      %v1765 = vmax.f32 %v1753, 0.0
      %v1766 = vmax.f32 %v1756, 0.0
      %v1767 = vmax.f32 %v1759, 0.0
      %v1768 = vmax.f32 %v1762, 0.0
      %v1769 = vadd.f32 %v1764, %v1765
      %v1770 = vadd.f32 %v1769, %v1766
      %v1771 = vadd.f32 %v1770, %v1767
      %v1772 = vadd.f32 %v1771, %v1768
      %v1773 = vrot.slane %v1772, 4
      %v1774 = vadd.f32 %v1772, %v1773
      %v1775 = vrot.slane %v1774, 2
      %v1776 = vadd.f32 %v1774, %v1775
      %v1777 = vrot.slane %v1776, 1
      %v1778 = vadd.f32 %v1776, %v1777
      %v1779 = vrcp.pop 40.0
      %v1780 = vmul.f32 40.0, %v1779
      %v1781 = vsub.f32 1.0, %v1780
      %v1782 = vmul.f32 %v1779, %v1781
      %v1783 = vadd.f32 %v1779, %v1782
      %vm1784 = vweird.f32 %v1779
      %v1785 = vsel %vm1784, %v1779, %v1783
      %v1786 = vmul.f32 %v1778, %v1785
      %v1787 = vsub.f32 %v1764, %v1786
      %v1788 = vsub.f32 %v1765, %v1786
      %v1789 = vsub.f32 %v1766, %v1786
      %v1790 = vsub.f32 %v1767, %v1786
      %v1791 = vsub.f32 %v1768, %v1786
      %v1792 = vmul.f32 %v1787, %v1787
      %v1793 = vmul.f32 %v1788, %v1788
      %v1794 = vmul.f32 %v1789, %v1789
      %v1795 = vmul.f32 %v1790, %v1790
      %v1796 = vmul.f32 %v1791, %v1791
      %v1797 = vadd.f32 %v1792, %v1793
      %v1798 = vadd.f32 %v1797, %v1794
      %v1799 = vadd.f32 %v1798, %v1795
      %v1800 = vadd.f32 %v1799, %v1796
      %v1801 = vrot.slane %v1800, 4
      %v1802 = vadd.f32 %v1800, %v1801
      %v1803 = vrot.slane %v1802, 2
      %v1804 = vadd.f32 %v1802, %v1803
      %v1805 = vrot.slane %v1804, 1
      %v1806 = vadd.f32 %v1804, %v1805
      %v1807 = vmul.f32 %v1806, %v1785
      %v1808 = vadd.f32 %v1807, 1e-05
      %v1809 = vrsqrt.pop %v1808
      %v1810 = vmul.f32 %v1809, %v1808
      %v1811 = vmul.f32 %v1810, %v1809
      %v1812 = vmul.f32 0.5, %v1811
      %v1813 = vsub.f32 1.5, %v1812
      %v1814 = vmul.f32 %v1809, %v1813
      %vm1815 = vweird.f32 %v1808
      %vm1816 = vweird.f32 %v1809
      %vm1817 = vmor %vm1815, %vm1816
      %v1818 = vsel %vm1817, %v1809, %v1814
      %v1819 = vmul.f32 %v1787, %v1818
      %v1820 = vmul.f32 %v1788, %v1818
      %v1821 = vmul.f32 %v1789, %v1818
      %v1822 = vmul.f32 %v1790, %v1818
      %v1823 = vmul.f32 %v1791, %v1818
      %1824 = vmatpush.msra.mxu0 %v269
      %1825 = vmatpush.msra.mxu0 %v268
      %1826 = vmatpush.msra.mxu0 %v267
      %1827 = vmatpush.msra.mxu0 %v266
      %1828 = vmatpush.msra.mxu0 %v265
      %1829 = vmatpush.msra.mxu0 %v264
      %1830 = vmatpush.msra.mxu0 %v263
      %1831 = vmatpush.msra.mxu0 %v262
      %1832 = vmatpush.msra.mxu0 %v261
      %1833 = vmatpush.msra.mxu0 %v260
      %1834 = vmatpush.msra.mxu0 %v259
      %1835 = vmatpush.msra.mxu0 %v258
      %1836 = vmatpush.msra.mxu0 %v257
      %1837 = vmatpush.msra.mxu0 %v256
      %1838 = vmatpush.msra.mxu0 %v255
      %1839 = vmatpush.msra.mxu0 %v254
      %1840 = vmatmul.f32.gmra.mxu0 %v1819
      %v1841 = vpop.f32.mrf.mxu0
      %v1842 = vadd.f32 0.0, %v1841
      %1843 = vmatmul.f32.gmra.mxu0 %v1820
      %v1844 = vpop.f32.mrf.mxu0
      %v1845 = vadd.f32 0.0, %v1844
      %1846 = vmatmul.f32.gmra.mxu0 %v1821
      %v1847 = vpop.f32.mrf.mxu0
      %v1848 = vadd.f32 0.0, %v1847
      %1849 = vmatmul.f32.gmra.mxu0 %v1822
      %v1850 = vpop.f32.mrf.mxu0
      %v1851 = vadd.f32 0.0, %v1850
      %1852 = vmatmul.f32.gmra.mxu0 %v1823
      %v1853 = vpop.f32.mrf.mxu0
      %v1854 = vadd.f32 0.0, %v1853
      %1855 = vdwg.mxu0
      %v1856 = vmul.f32 %v1634, %v1842
      %v1857 = vmul.f32 %v1644, %v1845
      %v1858 = vmul.f32 %v1654, %v1848
      %v1859 = vmul.f32 %v1664, %v1851
      %v1860 = vmul.f32 %v1674, %v1854
      %1861 = vmatpush.msra.mxu0 0.0
      %1862 = vmatpush.msra.mxu0 0.0
      %1863 = vmatpush.msra.mxu0 0.0
      %1864 = vmatpush.msra.mxu0 0.0
      %1865 = vmatpush.msra.mxu0 0.0
      %1866 = vmatpush.msra.mxu0 0.0
      %1867 = vmatpush.msra.mxu0 0.0
      %1868 = vmatpush.msra.mxu0 0.0
      %1869 = vmatpush.msra.mxu0 0.0
      %1870 = vmatpush.msra.mxu0 0.0
      %1871 = vmatpush.msra.mxu0 0.0
      %1872 = vmatpush.msra.mxu0 %v1860
      %1873 = vmatpush.msra.mxu0 %v1859
      %1874 = vmatpush.msra.mxu0 %v1858
      %1875 = vmatpush.msra.mxu0 %v1857
      %1876 = vmatpush.msra.mxu0 %v1856
      %1877 = vmatmul.f32.gmra.mxu0 %v1718
      %v1878 = vpop.f32.mrf.mxu0
      %v1879 = vadd.f32 0.0, %v1878
      %1880 = vmatmul.f32.gmra.mxu0 %v1721
      %v1881 = vpop.f32.mrf.mxu0
      %v1882 = vadd.f32 0.0, %v1881
      %1883 = vmatmul.f32.gmra.mxu0 %v1724
      %v1884 = vpop.f32.mrf.mxu0
      %v1885 = vadd.f32 0.0, %v1884
      %1886 = vmatmul.f32.gmra.mxu0 %v1727
      %v1887 = vpop.f32.mrf.mxu0
      %v1888 = vadd.f32 0.0, %v1887
      %1889 = vmatmul.f32.gmra.mxu0 %v1730
      %v1890 = vpop.f32.mrf.mxu0
      %v1891 = vadd.f32 0.0, %v1890
      %1892 = vdwg.mxu0
      %v1893 = vmax.f32 %v1879, 0.0
      %v1894 = vmax.f32 %v1882, 0.0
      %v1895 = vmax.f32 %v1885, 0.0
      %v1896 = vmax.f32 %v1888, 0.0
      %v1897 = vmax.f32 %v1891, 0.0
      %v1898 = vadd.f32 %v1893, %v1894
      %v1899 = vadd.f32 %v1898, %v1895
      %v1900 = vadd.f32 %v1899, %v1896
      %v1901 = vadd.f32 %v1900, %v1897
      %v1902 = vrot.slane %v1901, 4
      %v1903 = vadd.f32 %v1901, %v1902
      %v1904 = vrot.slane %v1903, 2
      %v1905 = vadd.f32 %v1903, %v1904
      %v1906 = vrot.slane %v1905, 1
      %v1907 = vadd.f32 %v1905, %v1906
      %v1908 = vmul.f32 %v1907, %v1785
      %v1909 = vsub.f32 %v1893, %v1908
      %v1910 = vsub.f32 %v1894, %v1908
      %v1911 = vsub.f32 %v1895, %v1908
      %v1912 = vsub.f32 %v1896, %v1908
      %v1913 = vsub.f32 %v1897, %v1908
      %v1914 = vmul.f32 %v1909, %v1909
      %v1915 = vmul.f32 %v1910, %v1910
      %v1916 = vmul.f32 %v1911, %v1911
      %v1917 = vmul.f32 %v1912, %v1912
      %v1918 = vmul.f32 %v1913, %v1913
      %v1919 = vadd.f32 %v1914, %v1915
      %v1920 = vadd.f32 %v1919, %v1916
      %v1921 = vadd.f32 %v1920, %v1917
      %v1922 = vadd.f32 %v1921, %v1918
      %v1923 = vrot.slane %v1922, 4
      %v1924 = vadd.f32 %v1922, %v1923
      %v1925 = vrot.slane %v1924, 2
      %v1926 = vadd.f32 %v1924, %v1925
      %v1927 = vrot.slane %v1926, 1
      %v1928 = vadd.f32 %v1926, %v1927
      %v1929 = vmul.f32 %v1928, %v1785
      %v1930 = vadd.f32 %v1929, 1e-05
      %v1931 = vrsqrt.pop %v1930
      %v1932 = vmul.f32 %v1931, %v1930
      %v1933 = vmul.f32 %v1932, %v1931
      %v1934 = vmul.f32 0.5, %v1933
      %v1935 = vsub.f32 1.5, %v1934
      %v1936 = vmul.f32 %v1931, %v1935
      %vm1937 = vweird.f32 %v1930
      %vm1938 = vweird.f32 %v1931
      %vm1939 = vmor %vm1937, %vm1938
      %v1940 = vsel %vm1939, %v1931, %v1936
      %v1941 = vmul.f32 %v1909, %v1940
      %v1942 = vmul.f32 %v1910, %v1940
      %v1943 = vmul.f32 %v1911, %v1940
      %v1944 = vmul.f32 %v1912, %v1940
      %v1945 = vmul.f32 %v1913, %v1940
      %1946 = vmatpush.msra.mxu0 %v285
      %1947 = vmatpush.msra.mxu0 %v284
      %1948 = vmatpush.msra.mxu0 %v283
      %1949 = vmatpush.msra.mxu0 %v282
      %1950 = vmatpush.msra.mxu0 %v281
      %1951 = vmatpush.msra.mxu0 %v280
      %1952 = vmatpush.msra.mxu0 %v279
      %1953 = vmatpush.msra.mxu0 %v278
      %1954 = vmatpush.msra.mxu0 %v277
      %1955 = vmatpush.msra.mxu0 %v276
      %1956 = vmatpush.msra.mxu0 %v275
      %1957 = vmatpush.msra.mxu0 %v274
      %1958 = vmatpush.msra.mxu0 %v273
      %1959 = vmatpush.msra.mxu0 %v272
      %1960 = vmatpush.msra.mxu0 %v271
      %1961 = vmatpush.msra.mxu0 %v270
      %1962 = vmatmul.f32.gmra.mxu0 %v1941
      %v1963 = vpop.f32.mrf.mxu0
      %v1964 = vadd.f32 0.0, %v1963
      %1965 = vmatmul.f32.gmra.mxu0 %v1942
      %v1966 = vpop.f32.mrf.mxu0
      %v1967 = vadd.f32 0.0, %v1966
      %1968 = vmatmul.f32.gmra.mxu0 %v1943
      %v1969 = vpop.f32.mrf.mxu0
      %v1970 = vadd.f32 0.0, %v1969
      %1971 = vmatmul.f32.gmra.mxu0 %v1944
      %v1972 = vpop.f32.mrf.mxu0
      %v1973 = vadd.f32 0.0, %v1972
      %1974 = vmatmul.f32.gmra.mxu0 %v1945
      %v1975 = vpop.f32.mrf.mxu0
      %v1976 = vadd.f32 0.0, %v1975
      %1977 = vdwg.mxu0
      %v1978 = vmul.f32 %v1634, %v1964
      %v1979 = vmul.f32 %v1644, %v1967
      %v1980 = vmul.f32 %v1654, %v1970
      %v1981 = vmul.f32 %v1664, %v1973
      %v1982 = vmul.f32 %v1674, %v1976
      %1983 = vmatpush.msra.mxu0 0.0
      %1984 = vmatpush.msra.mxu0 0.0
      %1985 = vmatpush.msra.mxu0 0.0
      %1986 = vmatpush.msra.mxu0 0.0
      %1987 = vmatpush.msra.mxu0 0.0
      %1988 = vmatpush.msra.mxu0 0.0
      %1989 = vmatpush.msra.mxu0 0.0
      %1990 = vmatpush.msra.mxu0 0.0
      %1991 = vmatpush.msra.mxu0 0.0
      %1992 = vmatpush.msra.mxu0 0.0
      %1993 = vmatpush.msra.mxu0 0.0
      %1994 = vmatpush.msra.mxu0 %v1982
      %1995 = vmatpush.msra.mxu0 %v1981
      %1996 = vmatpush.msra.mxu0 %v1980
      %1997 = vmatpush.msra.mxu0 %v1979
      %1998 = vmatpush.msra.mxu0 %v1978
      %1999 = vmatmul.f32.gmra.mxu0 %v1718
      %v2000 = vpop.f32.mrf.mxu0
      %v2001 = vadd.f32 0.0, %v2000
      %2002 = vmatmul.f32.gmra.mxu0 %v1721
      %v2003 = vpop.f32.mrf.mxu0
      %v2004 = vadd.f32 0.0, %v2003
      %2005 = vmatmul.f32.gmra.mxu0 %v1724
      %v2006 = vpop.f32.mrf.mxu0
      %v2007 = vadd.f32 0.0, %v2006
      %2008 = vmatmul.f32.gmra.mxu0 %v1727
      %v2009 = vpop.f32.mrf.mxu0
      %v2010 = vadd.f32 0.0, %v2009
      %2011 = vmatmul.f32.gmra.mxu0 %v1730
      %v2012 = vpop.f32.mrf.mxu0
      %v2013 = vadd.f32 0.0, %v2012
      %2014 = vdwg.mxu0
      %v2015 = vmax.f32 %v2001, 0.0
      %v2016 = vmax.f32 %v2004, 0.0
      %v2017 = vmax.f32 %v2007, 0.0
      %v2018 = vmax.f32 %v2010, 0.0
      %v2019 = vmax.f32 %v2013, 0.0
      %v2020 = vadd.f32 %v2015, %v2016
      %v2021 = vadd.f32 %v2020, %v2017
      %v2022 = vadd.f32 %v2021, %v2018
      %v2023 = vadd.f32 %v2022, %v2019
      %v2024 = vrot.slane %v2023, 4
      %v2025 = vadd.f32 %v2023, %v2024
      %v2026 = vrot.slane %v2025, 2
      %v2027 = vadd.f32 %v2025, %v2026
      %v2028 = vrot.slane %v2027, 1
      %v2029 = vadd.f32 %v2027, %v2028
      %v2030 = vmul.f32 %v2029, %v1785
      %v2031 = vsub.f32 %v2015, %v2030
      %v2032 = vsub.f32 %v2016, %v2030
      %v2033 = vsub.f32 %v2017, %v2030
      %v2034 = vsub.f32 %v2018, %v2030
      %v2035 = vsub.f32 %v2019, %v2030
      %v2036 = vmul.f32 %v2031, %v2031
      %v2037 = vmul.f32 %v2032, %v2032
      %v2038 = vmul.f32 %v2033, %v2033
      %v2039 = vmul.f32 %v2034, %v2034
      %v2040 = vmul.f32 %v2035, %v2035
      %v2041 = vadd.f32 %v2036, %v2037
      %v2042 = vadd.f32 %v2041, %v2038
      %v2043 = vadd.f32 %v2042, %v2039
      %v2044 = vadd.f32 %v2043, %v2040
      %v2045 = vrot.slane %v2044, 4
      %v2046 = vadd.f32 %v2044, %v2045
      %v2047 = vrot.slane %v2046, 2
      %v2048 = vadd.f32 %v2046, %v2047
      %v2049 = vrot.slane %v2048, 1
      %v2050 = vadd.f32 %v2048, %v2049
      %v2051 = vmul.f32 %v2050, %v1785
      %v2052 = vadd.f32 %v2051, 1e-05
      %v2053 = vrsqrt.pop %v2052
      %v2054 = vmul.f32 %v2053, %v2052
      %v2055 = vmul.f32 %v2054, %v2053
      %v2056 = vmul.f32 0.5, %v2055
      %v2057 = vsub.f32 1.5, %v2056
      %v2058 = vmul.f32 %v2053, %v2057
      %vm2059 = vweird.f32 %v2052
      %vm2060 = vweird.f32 %v2053
      %vm2061 = vmor %vm2059, %vm2060
      %v2062 = vsel %vm2061, %v2053, %v2058
      %v2063 = vmul.f32 %v2031, %v2062
      %v2064 = vmul.f32 %v2032, %v2062
      %v2065 = vmul.f32 %v2033, %v2062
      %v2066 = vmul.f32 %v2034, %v2062
      %v2067 = vmul.f32 %v2035, %v2062
      %v2068 = vperm.slane %v381, 0
      %v2069 = vadd.f32 %v2063, %v2068
      %v2070 = vadd.f32 %v2064, %v2068
      %v2071 = vadd.f32 %v2065, %v2068
      %v2072 = vadd.f32 %v2066, %v2068
      %v2073 = vadd.f32 %v2067, %v2068
      %2074 = vmax.xlane.f32.xlu0 %v2069
      %v2075 = vpop.xlane.xlu0 %2074
      %2076 = vmax.xlane.f32.xlu0 %v2070
      %v2077 = vpop.xlane.xlu0 %2076
      %2078 = vmax.xlane.f32.xlu0 %v2071
      %v2079 = vpop.xlane.xlu0 %2078
      %2080 = vmax.xlane.f32.xlu0 %v2072
      %v2081 = vpop.xlane.xlu0 %2080
      %2082 = vmax.xlane.f32.xlu0 %v2073
      %v2083 = vpop.xlane.xlu0 %2082
      %v2084 = vsub.f32 %v2069, %v2075
      %v2085 = vsub.f32 %v2070, %v2077
      %v2086 = vsub.f32 %v2071, %v2079
      %v2087 = vsub.f32 %v2072, %v2081
      %v2088 = vsub.f32 %v2073, %v2083
      %v2089 = vmul.f32 %v2084, 1.442695
      %v2090 = vpow.pop %v2089
      %v2091 = vmul.f32 %v2085, 1.442695
      %v2092 = vpow.pop %v2091
      %v2093 = vmul.f32 %v2086, 1.442695
      %v2094 = vpow.pop %v2093
      %v2095 = vmul.f32 %v2087, 1.442695
      %v2096 = vpow.pop %v2095
      %v2097 = vmul.f32 %v2088, 1.442695
      %v2098 = vpow.pop %v2097
      %2099 = vadd.xlane.f32.xlu0 %v2090
      %v2100 = vpop.xlane.xlu0 %2099
      %2101 = vadd.xlane.f32.xlu0 %v2092
      %v2102 = vpop.xlane.xlu0 %2101
      %2103 = vadd.xlane.f32.xlu0 %v2094
      %v2104 = vpop.xlane.xlu0 %2103
      %2105 = vadd.xlane.f32.xlu0 %v2096
      %v2106 = vpop.xlane.xlu0 %2105
      %2107 = vadd.xlane.f32.xlu0 %v2098
      %v2108 = vpop.xlane.xlu0 %2107
      %v2109 = vrcp.pop %v2100
      %v2110 = vmul.f32 %v2100, %v2109
      %v2111 = vsub.f32 1.0, %v2110
      %v2112 = vmul.f32 %v2109, %v2111
      %v2113 = vadd.f32 %v2109, %v2112
      %vm2114 = vweird.f32 %v2100
      %vm2115 = vweird.f32 %v2109
      %vm2116 = vmor %vm2114, %vm2115
      %v2117 = vsel %vm2116, %v2109, %v2113
      %v2118 = vand.u32 2147483647, %v2100
      %vm2119 = vcmp.eq.f32.partialorder %v2118, 8.507059e+37
      %v2120 = vand.u32 %v2100, 2147483648
      %v2121 = vor.u32 1.1754944e-38, %v2120
      %v2122 = vsel %vm2119, %v2121, %v2117
      %v2123 = vmul.f32 %v2090, %v2122
      %v2124 = vrcp.pop %v2102
      %v2125 = vmul.f32 %v2102, %v2124
      %v2126 = vsub.f32 1.0, %v2125
      %v2127 = vmul.f32 %v2124, %v2126
      %v2128 = vadd.f32 %v2124, %v2127
      %vm2129 = vweird.f32 %v2102
      %vm2130 = vweird.f32 %v2124
      %vm2131 = vmor %vm2129, %vm2130
      %v2132 = vsel %vm2131, %v2124, %v2128
      %v2133 = vand.u32 2147483647, %v2102
      %vm2134 = vcmp.eq.f32.partialorder %v2133, 8.507059e+37
      %v2135 = vand.u32 %v2102, 2147483648
      %v2136 = vor.u32 1.1754944e-38, %v2135
      %v2137 = vsel %vm2134, %v2136, %v2132
      %v2138 = vmul.f32 %v2092, %v2137
      %v2139 = vrcp.pop %v2104
      %v2140 = vmul.f32 %v2104, %v2139
      %v2141 = vsub.f32 1.0, %v2140
      %v2142 = vmul.f32 %v2139, %v2141
      %v2143 = vadd.f32 %v2139, %v2142
      %vm2144 = vweird.f32 %v2104
      %vm2145 = vweird.f32 %v2139
      %vm2146 = vmor %vm2144, %vm2145
      %v2147 = vsel %vm2146, %v2139, %v2143
      %v2148 = vand.u32 2147483647, %v2104
      %vm2149 = vcmp.eq.f32.partialorder %v2148, 8.507059e+37
      %v2150 = vand.u32 %v2104, 2147483648
      %v2151 = vor.u32 1.1754944e-38, %v2150
      %v2152 = vsel %vm2149, %v2151, %v2147
      %v2153 = vmul.f32 %v2094, %v2152
      %v2154 = vrcp.pop %v2106
      %v2155 = vmul.f32 %v2106, %v2154
      %v2156 = vsub.f32 1.0, %v2155
      %v2157 = vmul.f32 %v2154, %v2156
      %v2158 = vadd.f32 %v2154, %v2157
      %vm2159 = vweird.f32 %v2106
      %vm2160 = vweird.f32 %v2154
      %vm2161 = vmor %vm2159, %vm2160
      %v2162 = vsel %vm2161, %v2154, %v2158
      %v2163 = vand.u32 2147483647, %v2106
      %vm2164 = vcmp.eq.f32.partialorder %v2163, 8.507059e+37
      %v2165 = vand.u32 %v2106, 2147483648
      %v2166 = vor.u32 1.1754944e-38, %v2165
      %v2167 = vsel %vm2164, %v2166, %v2162
      %v2168 = vmul.f32 %v2096, %v2167
      %v2169 = vrcp.pop %v2108
      %v2170 = vmul.f32 %v2108, %v2169
      %v2171 = vsub.f32 1.0, %v2170
      %v2172 = vmul.f32 %v2169, %v2171
      %v2173 = vadd.f32 %v2169, %v2172
      %vm2174 = vweird.f32 %v2108
      %vm2175 = vweird.f32 %v2169
      %vm2176 = vmor %vm2174, %vm2175
      %v2177 = vsel %vm2176, %v2169, %v2173
      %v2178 = vand.u32 2147483647, %v2108
      %vm2179 = vcmp.eq.f32.partialorder %v2178, 8.507059e+37
      %v2180 = vand.u32 %v2108, 2147483648
      %v2181 = vor.u32 1.1754944e-38, %v2180
      %v2182 = vsel %vm2179, %v2181, %v2177
      %v2183 = vmul.f32 %v2098, %v2182
      %2184 = vmatpush.msra.mxu0 %v379
      %2185 = vmatpush.msra.mxu0 %v378
      %2186 = vmatpush.msra.mxu0 %v377
      %2187 = vmatpush.msra.mxu0 %v376
      %2188 = vmatpush.msra.mxu0 %v375
      %2189 = vmatpush.msra.mxu0 %v374
      %2190 = vmatpush.msra.mxu0 %v373
      %2191 = vmatpush.msra.mxu0 %v372
      %2192 = vmatpush.msra.mxu0 %v371
      %2193 = vmatpush.msra.mxu0 %v370
      %2194 = vmatpush.msra.mxu0 %v369
      %2195 = vmatpush.msra.mxu0 %v368
      %2196 = vmatpush.msra.mxu0 %v367
      %2197 = vmatpush.msra.mxu0 %v366
      %2198 = vmatpush.msra.mxu0 %v365
      %2199 = vmatpush.msra.mxu0 %v364
      %2200 = vmatmul.f32.gmra.mxu0 %v2123
      %v2201 = vpop.f32.mrf.mxu0
      %v2202 = vadd.f32 0.0, %v2201
      %2203 = vmatmul.f32.gmra.mxu0 %v2138
      %v2204 = vpop.f32.mrf.mxu0
      %v2205 = vadd.f32 0.0, %v2204
      %2206 = vmatmul.f32.gmra.mxu0 %v2153
      %v2207 = vpop.f32.mrf.mxu0
      %v2208 = vadd.f32 0.0, %v2207
      %2209 = vmatmul.f32.gmra.mxu0 %v2168
      %v2210 = vpop.f32.mrf.mxu0
      %v2211 = vadd.f32 0.0, %v2210
      %2212 = vmatmul.f32.gmra.mxu0 %v2183
      %v2213 = vpop.f32.mrf.mxu0
      %v2214 = vadd.f32 0.0, %v2213
      %2215 = vdwg.mxu0
      %v2216 = vmul.f32 %v2202, %v343
      %v2217 = vmul.f32 %v2205, %v344
      %v2218 = vmul.f32 %v2208, %v345
      %v2219 = vmul.f32 %v2211, %v346
      %v2220 = vmul.f32 %v2214, %v347
      %2221 = vxpose.xlu0.b32.start [1/16] %v2216, 128
      %2222 = vxpose.xlu0.b32.cont [2/16] %v2217, 128
      %2223 = vxpose.xlu0.b32.cont [3/16] %v2218, 128
      %2224 = vxpose.xlu0.b32.cont [4/16] %v2219, 128
      %2225 = vxpose.xlu0.b32.cont [5/16] %v2220, 128
      %2226 = vxpose.xlu0.b32.cont [6/16] 0.0, 128
      %2227 = vxpose.xlu0.b32.cont [7/16] 0.0, 128
      %2228 = vxpose.xlu0.b32.cont [8/16] 0.0, 128
      %2229 = vxpose.xlu0.b32.cont [9/16] 0.0, 128
      %2230 = vxpose.xlu0.b32.cont [10/16] 0.0, 128
      %2231 = vxpose.xlu0.b32.cont [11/16] 0.0, 128
      %2232 = vxpose.xlu0.b32.cont [12/16] 0.0, 128
      %2233 = vxpose.xlu0.b32.cont [13/16] 0.0, 128
      %2234 = vxpose.xlu0.b32.cont [14/16] 0.0, 128
      %2235 = vxpose.xlu0.b32.cont [15/16] 0.0, 128
      %2236 = vxpose.xlu0.b32.end [16/16] 0.0, 128
      %v2237 = vpop.trf.xlu0
      %v2238 = vpop.trf.xlu0
      %v2239 = vpop.trf.xlu0
      %v2240 = vpop.trf.xlu0
      %v2241 = vpop.trf.xlu0
      %v2242 = vpop.trf.xlu0
      %v2243 = vpop.trf.xlu0
      %v2244 = vpop.trf.xlu0
      %v2245 = vpop.trf.xlu0
      %v2246 = vpop.trf.xlu0
      %v2247 = vpop.trf.xlu0
      %v2248 = vpop.trf.xlu0
      %v2249 = vpop.trf.xlu0
      %v2250 = vpop.trf.xlu0
      %v2251 = vpop.trf.xlu0
      %v2252 = vpop.trf.xlu0
      %v2254 = vsel %vm1604, %v2237, 0
      %v2257 = vsel %vm1604, %v2238, 0
      %2259 = vmatpush.msra.mxu0 0.0
      %2260 = vmatpush.msra.mxu0 0.0
      %2261 = vmatpush.msra.mxu0 0.0
      %2262 = vmatpush.msra.mxu0 0.0
      %2263 = vmatpush.msra.mxu0 0.0
      %2264 = vmatpush.msra.mxu0 0.0
      %2265 = vmatpush.msra.mxu0 0.0
      %2266 = vmatpush.msra.mxu0 0.0
      %2267 = vmatpush.msra.mxu0 0.0
      %2268 = vmatpush.msra.mxu0 0.0
      %2269 = vmatpush.msra.mxu0 0.0
      %2270 = vmatpush.msra.mxu0 %v2067
      %2271 = vmatpush.msra.mxu0 %v2066
      %2272 = vmatpush.msra.mxu0 %v2065
      %2273 = vmatpush.msra.mxu0 %v2064
      %2274 = vmatpush.msra.mxu0 %v2063
      %2275 = vmatmul.f32.gmra.mxu0 %v2254
      %v2276 = vpop.f32.mrf.mxu0
      %v2277 = vadd.f32 0.0, %v2276
      %2278 = vmatmul.f32.gmra.mxu0 %v2257
      %v2279 = vpop.f32.mrf.mxu0
      %2280 = vdwg.mxu0
      %v2282 = vsel %vm1604, %v1585, 0
      %v2285 = vsel %vm1604, %v1588, 0
      %v2288 = vsel %vm1604, %v1591, 0
      %v2291 = vsel %vm1604, %v1594, 0
      %v2294 = vsel %vm1604, %v1597, 0
      %2296 = vmatpush.msra.mxu0 0.0
      %2297 = vmatpush.msra.mxu0 0.0
      %2298 = vmatpush.msra.mxu0 0.0
      %2299 = vmatpush.msra.mxu0 0.0
      %2300 = vmatpush.msra.mxu0 0.0
      %2301 = vmatpush.msra.mxu0 0.0
      %2302 = vmatpush.msra.mxu0 0.0
      %2303 = vmatpush.msra.mxu0 0.0
      %2304 = vmatpush.msra.mxu0 0.0
      %2305 = vmatpush.msra.mxu0 0.0
      %2306 = vmatpush.msra.mxu0 0.0
      %2307 = vmatpush.msra.mxu0 %v2220
      %2308 = vmatpush.msra.mxu0 %v2219
      %2309 = vmatpush.msra.mxu0 %v2218
      %2310 = vmatpush.msra.mxu0 %v2217
      %2311 = vmatpush.msra.mxu0 %v2216
      %2312 = vmatmul.f32.gmra.mxu0 %v2282
      %v2313 = vpop.f32.mrf.mxu0
      %v2314 = vadd.f32 0.0, %v2313
      %2315 = vmatmul.f32.gmra.mxu0 %v2285
      %v2316 = vpop.f32.mrf.mxu0
      %v2317 = vadd.f32 0.0, %v2316
      %2318 = vmatmul.f32.gmra.mxu0 %v2288
      %v2319 = vpop.f32.mrf.mxu0
      %v2320 = vadd.f32 0.0, %v2319
      %2321 = vmatmul.f32.gmra.mxu0 %v2291
      %v2322 = vpop.f32.mrf.mxu0
      %v2323 = vadd.f32 0.0, %v2322
      %2324 = vmatmul.f32.gmra.mxu0 %v2294
      %v2325 = vpop.f32.mrf.mxu0
      %v2326 = vadd.f32 0.0, %v2325
      %2327 = vdwg.mxu0
      %2328 = vmatpush.msra.mxu0 0.0
      %2329 = vmatpush.msra.mxu0 0.0
      %2330 = vmatpush.msra.mxu0 0.0
      %2331 = vmatpush.msra.mxu0 0.0
      %2332 = vmatpush.msra.mxu0 0.0
      %2333 = vmatpush.msra.mxu0 0.0
      %2334 = vmatpush.msra.mxu0 0.0
      %2335 = vmatpush.msra.mxu0 0.0
      %2336 = vmatpush.msra.mxu0 0.0
      %2337 = vmatpush.msra.mxu0 0.0
      %2338 = vmatpush.msra.mxu0 0.0
      %2339 = vmatpush.msra.mxu0 %v2326
      %2340 = vmatpush.msra.mxu0 %v2323
      %2341 = vmatpush.msra.mxu0 %v2320
      %2342 = vmatpush.msra.mxu0 %v2317
      %2343 = vmatpush.msra.mxu0 %v2314
      %2344 = vmatmul.f32.gmra.mxu0 %v2254
      %v2345 = vpop.f32.mrf.mxu0
      %v2346 = vadd.f32 0.0, %v2345
      %2347 = vmatmul.f32.gmra.mxu0 %v2257
      %v2348 = vpop.f32.mrf.mxu0
      %v2349 = vadd.f32 0.0, %v2348
      %2350 = vdwg.mxu0
      %v2352 = vrot.slane %v2277, 2
      %v2353 = vrot.slane %v2277, 4
      %v2354 = vsel %vm393, 1.0, %v2346
      %v2355 = vsel %vm394, 1.0, %v2349
      %vm2356 = vcmask 97280
      %v2357 = vsel %vm2356, %v2354, 0.0
      %2358 = vadd.xlane.f32.xlu0 %v2357
      %v2359 = vpop.xlane.xlu0 %2358
      %vm2360 = vcmask 93184
      %v2361 = vsel %vm2360, %v2355, 0.0
      %2362 = vadd.xlane.f32.xlu0 %v2361
      %v2363 = vpop.xlane.xlu0 %2362
      %v2364 = vmax.f32 %v2359, 1.0
      %v2365 = vmax.f32 %v2363, 1.0
      %v2366 = vrsqrt.pop %v2364
      %v2367 = vmul.f32 %v2366, %v2364
      %v2368 = vmul.f32 %v2367, %v2366
      %v2369 = vmul.f32 0.5, %v2368
      %v2370 = vsub.f32 1.5, %v2369
      %v2371 = vmul.f32 %v2366, %v2370
      %vm2372 = vweird.f32 %v2364
      %vm2373 = vweird.f32 %v2366
      %vm2374 = vmor %vm2372, %vm2373
      %v2375 = vsel %vm2374, %v2366, %v2371
      %v2376 = vrsqrt.pop %v2365
      %v2377 = vmul.f32 %v2376, %v2365
      %v2378 = vmul.f32 %v2377, %v2376
      %v2379 = vmul.f32 0.5, %v2378
      %v2380 = vsub.f32 1.5, %v2379
      %v2381 = vmul.f32 %v2376, %v2380
      %vm2382 = vweird.f32 %v2365
      %vm2383 = vweird.f32 %v2376
      %vm2384 = vmor %vm2382, %vm2383
      %v2385 = vsel %vm2384, %v2376, %v2381
      %v2386 = vmul.f32 %v2375, %v2354
      %v2387 = vmul.f32 %v2385, %v2355
      %2388 = vst [vmem:[#allocation1] ss:$4 sm:$0xff] %v2277
      %s2389 = scalar_lea.vmem [#allocation1], 1
      %2390 = vst [vmem:[%s2389] ss:$4 sm:$0xff] %v2352
      %s2391 = scalar_lea.vmem [#allocation1], 2
      %2392 = vst [vmem:[%s2391] ss:$4 sm:$0xff] %v2353
      %s2393 = scalar_lea.vmem [#allocation1], 3
      %2394 = vst [vmem:[%s2393] ss:$4 sm:$0xff] %v2277
      %s2395 = scalar_lea.vmem [#allocation1], 32
      %2396 = vst [vmem:[%s2395] ss:$4 sm:$0xff] %v2352
      %s2397 = scalar_lea.vmem [#allocation1], 33
      %2398 = vst [vmem:[%s2397] ss:$4 sm:$0xff] %v2353
      %v2399 = vld.sshfl [vmem:[#allocation1] sm:$0xff pattern:$0x73625140]
      %v2400 = vld.sshfl [vmem:[#allocation1 + $0x20] sm:$0xff pattern:$0x73625140]
      %2403 = vmatpush.msra.mxu0 %v301
      %2404 = vmatpush.msra.mxu0 %v300
      %2405 = vmatpush.msra.mxu0 %v299
      %2406 = vmatpush.msra.mxu0 %v298
      %2407 = vmatpush.msra.mxu0 %v297
      %2408 = vmatpush.msra.mxu0 %v296
      %2409 = vmatpush.msra.mxu0 %v295
      %2410 = vmatpush.msra.mxu0 %v294
      %2411 = vmatpush.msra.mxu0 %v293
      %2412 = vmatpush.msra.mxu0 %v292
      %2413 = vmatpush.msra.mxu0 %v291
      %2414 = vmatpush.msra.mxu0 %v290
      %2415 = vmatpush.msra.mxu0 %v289
      %2416 = vmatpush.msra.mxu0 %v288
      %2417 = vmatpush.msra.mxu0 %v287
      %2418 = vmatpush.msra.mxu0 %v286
      %2419 = vmatmul.f32.gmra.mxu0 %v2399
      %v2420 = vpop.f32.mrf.mxu0
      %v2421 = vadd.f32 0.0, %v2420
      %2422 = vmatmul.f32.gmra.mxu0 %v2400
      %v2423 = vpop.f32.mrf.mxu0
      %v2424 = vadd.f32 0.0, %v2423
      %2425 = vdwg.mxu0
      %v2426 = vmul.f32 %v2375, %v2421
      %v2427 = vmul.f32 %v2385, %v2424
      %v2429 = vsel %vm2356, %v2386, 0
      %v2432 = vsel %vm2356, %v2387, 0
      %vm2434 = vcmask 1043456
      %v2436 = vsel %vm2434, %v2427, 0
      %2438 = vmatpush.msra.mxu0 0.0
      %2439 = vmatpush.msra.mxu0 0.0
      %2440 = vmatpush.msra.mxu0 0.0
      %2441 = vmatpush.msra.mxu0 0.0
      %2442 = vmatpush.msra.mxu0 0.0
      %2443 = vmatpush.msra.mxu0 0.0
      %2444 = vmatpush.msra.mxu0 0.0
      %2445 = vmatpush.msra.mxu0 0.0
      %2446 = vmatpush.msra.mxu0 0.0
      %2447 = vmatpush.msra.mxu0 0.0
      %2448 = vmatpush.msra.mxu0 0.0
      %2449 = vmatpush.msra.mxu0 0.0
      %2450 = vmatpush.msra.mxu0 0.0
      %2451 = vmatpush.msra.mxu0 0.0
      %2452 = vmatpush.msra.mxu0 %v2436
      %2453 = vmatpush.msra.mxu0 %v2426
      %2454 = vmatmul.f32.gmra.mxu0 %v2429
      %v2455 = vpop.f32.mrf.mxu0
      %v2456 = vadd.f32 0.0, %v2455
      %2457 = vmatmul.f32.gmra.mxu0 %v2432
      %v2458 = vpop.f32.mrf.mxu0
      %v2459 = vadd.f32 0.0, %v2458
      %2460 = vdwg.mxu0
      %v2461 = vmax.f32 %v2456, 0.0
      %v2462 = vmax.f32 %v2459, 0.0
      %v2463 = vsel %vm409, %v2461, 0.0
      %vm2464 = vcmask 519168
      %v2465 = vsel %vm2464, %v2462, 0.0
      %v2466 = vadd.f32 %v2463, %v2465
      %v2467 = vrot.slane %v2466, 4
      %v2468 = vadd.f32 %v2466, %v2467
      %v2469 = vrot.slane %v2468, 2
      %v2470 = vadd.f32 %v2468, %v2469
      %v2471 = vrot.slane %v2470, 1
      %v2472 = vadd.f32 %v2470, %v2471
      %v2473 = vrcp.pop 12.0
      %v2474 = vmul.f32 12.0, %v2473
      %v2475 = vsub.f32 1.0, %v2474
      %v2476 = vmul.f32 %v2473, %v2475
      %v2477 = vadd.f32 %v2473, %v2476
      %vm2478 = vweird.f32 %v2473
      %v2479 = vsel %vm2478, %v2473, %v2477
      %v2480 = vmul.f32 %v2472, %v2479
      %v2481 = vsub.f32 %v2461, %v2480
      %v2482 = vsub.f32 %v2462, %v2480
      %v2483 = vmul.f32 %v2481, %v2481
      %v2484 = vmul.f32 %v2482, %v2482
      %v2485 = vsel %vm409, %v2483, 0.0
      %v2486 = vsel %vm2464, %v2484, 0.0
      %v2487 = vadd.f32 %v2485, %v2486
      %v2488 = vrot.slane %v2487, 4
      %v2489 = vadd.f32 %v2487, %v2488
      %v2490 = vrot.slane %v2489, 2
      %v2491 = vadd.f32 %v2489, %v2490
      %v2492 = vrot.slane %v2491, 1
      %v2493 = vadd.f32 %v2491, %v2492
      %v2494 = vmul.f32 %v2493, %v2479
      %v2495 = vadd.f32 %v2494, 1e-05
      %v2496 = vrsqrt.pop %v2495
      %v2497 = vmul.f32 %v2496, %v2495
      %v2498 = vmul.f32 %v2497, %v2496
      %v2499 = vmul.f32 0.5, %v2498
      %v2500 = vsub.f32 1.5, %v2499
      %v2501 = vmul.f32 %v2496, %v2500
      %vm2502 = vweird.f32 %v2495
      %vm2503 = vweird.f32 %v2496
      %vm2504 = vmor %vm2502, %vm2503
      %v2505 = vsel %vm2504, %v2496, %v2501
      %v2506 = vmul.f32 %v2481, %v2505
      %v2507 = vmul.f32 %v2482, %v2505
      %v2509 = vsel %vm409, %v2506, 0
      %v2512 = vsel %vm409, %v2507, 0
      %2514 = vmatpush.msra.mxu0 0.0
      %2515 = vmatpush.msra.mxu0 0.0
      %2516 = vmatpush.msra.mxu0 0.0
      %2517 = vmatpush.msra.mxu0 0.0
      %2518 = vmatpush.msra.mxu0 0.0
      %2519 = vmatpush.msra.mxu0 0.0
      %2520 = vmatpush.msra.mxu0 0.0
      %2521 = vmatpush.msra.mxu0 0.0
      %2522 = vmatpush.msra.mxu0 %v309
      %2523 = vmatpush.msra.mxu0 %v308
      %2524 = vmatpush.msra.mxu0 %v307
      %2525 = vmatpush.msra.mxu0 %v306
      %2526 = vmatpush.msra.mxu0 %v305
      %2527 = vmatpush.msra.mxu0 %v304
      %2528 = vmatpush.msra.mxu0 %v303
      %2529 = vmatpush.msra.mxu0 %v302
      %2530 = vmatmul.f32.gmra.mxu0 %v2509
      %v2531 = vpop.f32.mrf.mxu0
      %v2532 = vadd.f32 0.0, %v2531
      %2533 = vmatmul.f32.gmra.mxu0 %v2512
      %v2534 = vpop.f32.mrf.mxu0
      %v2535 = vadd.f32 0.0, %v2534
      %2536 = vdwg.mxu0
      %v2537 = vmul.f32 %v2375, %v2532
      %v2538 = vmul.f32 %v2385, %v2535
      %v2540 = vsel %vm2434, %v2538, 0
      %2542 = vmatpush.msra.mxu0 0.0
      %2543 = vmatpush.msra.mxu0 0.0
      %2544 = vmatpush.msra.mxu0 0.0
      %2545 = vmatpush.msra.mxu0 0.0
      %2546 = vmatpush.msra.mxu0 0.0
      %2547 = vmatpush.msra.mxu0 0.0
      %2548 = vmatpush.msra.mxu0 0.0
      %2549 = vmatpush.msra.mxu0 0.0
      %2550 = vmatpush.msra.mxu0 0.0
      %2551 = vmatpush.msra.mxu0 0.0
      %2552 = vmatpush.msra.mxu0 0.0
      %2553 = vmatpush.msra.mxu0 0.0
      %2554 = vmatpush.msra.mxu0 0.0
      %2555 = vmatpush.msra.mxu0 0.0
      %2556 = vmatpush.msra.mxu0 %v2540
      %2557 = vmatpush.msra.mxu0 %v2537
      %2558 = vmatmul.f32.gmra.mxu0 %v2429
      %v2559 = vpop.f32.mrf.mxu0
      %v2560 = vadd.f32 0.0, %v2559
      %2561 = vmatmul.f32.gmra.mxu0 %v2432
      %v2562 = vpop.f32.mrf.mxu0
      %v2563 = vadd.f32 0.0, %v2562
      %2564 = vdwg.mxu0
      %v2565 = vmax.f32 %v2560, 0.0
      %v2566 = vmax.f32 %v2563, 0.0
      %v2567 = vsel %vm409, %v2565, 0.0
      %v2568 = vsel %vm2464, %v2566, 0.0
      %v2569 = vadd.f32 %v2567, %v2568
      %v2570 = vrot.slane %v2569, 4
      %v2571 = vadd.f32 %v2569, %v2570
      %v2572 = vrot.slane %v2571, 2
      %v2573 = vadd.f32 %v2571, %v2572
      %v2574 = vrot.slane %v2573, 1
      %v2575 = vadd.f32 %v2573, %v2574
      %v2576 = vmul.f32 %v2575, %v2479
      %v2577 = vsub.f32 %v2565, %v2576
      %v2578 = vsub.f32 %v2566, %v2576
      %v2579 = vmul.f32 %v2577, %v2577
      %v2580 = vmul.f32 %v2578, %v2578
      %v2581 = vsel %vm409, %v2579, 0.0
      %v2582 = vsel %vm2464, %v2580, 0.0
      %v2583 = vadd.f32 %v2581, %v2582
      %v2584 = vrot.slane %v2583, 4
      %v2585 = vadd.f32 %v2583, %v2584
      %v2586 = vrot.slane %v2585, 2
      %v2587 = vadd.f32 %v2585, %v2586
      %v2588 = vrot.slane %v2587, 1
      %v2589 = vadd.f32 %v2587, %v2588
      %v2590 = vmul.f32 %v2589, %v2479
      %v2591 = vadd.f32 %v2590, 1e-05
      %v2592 = vrsqrt.pop %v2591
      %v2593 = vmul.f32 %v2592, %v2591
      %v2594 = vmul.f32 %v2593, %v2592
      %v2595 = vmul.f32 0.5, %v2594
      %v2596 = vsub.f32 1.5, %v2595
      %v2597 = vmul.f32 %v2592, %v2596
      %vm2598 = vweird.f32 %v2591
      %vm2599 = vweird.f32 %v2592
      %vm2600 = vmor %vm2598, %vm2599
      %v2601 = vsel %vm2600, %v2592, %v2597
      %v2602 = vmul.f32 %v2577, %v2601
      %v2603 = vmul.f32 %v2578, %v2601
      %v2605 = vsel %vm409, %v2602, 0
      %v2608 = vsel %vm409, %v2603, 0
      %2610 = vmatpush.msra.mxu0 0.0
      %2611 = vmatpush.msra.mxu0 0.0
      %2612 = vmatpush.msra.mxu0 0.0
      %2613 = vmatpush.msra.mxu0 0.0
      %2614 = vmatpush.msra.mxu0 0.0
      %2615 = vmatpush.msra.mxu0 0.0
      %2616 = vmatpush.msra.mxu0 0.0
      %2617 = vmatpush.msra.mxu0 0.0
      %2618 = vmatpush.msra.mxu0 %v317
      %2619 = vmatpush.msra.mxu0 %v316
      %2620 = vmatpush.msra.mxu0 %v315
      %2621 = vmatpush.msra.mxu0 %v314
      %2622 = vmatpush.msra.mxu0 %v313
      %2623 = vmatpush.msra.mxu0 %v312
      %2624 = vmatpush.msra.mxu0 %v311
      %2625 = vmatpush.msra.mxu0 %v310
      %2626 = vmatmul.f32.gmra.mxu0 %v2605
      %v2627 = vpop.f32.mrf.mxu0
      %v2628 = vadd.f32 0.0, %v2627
      %2629 = vmatmul.f32.gmra.mxu0 %v2608
      %v2630 = vpop.f32.mrf.mxu0
      %v2631 = vadd.f32 0.0, %v2630
      %2632 = vdwg.mxu0
      %v2633 = vmul.f32 %v2375, %v2628
      %v2634 = vmul.f32 %v2385, %v2631
      %v2636 = vsel %vm2434, %v2634, 0
      %2638 = vmatpush.msra.mxu0 0.0
      %2639 = vmatpush.msra.mxu0 0.0
      %2640 = vmatpush.msra.mxu0 0.0
      %2641 = vmatpush.msra.mxu0 0.0
      %2642 = vmatpush.msra.mxu0 0.0
      %2643 = vmatpush.msra.mxu0 0.0
      %2644 = vmatpush.msra.mxu0 0.0
      %2645 = vmatpush.msra.mxu0 0.0
      %2646 = vmatpush.msra.mxu0 0.0
      %2647 = vmatpush.msra.mxu0 0.0
      %2648 = vmatpush.msra.mxu0 0.0
      %2649 = vmatpush.msra.mxu0 0.0
      %2650 = vmatpush.msra.mxu0 0.0
      %2651 = vmatpush.msra.mxu0 0.0
      %2652 = vmatpush.msra.mxu0 %v2636
      %2653 = vmatpush.msra.mxu0 %v2633
      %2654 = vmatmul.f32.gmra.mxu0 %v2429
      %v2655 = vpop.f32.mrf.mxu0
      %v2656 = vadd.f32 0.0, %v2655
      %2657 = vmatmul.f32.gmra.mxu0 %v2432
      %v2658 = vpop.f32.mrf.mxu0
      %v2659 = vadd.f32 0.0, %v2658
      %2660 = vdwg.mxu0
      %v2661 = vmax.f32 %v2656, 0.0
      %v2662 = vmax.f32 %v2659, 0.0
      %v2663 = vsel %vm409, %v2661, 0.0
      %v2664 = vsel %vm2464, %v2662, 0.0
      %v2665 = vadd.f32 %v2663, %v2664
      %v2666 = vrot.slane %v2665, 4
      %v2667 = vadd.f32 %v2665, %v2666
      %v2668 = vrot.slane %v2667, 2
      %v2669 = vadd.f32 %v2667, %v2668
      %v2670 = vrot.slane %v2669, 1
      %v2671 = vadd.f32 %v2669, %v2670
      %v2672 = vmul.f32 %v2671, %v2479
      %v2673 = vsub.f32 %v2661, %v2672
      %v2674 = vsub.f32 %v2662, %v2672
      %v2675 = vmul.f32 %v2673, %v2673
      %v2676 = vmul.f32 %v2674, %v2674
      %v2677 = vsel %vm409, %v2675, 0.0
      %v2678 = vsel %vm2464, %v2676, 0.0
      %v2679 = vadd.f32 %v2677, %v2678
      %v2680 = vrot.slane %v2679, 4
      %v2681 = vadd.f32 %v2679, %v2680
      %v2682 = vrot.slane %v2681, 2
      %v2683 = vadd.f32 %v2681, %v2682
      %v2684 = vrot.slane %v2683, 1
      %v2685 = vadd.f32 %v2683, %v2684
      %v2686 = vmul.f32 %v2685, %v2479
      %v2687 = vadd.f32 %v2686, 1e-05
      %v2688 = vrsqrt.pop %v2687
      %v2689 = vmul.f32 %v2688, %v2687
      %v2690 = vmul.f32 %v2689, %v2688
      %v2691 = vmul.f32 0.5, %v2690
      %v2692 = vsub.f32 1.5, %v2691
      %v2693 = vmul.f32 %v2688, %v2692
      %vm2694 = vweird.f32 %v2687
      %vm2695 = vweird.f32 %v2688
      %vm2696 = vmor %vm2694, %vm2695
      %v2697 = vsel %vm2696, %v2688, %v2693
      %v2698 = vmul.f32 %v2673, %v2697
      %v2699 = vmul.f32 %v2674, %v2697
      %v2702 = vrot.slane %v2698, 2
      %v2703 = vrot.slane %v2698, 4
      %v2704 = vrot.slane %v2698, 6
      %v2705 = vrot.slane %v2699, 2
      %2706 = vst [vmem:[#allocation1] ss:$4 sm:$0xff] %v2698
      %s2707 = scalar_lea.vmem [#allocation1], 1
      %2708 = vst [vmem:[%s2707] ss:$4 sm:$0xff] %v2702
      %s2709 = scalar_lea.vmem [#allocation1], 2
      %2710 = vst [vmem:[%s2709] ss:$4 sm:$0xff] %v2703
      %v2711 = vld.sshfl [vmem:[#allocation1] sm:$0xff pattern:$0x73625140]
      %s2712 = scalar_lea.vmem [#allocation1], 32
      %2713 = vst [vmem:[%s2712] ss:$4 sm:$0xff] %v2704
      %s2714 = scalar_lea.vmem [#allocation1], 33
      %2715 = vst [vmem:[%s2714] ss:$4 sm:$0xff] %v2699
      %s2716 = scalar_lea.vmem [#allocation1], 34
      %2717 = vst [vmem:[%s2716] ss:$4 sm:$0xff] %v2705
      %v2718 = vld.sshfl [vmem:[#allocation1 + $0x20] sm:$0xff pattern:$0x73625140]
      %vm2721 = vcmask 521216
      %v2722 = vsel %vm2721, %v2711, 0.0
      %v2723 = vrot.slane %v2722, 4
      %v2724 = vadd.f32 %v2722, %v2723
      %v2725 = vrot.slane %v2724, 2
      %v2726 = vadd.f32 %v2724, %v2725
      %v2727 = vrot.slane %v2726, 1
      %v2728 = vadd.f32 %v2726, %v2727
      %v2729 = vsel %vm2721, %v2718, 0.0
      %v2730 = vrot.slane %v2729, 4
      %v2731 = vadd.f32 %v2729, %v2730
      %v2732 = vrot.slane %v2731, 2
      %v2733 = vadd.f32 %v2731, %v2732
      %v2734 = vrot.slane %v2733, 1
      %v2735 = vadd.f32 %v2733, %v2734
      %v2736 = vrcp.pop 6.0
      %v2737 = vmul.f32 6.0, %v2736
      %v2738 = vsub.f32 1.0, %v2737
      %v2739 = vmul.f32 %v2736, %v2738
      %v2740 = vadd.f32 %v2736, %v2739
      %vm2741 = vweird.f32 %v2736
      %v2742 = vsel %vm2741, %v2736, %v2740
      %v2743 = vmul.f32 %v2728, %v2742
      %v2744 = vmul.f32 %v2735, %v2742
      %vm2747 = vcmask 1041409
      %v2748 = vsel %vm2747, %v2744, %v2743
      %v2749 = vsel %vm409, %v2748, 0
      %2751 = vmatpush.msra.mxu0 0.0
      %2752 = vmatpush.msra.mxu0 0.0
      %2753 = vmatpush.msra.mxu0 0.0
      %2754 = vmatpush.msra.mxu0 0.0
      %2755 = vmatpush.msra.mxu0 0.0
      %2756 = vmatpush.msra.mxu0 0.0
      %2757 = vmatpush.msra.mxu0 0.0
      %2758 = vmatpush.msra.mxu0 0.0
      %2759 = vmatpush.msra.mxu0 %v325
      %2760 = vmatpush.msra.mxu0 %v324
      %2761 = vmatpush.msra.mxu0 %v323
      %2762 = vmatpush.msra.mxu0 %v322
      %2763 = vmatpush.msra.mxu0 %v321
      %2764 = vmatpush.msra.mxu0 %v320
      %2765 = vmatpush.msra.mxu0 %v319
      %2766 = vmatpush.msra.mxu0 %v318
      %2767 = vmatmul.f32.gmra.mxu0 %v2749
      %v2768 = vpop.f32.mrf.mxu0
      %v2769 = vadd.f32 0.0, %v2768
      %2770 = vdwg.mxu0
      %v2771 = vmax.f32 %v2769, 0.0
      %v2772 = vperm.slane %v326, 0
      %v2773 = vmul.f32 %v2771, %v2772
      %vm2774 = vcmask 517120
      %v2775 = vsel %vm2774, %v2773, 0.0
      %2776 = vadd.xlane.f32.xlu0 %v2775
      %v2777 = vpop.xlane.xlu0 %2776
      %vm2778 = vcmask 1024
      %2779 = vst.msk [vmem:[%s188] sm:$0x3] %vm2778, %v2777
      %p2780 = scmp.lt.s32.totalorder %s14, 3
      %s2781 = scalar_select %p2780, %s14, 3
      %s2782 = smul.addr %s2781, 2
      %s2783 = scalar_lea.vmem %s3, %s2782
      // Predicated region
      $region33: #{full_forward.1} parent=31 // pred_check
        %p2784 = pneg %p105
      $region34: #{full_forward.1} parent=31 // pred_check_branch
        %2786 = sbr.rel (%p2784) target = $region36
      $region35: #{full_forward.1} parent=31 // pred_region
        _
      $region36: #{full_forward.1} parent=31 // pred_fallthru
        _
    $region32: #{full_forward.1} parent=5 // pred_fallthru
      _
    %p2787 = scmp.le.s32.totalorder 2, %s9
    // Predicated region
    $region37: #{full_forward.1} parent=5 // pred_check
      %p2788 = pneg %p2787
    $region38: #{full_forward.1} parent=5 // pred_check_branch
      %2790 = sbr.rel (%p2788) target = $region40
    $region39: #{full_forward.1} parent=5 // pred_region
      %s2791 = ssub.s32 %s9, 2
      // Predicated region
      $region41: #{full_forward.1} parent=39 // pred_check
        %p2792 = pneg %p111
      $region42: #{full_forward.1} parent=39 // pred_check_branch
        %2794 = sbr.rel (%p2792) target = $region44
      $region43: #{full_forward.1} parent=39 // pred_region
        %p2795 = scmp.lt.s32.totalorder %s15, 3
        %s2796 = scalar_select %p2795, %s15, 3
        %s2797 = smul.addr %s2796, 2
        %s2798 = scalar_lea.vmem %s3, %s2797
      $region44: #{full_forward.1} parent=39 // pred_fallthru
        _
    $region40: #{full_forward.1} parent=5 // pred_fallthru
      _
  $region6: #{full_forward.1} parent=0 // loop_footer
    %s13 = sadd.s32 1, %s9
  $region7: #{full_forward.1} parent=0 // loop_footer_branch
    %8 = sbr.rel target = $region3
  $region8: #{full_forward.1} parent=0 // loop_exit
    _

</llo_original>
